<compile_context>
chip_gen: v7x
topology: tpu7x:2x2x1
jax: 0.10.0
libtpu: 0.0.40
codegen_flags: <defaults>
</compile_context>

<pallas_src>
import functools

import jax
import jax.numpy as jnp
from jax.experimental import pallas as pl
from jax.experimental.pallas import tpu as pltpu


K1, K3 = 9, 5                        # conv1 / conv3 kernel sizes
C_IN, C_MID1, C_MID2, C_OUT = 2, 64, 32, 2
PAD1, PAD3 = 4, 2                    # conv1 / conv3 'same' paddings
PADT = PAD1 + PAD3                   # total top/left padding of the padded image


def _round_up(x, m):
    return (x + m - 1) // m * m


def _srcnn_kernel(x_ref, cmask_ref, w1_ref, b1_ref, w2_ref, b2_ref, w3_ref,
                  b3_ref, o_ref, *, H, W, Wp, Ht):
    """Fused conv1(9x9,2->64)+ReLU -> conv2(1x1,64->32)+ReLU -> conv3(5x5,32->2).

    Layout: spatial dims are flattened with a fixed row stride Wp and live on
    the lane axis; channels / im2col taps live on the sublane (M/K) axis.

    x_ref    : (1, C_IN, Hp*Wp)  zero-padded input, bf16 (whole image resident)
    cmask_ref: (1, NE) f32   column-validity mask (conv3 zero padding, columns)
    w1_ref   : (64, 162) bf16   (co, dy*18 + dx*2 + ci)
    w2_ref   : (32, 64)  bf16   (co, ci)
    w3_ref   : (50, 32)  bf16   ((dy*5+dx)*2 + co, ci)
    b*_ref   : (C, 1) f32
    o_ref    : (1, C_OUT, Ht*Wp) f32  output row tile (flat, lane-dense)
    """
    E = Ht + 2 * PAD3                    # extended rows incl. conv3 halo
    NE = (E + 1) * Wp                    # flattened h-grid length (+1 slack row)
    N3 = Ht * Wp                         # flattened output length of this tile
    SLAB = (E + K1) * Wp + (K1 - 1)      # input window needed by this tile

    r = pl.program_id(1)
    row0 = r * Ht
    base = pl.multiple_of(row0 * Wp, 128)          # Ht*Wp % 128 == 0 by wrapper

    # One aligned dynamic load of the tile's input slab; taps are static slices.
    slab = x_ref[0, :, pl.ds(base, SLAB)]                      # (C_IN, SLAB) bf16

    # ---- conv1 (9x9, 2->64): im2col -> single MXU matmul --------------------
    groups = []
    for dy in range(K1):
        row_off = dy * Wp
        groups.append(jnp.concatenate(
            [slab[:, row_off + dx: row_off + dx + NE] for dx in range(K1)],
            axis=0))                                           # (K1*C_IN, NE)
    p1 = jnp.concatenate(groups, axis=0)                       # (162, NE) bf16
    h1 = jnp.dot(w1_ref[...], p1,
                 preferred_element_type=jnp.float32)           # (64, NE)
    h1 = jnp.maximum(h1 + b1_ref[...], 0.0).astype(jnp.bfloat16)

    # ---- conv2 (1x1, 64->32): plain matmul, stays in VMEM -------------------
    h2 = jnp.dot(w2_ref[...], h1,
                 preferred_element_type=jnp.float32)           # (32, NE)
    h2 = jnp.maximum(h2 + b2_ref[...], 0.0)

    # ---- conv3 zero padding: zero h2 wherever the pixel is outside the image
    idx = jax.lax.broadcasted_iota(jnp.int32, (1, NE), 1)
    lo = jnp.maximum(PAD3 - row0, 0) * Wp
    hi = jnp.minimum(H + PAD3 - row0, E + 1) * Wp
    rowmask = ((idx >= lo) & (idx < hi)).astype(jnp.float32)
    h2 = (h2 * (rowmask * cmask_ref[...])).astype(jnp.bfloat16)

    # ---- conv3 (5x5, 32->2): per-tap channel mix on MXU (K=32, M=50), then
    #      reduce the 25 taps with statically shifted adds ---------------------
    z = jnp.dot(w3_ref[...], h2,
                preferred_element_type=jnp.float32)            # (50, NE)
    acc = jnp.zeros((C_OUT, N3), jnp.float32)
    for dy in range(K3):
        for dx in range(K3):
            t = dy * K3 + dx
            s = dy * Wp + dx
            acc = acc + z[2 * t: 2 * t + 2, s: s + N3]
    o_ref[0] = acc + b3_ref[...]


def srcnn_forward(x_nchw, params, *, row_tile=32):
    """Matches SRCNN.forward. Input/output are NCHW float32 (PyTorch layout)."""
    B, Cin, H, W = x_nchw.shape
    assert Cin == C_IN, Cin

    # Fixed row tile (multiple of 4); pad H up instead of degrading the tile.
    Ht = max(4, min(_round_up(row_tile, 4), _round_up(H, 4)))
    Hc = _round_up(H, Ht)                       # tiled (padded) height
    Wp = _round_up(W + 2 * PADT, 32)            # flat row stride; Ht*Wp % 128 == 0
    Hp = Hc + 2 * PADT + 2                      # extra bottom slack for tap windows
    E = Ht + 2 * PAD3
    NE = (E + 1) * Wp
    N3 = Ht * Wp
    assert (Ht * Wp) % 128 == 0

    # Zero-pad (conv1 'same' padding + conv3 halo + tiling slack) and flatten
    # the spatial dims; the (B,C,H,W)->(B,C,H*W) reshape is free in HBM.
    xp = jnp.pad(x_nchw, ((0, 0), (0, 0),
                          (PADT, Hp - H - PADT),
                          (PADT, Wp - W - PADT)))
    xp = xp.reshape(B, C_IN, Hp * Wp).astype(jnp.bfloat16)

    # Column mask for conv3's zero padding (periodic in the flat axis).
    cols = jnp.arange(NE, dtype=jnp.int32) % Wp
    cmask = ((cols >= PAD3) & (cols < W + PAD3)).astype(jnp.float32)[None, :]

    # Weight re-layout (once, in XLA): (co, K*K*ci) / (co, ci) / ((dy,dx,co), ci)
    w1f = jnp.transpose(params["w1"], (3, 0, 1, 2)).reshape(
        C_MID1, K1 * K1 * C_IN).astype(jnp.bfloat16)
    w2f = jnp.transpose(params["w2"].reshape(C_MID1, C_MID2)).astype(jnp.bfloat16)
    w3f = jnp.transpose(params["w3"], (0, 1, 3, 2)).reshape(
        K3 * K3 * C_OUT, C_MID2).astype(jnp.bfloat16)
    b1 = params["b1"].reshape(C_MID1, 1).astype(jnp.float32)
    b2 = params["b2"].reshape(C_MID2, 1).astype(jnp.float32)
    b3 = params["b3"].reshape(C_OUT, 1).astype(jnp.float32)

    kernel = functools.partial(_srcnn_kernel, H=H, W=W, Wp=Wp, Ht=Ht)

    out = pl.pallas_call(
        kernel,
        out_shape=jax.ShapeDtypeStruct((B, C_OUT, Hc * Wp), jnp.float32),
        grid_spec=pltpu.PrefetchScalarGridSpec(
            num_scalar_prefetch=0,
            grid=(B, Hc // Ht),
            in_specs=[
                # whole padded 2-channel image, resident across the row axis
                pl.BlockSpec((1, C_IN, Hp * Wp), lambda b, r: (b, 0, 0)),
                pl.BlockSpec((1, NE), lambda b, r: (0, 0)),
                pl.BlockSpec((C_MID1, K1 * K1 * C_IN), lambda b, r: (0, 0)),
                pl.BlockSpec((C_MID1, 1), lambda b, r: (0, 0)),
                pl.BlockSpec((C_MID2, C_MID1), lambda b, r: (0, 0)),
                pl.BlockSpec((C_MID2, 1), lambda b, r: (0, 0)),
                pl.BlockSpec((K3 * K3 * C_OUT, C_MID2), lambda b, r: (0, 0)),
                pl.BlockSpec((C_OUT, 1), lambda b, r: (0, 0)),
            ],
            out_specs=pl.BlockSpec((1, C_OUT, N3), lambda b, r: (b, 0, r)),
        ),
        compiler_params=pltpu.CompilerParams(
            dimension_semantics=("parallel", "parallel"),
            vmem_limit_bytes=100 * 1024 * 1024),
    )(xp, cmask, w1f, b1, w2f, b2, w3f, b3)

    # Flat -> (B, C, Hc, Wp), drop padded/junk rows & columns.  No transpose.
    out = out.reshape(B, C_OUT, Hc, Wp)[:, :, :H, :W]
    return out


# ------------------ pure-JAX reference (correctness check) ------------------
def _conv_ref(x_nchw, w_kkio, b, pad):
    w_oihw = jnp.transpose(w_kkio, (3, 2, 0, 1))
    y = jax.lax.conv_general_dilated(
        x_nchw, w_oihw, window_strides=(1, 1),
        padding=[(pad, pad), (pad, pad)],
        dimension_numbers=("NCHW", "OIHW", "NCHW"))
    return y + b[None, :, None, None]


def srcnn_ref(x_nchw, params):
    h = jnp.maximum(_conv_ref(x_nchw, params["w1"], params["b1"], PAD1), 0.0)
    h = jnp.maximum(_conv_ref(h, params["w2"], params["b2"], 0), 0.0)
    return _conv_ref(h, params["w3"], params["b3"], PAD3)


def _init_conv(key, K, cin, cout):
    # deterministic, PyTorch-style fan_in-scaled uniform init
    kw, kb = jax.random.split(key)
    bound = 1.0 / float(cin * K * K) ** 0.5
    w = jax.random.uniform(kw, (K, K, cin, cout), jnp.float32, -bound, bound)
    b = jax.random.uniform(kb, (cout,), jnp.float32, -bound, bound)
    return w, b


if __name__ == "__main__":
    root = jax.random.PRNGKey(0)
    kx, k1, k2, k3 = jax.random.split(root, 4)

    # SRCNN operates on 2-channel images; H=W=16 exercises the border masking
    # (conv3 zero padding) and the single-row-tile path.
    x = jax.random.normal(kx, (2, 2, 16, 16), jnp.float32)            # NCHW

    w1, b1 = _init_conv(k1, K1, C_IN, C_MID1)
    w2, b2 = _init_conv(k2, 1, C_MID1, C_MID2)
    w3, b3 = _init_conv(k3, K3, C_MID2, C_OUT)
    params = {"w1": w1, "b1": b1, "w2": w2, "b2": b2, "w3": w3, "b3": b3}

    out = jax.jit(srcnn_forward)(x, params)
    out = jax.block_until_ready(out)

    ref = srcnn_ref(x, params)
    assert out.shape == (2, 2, 16, 16), out.shape
    err = float(jnp.max(jnp.abs(out - ref)))
    # bf16 MXU operands / activations (f32 accumulation) vs f32 reference:
    # intentional precision trade-off for SR inference -> loosened tolerance.
    assert err < 5e-2, err

    print("KERNEL_OK")
</pallas_src>

<mosaic_0001>
module attributes {stable_mosaic.version = 11 : i64} {
  func.func @_srcnn_kernel(%arg0: i32, %arg1: i32, %arg2: memref<1x2x960xbf16, #tpu.memory_space<vmem>>, %arg3: memref<1x672xf32, #tpu.memory_space<vmem>>, %arg4: memref<64x162xbf16, #tpu.memory_space<vmem>>, %arg5: memref<64x1xf32, #tpu.memory_space<vmem>>, %arg6: memref<32x64xbf16, #tpu.memory_space<vmem>>, %arg7: memref<32x1xf32, #tpu.memory_space<vmem>>, %arg8: memref<50x32xbf16, #tpu.memory_space<vmem>>, %arg9: memref<2x1xf32, #tpu.memory_space<vmem>>, %arg10: memref<1x2x512xf32, #tpu.memory_space<vmem>>) attributes {dimension_semantics = [#tpu.dimension_semantics<parallel>, #tpu.dimension_semantics<parallel>], iteration_bounds = array<i64: 2, 1>, scalar_prefetch = 0 : i64, scratch_operands = 0 : i64, tpu.core_type = #tpu.core_type<tc>, window_params = [{transform_indices = @transform_0, window_bounds = array<i64: 1, 2, 960>}, {pipeline_mode = #tpu.pipeline_mode<synchronous>, transform_indices = @transform_1, window_bounds = array<i64: 1, 672>}, {pipeline_mode = #tpu.pipeline_mode<synchronous>, transform_indices = @transform_2, window_bounds = array<i64: 64, 162>}, {pipeline_mode = #tpu.pipeline_mode<synchronous>, transform_indices = @transform_3, window_bounds = array<i64: 64, 1>}, {pipeline_mode = #tpu.pipeline_mode<synchronous>, transform_indices = @transform_4, window_bounds = array<i64: 32, 64>}, {pipeline_mode = #tpu.pipeline_mode<synchronous>, transform_indices = @transform_5, window_bounds = array<i64: 32, 1>}, {pipeline_mode = #tpu.pipeline_mode<synchronous>, transform_indices = @transform_6, window_bounds = array<i64: 50, 32>}, {pipeline_mode = #tpu.pipeline_mode<synchronous>, transform_indices = @transform_7, window_bounds = array<i64: 2, 1>}, {transform_indices = @transform_8, window_bounds = array<i64: 1, 2, 512>}]} {
    %c16_i32 = arith.constant 16 : i32
    %0 = arith.muli %arg1, %c16_i32 : i32
    %c32_i32 = arith.constant 32 : i32
    %1 = arith.muli %0, %c32_i32 : i32
    %2 = tpu.assume_multiple %1, 128 : i32
    %c0 = arith.constant 0 : index
    %c0_0 = arith.constant 0 : index
    %3 = arith.index_cast %2 : i32 to index
    %4 = vector.load %arg2[%c0, %c0_0, %3] : memref<1x2x960xbf16, #tpu.memory_space<vmem>>, vector<1x2x936xbf16>
    %5 = vector.shape_cast %4 : vector<1x2x936xbf16> to vector<2x936xbf16>
    %6 = vector.extract_strided_slice %5 {offsets = [0, 0], sizes = [2, 672], strides = [1, 1]} : vector<2x936xbf16> to vector<2x672xbf16>
    %7 = vector.extract_strided_slice %5 {offsets = [0, 1], sizes = [2, 672], strides = [1, 1]} : vector<2x936xbf16> to vector<2x672xbf16>
    %8 = vector.extract_strided_slice %5 {offsets = [0, 2], sizes = [2, 672], strides = [1, 1]} : vector<2x936xbf16> to vector<2x672xbf16>
    %9 = vector.extract_strided_slice %5 {offsets = [0, 3], sizes = [2, 672], strides = [1, 1]} : vector<2x936xbf16> to vector<2x672xbf16>
    %10 = vector.extract_strided_slice %5 {offsets = [0, 4], sizes = [2, 672], strides = [1, 1]} : vector<2x936xbf16> to vector<2x672xbf16>
    %11 = vector.extract_strided_slice %5 {offsets = [0, 5], sizes = [2, 672], strides = [1, 1]} : vector<2x936xbf16> to vector<2x672xbf16>
    %12 = vector.extract_strided_slice %5 {offsets = [0, 6], sizes = [2, 672], strides = [1, 1]} : vector<2x936xbf16> to vector<2x672xbf16>
    %13 = vector.extract_strided_slice %5 {offsets = [0, 7], sizes = [2, 672], strides = [1, 1]} : vector<2x936xbf16> to vector<2x672xbf16>
    %14 = vector.extract_strided_slice %5 {offsets = [0, 8], sizes = [2, 672], strides = [1, 1]} : vector<2x936xbf16> to vector<2x672xbf16>
    %15 = tpu.concatenate %6, %7, %8, %9, %10, %11, %12, %13, %14 in 0 : vector<2x672xbf16>, vector<2x672xbf16>, vector<2x672xbf16>, vector<2x672xbf16>, vector<2x672xbf16>, vector<2x672xbf16>, vector<2x672xbf16>, vector<2x672xbf16>, vector<2x672xbf16> -> vector<18x672xbf16>
    %16 = vector.extract_strided_slice %5 {offsets = [0, 32], sizes = [2, 672], strides = [1, 1]} : vector<2x936xbf16> to vector<2x672xbf16>
    %17 = vector.extract_strided_slice %5 {offsets = [0, 33], sizes = [2, 672], strides = [1, 1]} : vector<2x936xbf16> to vector<2x672xbf16>
    %18 = vector.extract_strided_slice %5 {offsets = [0, 34], sizes = [2, 672], strides = [1, 1]} : vector<2x936xbf16> to vector<2x672xbf16>
    %19 = vector.extract_strided_slice %5 {offsets = [0, 35], sizes = [2, 672], strides = [1, 1]} : vector<2x936xbf16> to vector<2x672xbf16>
    %20 = vector.extract_strided_slice %5 {offsets = [0, 36], sizes = [2, 672], strides = [1, 1]} : vector<2x936xbf16> to vector<2x672xbf16>
    %21 = vector.extract_strided_slice %5 {offsets = [0, 37], sizes = [2, 672], strides = [1, 1]} : vector<2x936xbf16> to vector<2x672xbf16>
    %22 = vector.extract_strided_slice %5 {offsets = [0, 38], sizes = [2, 672], strides = [1, 1]} : vector<2x936xbf16> to vector<2x672xbf16>
    %23 = vector.extract_strided_slice %5 {offsets = [0, 39], sizes = [2, 672], strides = [1, 1]} : vector<2x936xbf16> to vector<2x672xbf16>
    %24 = vector.extract_strided_slice %5 {offsets = [0, 40], sizes = [2, 672], strides = [1, 1]} : vector<2x936xbf16> to vector<2x672xbf16>
    %25 = tpu.concatenate %16, %17, %18, %19, %20, %21, %22, %23, %24 in 0 : vector<2x672xbf16>, vector<2x672xbf16>, vector<2x672xbf16>, vector<2x672xbf16>, vector<2x672xbf16>, vector<2x672xbf16>, vector<2x672xbf16>, vector<2x672xbf16>, vector<2x672xbf16> -> vector<18x672xbf16>
    %26 = vector.extract_strided_slice %5 {offsets = [0, 64], sizes = [2, 672], strides = [1, 1]} : vector<2x936xbf16> to vector<2x672xbf16>
    %27 = vector.extract_strided_slice %5 {offsets = [0, 65], sizes = [2, 672], strides = [1, 1]} : vector<2x936xbf16> to vector<2x672xbf16>
    %28 = vector.extract_strided_slice %5 {offsets = [0, 66], sizes = [2, 672], strides = [1, 1]} : vector<2x936xbf16> to vector<2x672xbf16>
    %29 = vector.extract_strided_slice %5 {offsets = [0, 67], sizes = [2, 672], strides = [1, 1]} : vector<2x936xbf16> to vector<2x672xbf16>
    %30 = vector.extract_strided_slice %5 {offsets = [0, 68], sizes = [2, 672], strides = [1, 1]} : vector<2x936xbf16> to vector<2x672xbf16>
    %31 = vector.extract_strided_slice %5 {offsets = [0, 69], sizes = [2, 672], strides = [1, 1]} : vector<2x936xbf16> to vector<2x672xbf16>
    %32 = vector.extract_strided_slice %5 {offsets = [0, 70], sizes = [2, 672], strides = [1, 1]} : vector<2x936xbf16> to vector<2x672xbf16>
    %33 = vector.extract_strided_slice %5 {offsets = [0, 71], sizes = [2, 672], strides = [1, 1]} : vector<2x936xbf16> to vector<2x672xbf16>
    %34 = vector.extract_strided_slice %5 {offsets = [0, 72], sizes = [2, 672], strides = [1, 1]} : vector<2x936xbf16> to vector<2x672xbf16>
    %35 = tpu.concatenate %26, %27, %28, %29, %30, %31, %32, %33, %34 in 0 : vector<2x672xbf16>, vector<2x672xbf16>, vector<2x672xbf16>, vector<2x672xbf16>, vector<2x672xbf16>, vector<2x672xbf16>, vector<2x672xbf16>, vector<2x672xbf16>, vector<2x672xbf16> -> vector<18x672xbf16>
    %36 = vector.extract_strided_slice %5 {offsets = [0, 96], sizes = [2, 672], strides = [1, 1]} : vector<2x936xbf16> to vector<2x672xbf16>
    %37 = vector.extract_strided_slice %5 {offsets = [0, 97], sizes = [2, 672], strides = [1, 1]} : vector<2x936xbf16> to vector<2x672xbf16>
    %38 = vector.extract_strided_slice %5 {offsets = [0, 98], sizes = [2, 672], strides = [1, 1]} : vector<2x936xbf16> to vector<2x672xbf16>
    %39 = vector.extract_strided_slice %5 {offsets = [0, 99], sizes = [2, 672], strides = [1, 1]} : vector<2x936xbf16> to vector<2x672xbf16>
    %40 = vector.extract_strided_slice %5 {offsets = [0, 100], sizes = [2, 672], strides = [1, 1]} : vector<2x936xbf16> to vector<2x672xbf16>
    %41 = vector.extract_strided_slice %5 {offsets = [0, 101], sizes = [2, 672], strides = [1, 1]} : vector<2x936xbf16> to vector<2x672xbf16>
    %42 = vector.extract_strided_slice %5 {offsets = [0, 102], sizes = [2, 672], strides = [1, 1]} : vector<2x936xbf16> to vector<2x672xbf16>
    %43 = vector.extract_strided_slice %5 {offsets = [0, 103], sizes = [2, 672], strides = [1, 1]} : vector<2x936xbf16> to vector<2x672xbf16>
    %44 = vector.extract_strided_slice %5 {offsets = [0, 104], sizes = [2, 672], strides = [1, 1]} : vector<2x936xbf16> to vector<2x672xbf16>
    %45 = tpu.concatenate %36, %37, %38, %39, %40, %41, %42, %43, %44 in 0 : vector<2x672xbf16>, vector<2x672xbf16>, vector<2x672xbf16>, vector<2x672xbf16>, vector<2x672xbf16>, vector<2x672xbf16>, vector<2x672xbf16>, vector<2x672xbf16>, vector<2x672xbf16> -> vector<18x672xbf16>
    %46 = vector.extract_strided_slice %5 {offsets = [0, 128], sizes = [2, 672], strides = [1, 1]} : vector<2x936xbf16> to vector<2x672xbf16>
    %47 = vector.extract_strided_slice %5 {offsets = [0, 129], sizes = [2, 672], strides = [1, 1]} : vector<2x936xbf16> to vector<2x672xbf16>
    %48 = vector.extract_strided_slice %5 {offsets = [0, 130], sizes = [2, 672], strides = [1, 1]} : vector<2x936xbf16> to vector<2x672xbf16>
    %49 = vector.extract_strided_slice %5 {offsets = [0, 131], sizes = [2, 672], strides = [1, 1]} : vector<2x936xbf16> to vector<2x672xbf16>
    %50 = vector.extract_strided_slice %5 {offsets = [0, 132], sizes = [2, 672], strides = [1, 1]} : vector<2x936xbf16> to vector<2x672xbf16>
    %51 = vector.extract_strided_slice %5 {offsets = [0, 133], sizes = [2, 672], strides = [1, 1]} : vector<2x936xbf16> to vector<2x672xbf16>
    %52 = vector.extract_strided_slice %5 {offsets = [0, 134], sizes = [2, 672], strides = [1, 1]} : vector<2x936xbf16> to vector<2x672xbf16>
    %53 = vector.extract_strided_slice %5 {offsets = [0, 135], sizes = [2, 672], strides = [1, 1]} : vector<2x936xbf16> to vector<2x672xbf16>
    %54 = vector.extract_strided_slice %5 {offsets = [0, 136], sizes = [2, 672], strides = [1, 1]} : vector<2x936xbf16> to vector<2x672xbf16>
    %55 = tpu.concatenate %46, %47, %48, %49, %50, %51, %52, %53, %54 in 0 : vector<2x672xbf16>, vector<2x672xbf16>, vector<2x672xbf16>, vector<2x672xbf16>, vector<2x672xbf16>, vector<2x672xbf16>, vector<2x672xbf16>, vector<2x672xbf16>, vector<2x672xbf16> -> vector<18x672xbf16>
    %56 = vector.extract_strided_slice %5 {offsets = [0, 160], sizes = [2, 672], strides = [1, 1]} : vector<2x936xbf16> to vector<2x672xbf16>
    %57 = vector.extract_strided_slice %5 {offsets = [0, 161], sizes = [2, 672], strides = [1, 1]} : vector<2x936xbf16> to vector<2x672xbf16>
    %58 = vector.extract_strided_slice %5 {offsets = [0, 162], sizes = [2, 672], strides = [1, 1]} : vector<2x936xbf16> to vector<2x672xbf16>
    %59 = vector.extract_strided_slice %5 {offsets = [0, 163], sizes = [2, 672], strides = [1, 1]} : vector<2x936xbf16> to vector<2x672xbf16>
    %60 = vector.extract_strided_slice %5 {offsets = [0, 164], sizes = [2, 672], strides = [1, 1]} : vector<2x936xbf16> to vector<2x672xbf16>
    %61 = vector.extract_strided_slice %5 {offsets = [0, 165], sizes = [2, 672], strides = [1, 1]} : vector<2x936xbf16> to vector<2x672xbf16>
    %62 = vector.extract_strided_slice %5 {offsets = [0, 166], sizes = [2, 672], strides = [1, 1]} : vector<2x936xbf16> to vector<2x672xbf16>
    %63 = vector.extract_strided_slice %5 {offsets = [0, 167], sizes = [2, 672], strides = [1, 1]} : vector<2x936xbf16> to vector<2x672xbf16>
    %64 = vector.extract_strided_slice %5 {offsets = [0, 168], sizes = [2, 672], strides = [1, 1]} : vector<2x936xbf16> to vector<2x672xbf16>
    %65 = tpu.concatenate %56, %57, %58, %59, %60, %61, %62, %63, %64 in 0 : vector<2x672xbf16>, vector<2x672xbf16>, vector<2x672xbf16>, vector<2x672xbf16>, vector<2x672xbf16>, vector<2x672xbf16>, vector<2x672xbf16>, vector<2x672xbf16>, vector<2x672xbf16> -> vector<18x672xbf16>
    %66 = vector.extract_strided_slice %5 {offsets = [0, 192], sizes = [2, 672], strides = [1, 1]} : vector<2x936xbf16> to vector<2x672xbf16>
    %67 = vector.extract_strided_slice %5 {offsets = [0, 193], sizes = [2, 672], strides = [1, 1]} : vector<2x936xbf16> to vector<2x672xbf16>
    %68 = vector.extract_strided_slice %5 {offsets = [0, 194], sizes = [2, 672], strides = [1, 1]} : vector<2x936xbf16> to vector<2x672xbf16>
    %69 = vector.extract_strided_slice %5 {offsets = [0, 195], sizes = [2, 672], strides = [1, 1]} : vector<2x936xbf16> to vector<2x672xbf16>
    %70 = vector.extract_strided_slice %5 {offsets = [0, 196], sizes = [2, 672], strides = [1, 1]} : vector<2x936xbf16> to vector<2x672xbf16>
    %71 = vector.extract_strided_slice %5 {offsets = [0, 197], sizes = [2, 672], strides = [1, 1]} : vector<2x936xbf16> to vector<2x672xbf16>
    %72 = vector.extract_strided_slice %5 {offsets = [0, 198], sizes = [2, 672], strides = [1, 1]} : vector<2x936xbf16> to vector<2x672xbf16>
    %73 = vector.extract_strided_slice %5 {offsets = [0, 199], sizes = [2, 672], strides = [1, 1]} : vector<2x936xbf16> to vector<2x672xbf16>
    %74 = vector.extract_strided_slice %5 {offsets = [0, 200], sizes = [2, 672], strides = [1, 1]} : vector<2x936xbf16> to vector<2x672xbf16>
    %75 = tpu.concatenate %66, %67, %68, %69, %70, %71, %72, %73, %74 in 0 : vector<2x672xbf16>, vector<2x672xbf16>, vector<2x672xbf16>, vector<2x672xbf16>, vector<2x672xbf16>, vector<2x672xbf16>, vector<2x672xbf16>, vector<2x672xbf16>, vector<2x672xbf16> -> vector<18x672xbf16>
    %76 = vector.extract_strided_slice %5 {offsets = [0, 224], sizes = [2, 672], strides = [1, 1]} : vector<2x936xbf16> to vector<2x672xbf16>
    %77 = vector.extract_strided_slice %5 {offsets = [0, 225], sizes = [2, 672], strides = [1, 1]} : vector<2x936xbf16> to vector<2x672xbf16>
    %78 = vector.extract_strided_slice %5 {offsets = [0, 226], sizes = [2, 672], strides = [1, 1]} : vector<2x936xbf16> to vector<2x672xbf16>
    %79 = vector.extract_strided_slice %5 {offsets = [0, 227], sizes = [2, 672], strides = [1, 1]} : vector<2x936xbf16> to vector<2x672xbf16>
    %80 = vector.extract_strided_slice %5 {offsets = [0, 228], sizes = [2, 672], strides = [1, 1]} : vector<2x936xbf16> to vector<2x672xbf16>
    %81 = vector.extract_strided_slice %5 {offsets = [0, 229], sizes = [2, 672], strides = [1, 1]} : vector<2x936xbf16> to vector<2x672xbf16>
    %82 = vector.extract_strided_slice %5 {offsets = [0, 230], sizes = [2, 672], strides = [1, 1]} : vector<2x936xbf16> to vector<2x672xbf16>
    %83 = vector.extract_strided_slice %5 {offsets = [0, 231], sizes = [2, 672], strides = [1, 1]} : vector<2x936xbf16> to vector<2x672xbf16>
    %84 = vector.extract_strided_slice %5 {offsets = [0, 232], sizes = [2, 672], strides = [1, 1]} : vector<2x936xbf16> to vector<2x672xbf16>
    %85 = tpu.concatenate %76, %77, %78, %79, %80, %81, %82, %83, %84 in 0 : vector<2x672xbf16>, vector<2x672xbf16>, vector<2x672xbf16>, vector<2x672xbf16>, vector<2x672xbf16>, vector<2x672xbf16>, vector<2x672xbf16>, vector<2x672xbf16>, vector<2x672xbf16> -> vector<18x672xbf16>
    %86 = vector.extract_strided_slice %5 {offsets = [0, 256], sizes = [2, 672], strides = [1, 1]} : vector<2x936xbf16> to vector<2x672xbf16>
    %87 = vector.extract_strided_slice %5 {offsets = [0, 257], sizes = [2, 672], strides = [1, 1]} : vector<2x936xbf16> to vector<2x672xbf16>
    %88 = vector.extract_strided_slice %5 {offsets = [0, 258], sizes = [2, 672], strides = [1, 1]} : vector<2x936xbf16> to vector<2x672xbf16>
    %89 = vector.extract_strided_slice %5 {offsets = [0, 259], sizes = [2, 672], strides = [1, 1]} : vector<2x936xbf16> to vector<2x672xbf16>
    %90 = vector.extract_strided_slice %5 {offsets = [0, 260], sizes = [2, 672], strides = [1, 1]} : vector<2x936xbf16> to vector<2x672xbf16>
    %91 = vector.extract_strided_slice %5 {offsets = [0, 261], sizes = [2, 672], strides = [1, 1]} : vector<2x936xbf16> to vector<2x672xbf16>
    %92 = vector.extract_strided_slice %5 {offsets = [0, 262], sizes = [2, 672], strides = [1, 1]} : vector<2x936xbf16> to vector<2x672xbf16>
    %93 = vector.extract_strided_slice %5 {offsets = [0, 263], sizes = [2, 672], strides = [1, 1]} : vector<2x936xbf16> to vector<2x672xbf16>
    %94 = vector.extract_strided_slice %5 {offsets = [0, 264], sizes = [2, 672], strides = [1, 1]} : vector<2x936xbf16> to vector<2x672xbf16>
    %95 = tpu.concatenate %86, %87, %88, %89, %90, %91, %92, %93, %94 in 0 : vector<2x672xbf16>, vector<2x672xbf16>, vector<2x672xbf16>, vector<2x672xbf16>, vector<2x672xbf16>, vector<2x672xbf16>, vector<2x672xbf16>, vector<2x672xbf16>, vector<2x672xbf16> -> vector<18x672xbf16>
    %96 = tpu.concatenate %15, %25, %35, %45, %55, %65, %75, %85, %95 in 0 : vector<18x672xbf16>, vector<18x672xbf16>, vector<18x672xbf16>, vector<18x672xbf16>, vector<18x672xbf16>, vector<18x672xbf16>, vector<18x672xbf16>, vector<18x672xbf16>, vector<18x672xbf16> -> vector<162x672xbf16>
    %c0_1 = arith.constant 0 : index
    %c0_2 = arith.constant 0 : index
    %97 = vector.load %arg4[%c0_1, %c0_2] : memref<64x162xbf16, #tpu.memory_space<vmem>>, vector<64x162xbf16>
    %cst = arith.constant dense<0.000000e+00> : vector<64x672xf32>
    %98 = tpu.matmul %97, %96, %cst {dimension_numbers = #tpu.dot_dimension_numbers<[1], [0], [0], [1], [0, 0, 1, 1], [], []>} : vector<64x162xbf16>, vector<162x672xbf16>, vector<64x672xf32> -> vector<64x672xf32>
    %c0_3 = arith.constant 0 : index
    %c0_4 = arith.constant 0 : index
    %99 = vector.load %arg5[%c0_3, %c0_4] : memref<64x1xf32, #tpu.memory_space<vmem>>, vector<64x1xf32>
    %100 = vector.broadcast %99 : vector<64x1xf32> to vector<64x672xf32>
    %101 = arith.addf %98, %100 : vector<64x672xf32>
    %cst_5 = arith.constant 0.000000e+00 : f32
    %102 = vector.broadcast %cst_5 : f32 to vector<64x672xf32>
    %103 = arith.maximumf %101, %102 : vector<64x672xf32>
    %104 = arith.truncf %103 : vector<64x672xf32> to vector<64x672xbf16>
    %c0_6 = arith.constant 0 : index
    %c0_7 = arith.constant 0 : index
    %105 = vector.load %arg6[%c0_6, %c0_7] : memref<32x64xbf16, #tpu.memory_space<vmem>>, vector<32x64xbf16>
    %cst_8 = arith.constant dense<0.000000e+00> : vector<32x672xf32>
    %106 = tpu.matmul %105, %104, %cst_8 {dimension_numbers = #tpu.dot_dimension_numbers<[1], [0], [0], [1], [0, 0, 1, 1], [], []>} : vector<32x64xbf16>, vector<64x672xbf16>, vector<32x672xf32> -> vector<32x672xf32>
    %c0_9 = arith.constant 0 : index
    %c0_10 = arith.constant 0 : index
    %107 = vector.load %arg7[%c0_9, %c0_10] : memref<32x1xf32, #tpu.memory_space<vmem>>, vector<32x1xf32>
    %108 = vector.broadcast %107 : vector<32x1xf32> to vector<32x672xf32>
    %109 = arith.addf %106, %108 : vector<32x672xf32>
    %cst_11 = arith.constant 0.000000e+00 : f32
    %110 = vector.broadcast %cst_11 : f32 to vector<32x672xf32>
    %111 = arith.maximumf %109, %110 : vector<32x672xf32>
    %112 = tpu.iota {dimensions = array<i32: 1>} : vector<1x672xi32>
    %c2_i32 = arith.constant 2 : i32
    %113 = arith.subi %c2_i32, %0 : i32
    %c0_i32 = arith.constant 0 : i32
    %114 = arith.maxsi %113, %c0_i32 : i32
    %c32_i32_12 = arith.constant 32 : i32
    %115 = arith.muli %114, %c32_i32_12 : i32
    %c18_i32 = arith.constant 18 : i32
    %116 = arith.subi %c18_i32, %0 : i32
    %c21_i32 = arith.constant 21 : i32
    %117 = arith.minsi %116, %c21_i32 : i32
    %c32_i32_13 = arith.constant 32 : i32
    %118 = arith.muli %117, %c32_i32_13 : i32
    %119 = vector.broadcast %115 : i32 to vector<1x672xi32>
    %120 = arith.cmpi sge, %112, %119 : vector<1x672xi32>
    %121 = vector.broadcast %118 : i32 to vector<1x672xi32>
    %122 = arith.cmpi slt, %112, %121 : vector<1x672xi32>
    %123 = arith.andi %120, %122 : vector<1x672xi1>
    %124 = arith.extui %123 : vector<1x672xi1> to vector<1x672xi32>
    %125 = arith.sitofp %124 : vector<1x672xi32> to vector<1x672xf32>
    %c0_14 = arith.constant 0 : index
    %c0_15 = arith.constant 0 : index
    %126 = vector.load %arg3[%c0_14, %c0_15] : memref<1x672xf32, #tpu.memory_space<vmem>>, vector<1x672xf32>
    %127 = arith.mulf %125, %126 : vector<1x672xf32>
    %128 = vector.broadcast %127 : vector<1x672xf32> to vector<32x672xf32>
    %129 = arith.mulf %111, %128 : vector<32x672xf32>
    %130 = arith.truncf %129 : vector<32x672xf32> to vector<32x672xbf16>
    %c0_16 = arith.constant 0 : index
    %c0_17 = arith.constant 0 : index
    %131 = vector.load %arg8[%c0_16, %c0_17] : memref<50x32xbf16, #tpu.memory_space<vmem>>, vector<50x32xbf16>
    %cst_18 = arith.constant dense<0.000000e+00> : vector<50x672xf32>
    %132 = tpu.matmul %131, %130, %cst_18 {dimension_numbers = #tpu.dot_dimension_numbers<[1], [0], [0], [1], [0, 0, 1, 1], [], []>} : vector<50x32xbf16>, vector<32x672xbf16>, vector<50x672xf32> -> vector<50x672xf32>
    %cst_19 = arith.constant 0.000000e+00 : f32
    %133 = vector.broadcast %cst_19 : f32 to vector<2x512xf32>
    %134 = vector.extract_strided_slice %132 {offsets = [0, 0], sizes = [2, 512], strides = [1, 1]} : vector<50x672xf32> to vector<2x512xf32>
    %135 = arith.addf %133, %134 : vector<2x512xf32>
    %136 = vector.extract_strided_slice %132 {offsets = [2, 1], sizes = [2, 512], strides = [1, 1]} : vector<50x672xf32> to vector<2x512xf32>
    %137 = arith.addf %135, %136 : vector<2x512xf32>
    %138 = vector.extract_strided_slice %132 {offsets = [4, 2], sizes = [2, 512], strides = [1, 1]} : vector<50x672xf32> to vector<2x512xf32>
    %139 = arith.addf %137, %138 : vector<2x512xf32>
    %140 = vector.extract_strided_slice %132 {offsets = [6, 3], sizes = [2, 512], strides = [1, 1]} : vector<50x672xf32> to vector<2x512xf32>
    %141 = arith.addf %139, %140 : vector<2x512xf32>
    %142 = vector.extract_strided_slice %132 {offsets = [8, 4], sizes = [2, 512], strides = [1, 1]} : vector<50x672xf32> to vector<2x512xf32>
    %143 = arith.addf %141, %142 : vector<2x512xf32>
    %144 = vector.extract_strided_slice %132 {offsets = [10, 32], sizes = [2, 512], strides = [1, 1]} : vector<50x672xf32> to vector<2x512xf32>
    %145 = arith.addf %143, %144 : vector<2x512xf32>
    %146 = vector.extract_strided_slice %132 {offsets = [12, 33], sizes = [2, 512], strides = [1, 1]} : vector<50x672xf32> to vector<2x512xf32>
    %147 = arith.addf %145, %146 : vector<2x512xf32>
    %148 = vector.extract_strided_slice %132 {offsets = [14, 34], sizes = [2, 512], strides = [1, 1]} : vector<50x672xf32> to vector<2x512xf32>
    %149 = arith.addf %147, %148 : vector<2x512xf32>
    %150 = vector.extract_strided_slice %132 {offsets = [16, 35], sizes = [2, 512], strides = [1, 1]} : vector<50x672xf32> to vector<2x512xf32>
    %151 = arith.addf %149, %150 : vector<2x512xf32>
    %152 = vector.extract_strided_slice %132 {offsets = [18, 36], sizes = [2, 512], strides = [1, 1]} : vector<50x672xf32> to vector<2x512xf32>
    %153 = arith.addf %151, %152 : vector<2x512xf32>
    %154 = vector.extract_strided_slice %132 {offsets = [20, 64], sizes = [2, 512], strides = [1, 1]} : vector<50x672xf32> to vector<2x512xf32>
    %155 = arith.addf %153, %154 : vector<2x512xf32>
    %156 = vector.extract_strided_slice %132 {offsets = [22, 65], sizes = [2, 512], strides = [1, 1]} : vector<50x672xf32> to vector<2x512xf32>
    %157 = arith.addf %155, %156 : vector<2x512xf32>
    %158 = vector.extract_strided_slice %132 {offsets = [24, 66], sizes = [2, 512], strides = [1, 1]} : vector<50x672xf32> to vector<2x512xf32>
    %159 = arith.addf %157, %158 : vector<2x512xf32>
    %160 = vector.extract_strided_slice %132 {offsets = [26, 67], sizes = [2, 512], strides = [1, 1]} : vector<50x672xf32> to vector<2x512xf32>
    %161 = arith.addf %159, %160 : vector<2x512xf32>
    %162 = vector.extract_strided_slice %132 {offsets = [28, 68], sizes = [2, 512], strides = [1, 1]} : vector<50x672xf32> to vector<2x512xf32>
    %163 = arith.addf %161, %162 : vector<2x512xf32>
    %164 = vector.extract_strided_slice %132 {offsets = [30, 96], sizes = [2, 512], strides = [1, 1]} : vector<50x672xf32> to vector<2x512xf32>
    %165 = arith.addf %163, %164 : vector<2x512xf32>
    %166 = vector.extract_strided_slice %132 {offsets = [32, 97], sizes = [2, 512], strides = [1, 1]} : vector<50x672xf32> to vector<2x512xf32>
    %167 = arith.addf %165, %166 : vector<2x512xf32>
    %168 = vector.extract_strided_slice %132 {offsets = [34, 98], sizes = [2, 512], strides = [1, 1]} : vector<50x672xf32> to vector<2x512xf32>
    %169 = arith.addf %167, %168 : vector<2x512xf32>
    %170 = vector.extract_strided_slice %132 {offsets = [36, 99], sizes = [2, 512], strides = [1, 1]} : vector<50x672xf32> to vector<2x512xf32>
    %171 = arith.addf %169, %170 : vector<2x512xf32>
    %172 = vector.extract_strided_slice %132 {offsets = [38, 100], sizes = [2, 512], strides = [1, 1]} : vector<50x672xf32> to vector<2x512xf32>
    %173 = arith.addf %171, %172 : vector<2x512xf32>
    %174 = vector.extract_strided_slice %132 {offsets = [40, 128], sizes = [2, 512], strides = [1, 1]} : vector<50x672xf32> to vector<2x512xf32>
    %175 = arith.addf %173, %174 : vector<2x512xf32>
    %176 = vector.extract_strided_slice %132 {offsets = [42, 129], sizes = [2, 512], strides = [1, 1]} : vector<50x672xf32> to vector<2x512xf32>
    %177 = arith.addf %175, %176 : vector<2x512xf32>
    %178 = vector.extract_strided_slice %132 {offsets = [44, 130], sizes = [2, 512], strides = [1, 1]} : vector<50x672xf32> to vector<2x512xf32>
    %179 = arith.addf %177, %178 : vector<2x512xf32>
    %180 = vector.extract_strided_slice %132 {offsets = [46, 131], sizes = [2, 512], strides = [1, 1]} : vector<50x672xf32> to vector<2x512xf32>
    %181 = arith.addf %179, %180 : vector<2x512xf32>
    %182 = vector.extract_strided_slice %132 {offsets = [48, 132], sizes = [2, 512], strides = [1, 1]} : vector<50x672xf32> to vector<2x512xf32>
    %183 = arith.addf %181, %182 : vector<2x512xf32>
    %c0_20 = arith.constant 0 : index
    %c0_21 = arith.constant 0 : index
    %184 = vector.load %arg9[%c0_20, %c0_21] : memref<2x1xf32, #tpu.memory_space<vmem>>, vector<2x1xf32>
    %185 = vector.broadcast %184 : vector<2x1xf32> to vector<2x512xf32>
    %186 = arith.addf %183, %185 : vector<2x512xf32>
    %c0_22 = arith.constant 0 : index
    %c0_23 = arith.constant 0 : index
    %c0_24 = arith.constant 0 : index
    %187 = vector.load %arg10[%c0_22, %c0_23, %c0_24] : memref<1x2x512xf32, #tpu.memory_space<vmem>>, vector<1x2x512xf32>
    %188 = vector.shape_cast %187 : vector<1x2x512xf32> to vector<2x512xf32>
    %189 = vector.shape_cast %186 : vector<2x512xf32> to vector<1x2x512xf32>
    tpu.vector_store %arg10[%c0_22, %c0_23, %c0_24], %189 {strides = array<i32>} : memref<1x2x512xf32, #tpu.memory_space<vmem>>, vector<1x2x512xf32>,
    return
  }
  func.func @transform_0(%arg0: i32, %arg1: i32) -> (i32, i32, i32) {
    %c0_i32 = arith.constant 0 : i32
    %c0_i32_0 = arith.constant 0 : i32
    %c0_i32_1 = arith.constant 0 : i32
    return %arg0, %c0_i32, %c0_i32_0 : i32, i32, i32
  }
  func.func @transform_1(%arg0: i32, %arg1: i32) -> (i32, i32) {
    %c0_i32 = arith.constant 0 : i32
    %c0_i32_0 = arith.constant 0 : i32
    %c0_i32_1 = arith.constant 0 : i32
    return %c0_i32, %c0_i32_0 : i32, i32
  }
  func.func @transform_2(%arg0: i32, %arg1: i32) -> (i32, i32) {
    %c0_i32 = arith.constant 0 : i32
    %c0_i32_0 = arith.constant 0 : i32
    %c0_i32_1 = arith.constant 0 : i32
    return %c0_i32, %c0_i32_0 : i32, i32
  }
  func.func @transform_3(%arg0: i32, %arg1: i32) -> (i32, i32) {
    %c0_i32 = arith.constant 0 : i32
    %c0_i32_0 = arith.constant 0 : i32
    %c0_i32_1 = arith.constant 0 : i32
    return %c0_i32, %c0_i32_0 : i32, i32
  }
  func.func @transform_4(%arg0: i32, %arg1: i32) -> (i32, i32) {
    %c0_i32 = arith.constant 0 : i32
    %c0_i32_0 = arith.constant 0 : i32
    %c0_i32_1 = arith.constant 0 : i32
    return %c0_i32, %c0_i32_0 : i32, i32
  }
  func.func @transform_5(%arg0: i32, %arg1: i32) -> (i32, i32) {
    %c0_i32 = arith.constant 0 : i32
    %c0_i32_0 = arith.constant 0 : i32
    %c0_i32_1 = arith.constant 0 : i32
    return %c0_i32, %c0_i32_0 : i32, i32
  }
  func.func @transform_6(%arg0: i32, %arg1: i32) -> (i32, i32) {
    %c0_i32 = arith.constant 0 : i32
    %c0_i32_0 = arith.constant 0 : i32
    %c0_i32_1 = arith.constant 0 : i32
    return %c0_i32, %c0_i32_0 : i32, i32
  }
  func.func @transform_7(%arg0: i32, %arg1: i32) -> (i32, i32) {
    %c0_i32 = arith.constant 0 : i32
    %c0_i32_0 = arith.constant 0 : i32
    %c0_i32_1 = arith.constant 0 : i32
    return %c0_i32, %c0_i32_0 : i32, i32
  }
  func.func @transform_8(%arg0: i32, %arg1: i32) -> (i32, i32, i32) {
    %c0_i32 = arith.constant 0 : i32
    %c0_i32_0 = arith.constant 0 : i32
    return %arg0, %c0_i32, %arg1 : i32, i32, i32
  }
}

</mosaic_0001>

<llo_original>
// kernel: srcnn_forward.1
$region0: #{srcnn_forward.1}
  #allocation0 [shape = 'u32[]', space=smem, size = 0x4, offset = 0x4, fixed_abs, tag = 'smem constant byte address 0x4 - core index']
  #allocation1 [shape = 'u32[144,128]{1,0:T(1,128)}', space=vmem, size = 0x12000, scoped, tag = 'internal scratch']
  %s0 = inlined_call_operand.hbm [shape: bf16[2,2,960], index: 0, kind: input, shape index: {}]
  %s1 = inlined_call_operand.hbm [shape: f32[1,672], index: 1, kind: input, shape index: {}]
  %s2 = inlined_call_operand.hbm [shape: bf16[64,162], index: 2, kind: input, shape index: {}]
  %s3 = inlined_call_operand.hbm [shape: f32[64,1], index: 3, kind: input, shape index: {}]
  %s4 = inlined_call_operand.hbm [shape: bf16[32,64], index: 4, kind: input, shape index: {}]
  %s5 = inlined_call_operand.hbm [shape: f32[32,1], index: 5, kind: input, shape index: {}]
  %s6 = inlined_call_operand.hbm [shape: bf16[50,32], index: 6, kind: input, shape index: {}]
  %s7 = inlined_call_operand.hbm [shape: f32[2,1], index: 7, kind: input, shape index: {}]
  %s8 = inlined_call_operand.hbm [shape: f32[2,2,512], index: 8, kind: output, shape index: {}]
  %s9 = sld [smem:[#allocation0]]
  $region97: #{srcnn_forward.1} parent=0
    _
  %s11 = ssub.s32 1, %s9
  %s12 = scalar_select 0, %s11, %s9
  $region1: #{srcnn_forward.1} parent=0
    #allocation2 [shape = 'u8[8192]{0}', space=vmem, size = 0x2000, scoped, tag = 'input window, operand 0']
    #allocation3 [shape = 's32[2]{0}', space=sflag, size = 0x8, scoped, tag = 'scoped memory for srcnn_forward.1']
    #allocation4 [shape = 's32[2]{0}', space=sflag, size = 0x8, scoped, tag = 'scoped memory for srcnn_forward.1']
    #allocation5 [shape = 'u8[3072]{0}', space=vmem, size = 0xc00, scoped, tag = 'input window, operand 1, single buffered']
    #allocation6 [shape = 's32[1]{0}', space=sflag, size = 0x4, scoped, tag = 'scoped memory for srcnn_forward.1']
    #allocation7 [shape = 'u8[32768]{0}', space=vmem, size = 0x8000, scoped, tag = 'input window, operand 2, single buffered']
    #allocation8 [shape = 'u8[32768]{0}', space=vmem, size = 0x8000, scoped, tag = 'input window, operand 3, single buffered']
    #allocation9 [shape = 's32[1]{0}', space=sflag, size = 0x4, scoped, tag = 'scoped memory for srcnn_forward.1']
    #allocation10 [shape = 'u8[8192]{0}', space=vmem, size = 0x2000, scoped, tag = 'input window, operand 4, single buffered']
    #allocation11 [shape = 'u8[16384]{0}', space=vmem, size = 0x4000, scoped, tag = 'input window, operand 5, single buffered']
    #allocation12 [shape = 's32[1]{0}', space=sflag, size = 0x4, scoped, tag = 'scoped memory for srcnn_forward.1']
    #allocation13 [shape = 'u8[14336]{0}', space=vmem, size = 0x3800, scoped, tag = 'input window, operand 6, single buffered']
    #allocation14 [shape = 'u8[1024]{0}', space=vmem, size = 0x400, scoped, tag = 'input window, operand 7, single buffered']
    #allocation15 [shape = 's32[1]{0}', space=sflag, size = 0x4, scoped, tag = 'scoped memory for srcnn_forward.1']
    #allocation16 [shape = 'u8[8192]{0}', space=vmem, size = 0x2000, scoped, tag = 'output window, operand 0']
    %13 = vsyncpa [#allocation3], 0
    %s14 = scalar_lea.sflag [#allocation3], 1
    %15 = vsyncpa %s14, 0
    %16 = vsyncpa [#allocation6], 0
    %17 = vsyncpa [#allocation9], 0
    %18 = vsyncpa [#allocation12], 0
    %19 = vsyncpa [#allocation15], 0
    %20 = vsyncpa [#allocation4], 0
    %s21 = scalar_lea.sflag [#allocation4], 1
    %22 = vsyncpa %s21, 0
    loop: start=0, step=1, limit=4
    $region2: #{srcnn_forward.1} parent=1 // loop_pre_header
      _
    $region3: #{srcnn_forward.1} parent=1 // loop_header
      %s24 = sphi 0, %s28
      %p25 = scmp.ge.s32.totalorder %s24, 4
      %s31 = sphi 0, %s43
      %s32 = sphi 0, %s39
      %s33 = sphi 0, %s31
      %s34 = sphi 0, %s32
      %s35 = sphi 0, %s33
      %s36 = sphi 0, %s34
      %s46 = sphi 0, %s48
      %s49 = sphi 0, %s46
      %s50 = sphi 0, %s49
      %s66 = sphi 0, %s50
      %s70 = sphi 0, %s70
      %s72 = sphi 0, %s70
      %s73 = sphi 0, %s72
      %s87 = sphi 0, %s73
      %s91 = sphi 0, %s91
      %s93 = sphi 0, %s91
      %s94 = sphi 0, %s93
      %s108 = sphi 0, %s94
      %s112 = sphi 0, %s112
      %s114 = sphi 0, %s112
      %s115 = sphi 0, %s114
      %s129 = sphi 0, %s115
      %s133 = sphi 0, %s133
      %s135 = sphi 0, %s133
      %s136 = sphi 0, %s135
      %s150 = sphi 0, %s136
      %s154 = sphi 0, %s154
      %s156 = sphi 0, %s154
      %s157 = sphi 0, %s156
      %s171 = sphi 0, %s157
      %s175 = sphi 0, %s175
      %s177 = sphi 0, %s175
      %s178 = sphi 0, %s177
      %s192 = sphi 0, %s178
      %s196 = sphi 0, %s196
      %s198 = sphi 0, %s196
      %s199 = sphi 0, %s198
      %s213 = sphi 0, %s199
      %s221 = sphi 0, %s223
      %s224 = sphi 0, %s221
      %s225 = sphi 0, %s224
      %s241 = sphi 0, %s225
    $region4: #{srcnn_forward.1} parent=1 // loop_header_branch
      %27 = sbr.rel (%p25) target = $region8
    $region5: #{srcnn_forward.1} parent=1 // loop_body
      %s29 = ssub.s32 %s24, 1
      %s30 = ssub.s32 %s24, 2
      %s37 = sadd.s32 1, %s32
      %p38 = scmp.ge.s32.totalorder %s37, 1
      %s39 = scalar_select %p38, 0, %s37
      %s40 = sadd.s32 1, %s31
      %s41 = scalar_select %p38, %s40, %s31
      %p42 = scmp.ge.s32.totalorder %s41, 2
      %s43 = scalar_select %p42, 0, %s41
      %s44 = ssub.s32 %s31, %s43
      %p45 = scmp.eq.s32.totalorder %s44, 0
      %s47 = sadd.s32 %s46, 1
      %s48 = scalar_select %p45, %s46, %s47
      %p51 = pneg %p45
      %p52 = scmp.eq.s32.totalorder %s24, 1
      %p53 = por %p51, %p52
      %p54 = scmp.ne.s32.totalorder %s46, %s49
      %p55 = scmp.eq.s32.totalorder %s24, 0
      %p56 = por %p54, %p55
      %p57 = scmp.ne.s32.totalorder %s46, %s49
      %p58 = scmp.eq.s32.totalorder %s29, 1
      %p59 = por %p57, %p58
      %p60 = scmp.ne.s32.totalorder %s49, %s50
      %p61 = scmp.eq.s32.totalorder %s29, 0
      %p62 = por %p60, %p61
      %p63 = scmp.ne.s32.totalorder %s49, %s50
      %p64 = scmp.eq.s32.totalorder %s30, 1
      %p65 = por %p63, %p64
      %p67 = scmp.ne.s32.totalorder %s50, %s66
      %p68 = scmp.eq.s32.totalorder %s30, 0
      %p69 = por %p67, %p68
      %s71 = sadd.s32 %s70, 1
      %p74 = scmp.eq.s32.totalorder %s24, 1
      %p75 = scmp.ne.s32.totalorder %s70, %s72
      %p76 = scmp.eq.s32.totalorder %s24, 0
      %p77 = por %p75, %p76
      %p78 = scmp.ne.s32.totalorder %s70, %s72
      %p79 = scmp.eq.s32.totalorder %s29, 1
      %p80 = por %p78, %p79
      %p81 = scmp.ne.s32.totalorder %s72, %s73
      %p82 = scmp.eq.s32.totalorder %s29, 0
      %p83 = por %p81, %p82
      %p84 = scmp.ne.s32.totalorder %s72, %s73
      %p85 = scmp.eq.s32.totalorder %s30, 1
      %p86 = por %p84, %p85
      %p88 = scmp.ne.s32.totalorder %s73, %s87
      %p89 = scmp.eq.s32.totalorder %s30, 0
      %p90 = por %p88, %p89
      %s92 = sadd.s32 %s91, 1
      %p95 = scmp.eq.s32.totalorder %s24, 1
      %p96 = scmp.ne.s32.totalorder %s91, %s93
      %p97 = scmp.eq.s32.totalorder %s24, 0
      %p98 = por %p96, %p97
      %p99 = scmp.ne.s32.totalorder %s91, %s93
      %p100 = scmp.eq.s32.totalorder %s29, 1
      %p101 = por %p99, %p100
      %p102 = scmp.ne.s32.totalorder %s93, %s94
      %p103 = scmp.eq.s32.totalorder %s29, 0
      %p104 = por %p102, %p103
      %p105 = scmp.ne.s32.totalorder %s93, %s94
      %p106 = scmp.eq.s32.totalorder %s30, 1
      %p107 = por %p105, %p106
      %p109 = scmp.ne.s32.totalorder %s94, %s108
      %p110 = scmp.eq.s32.totalorder %s30, 0
      %p111 = por %p109, %p110
      %s113 = sadd.s32 %s112, 1
      %p116 = scmp.eq.s32.totalorder %s24, 1
      %p117 = scmp.ne.s32.totalorder %s112, %s114
      %p118 = scmp.eq.s32.totalorder %s24, 0
      %p119 = por %p117, %p118
      %p120 = scmp.ne.s32.totalorder %s112, %s114
      %p121 = scmp.eq.s32.totalorder %s29, 1
      %p122 = por %p120, %p121
      %p123 = scmp.ne.s32.totalorder %s114, %s115
      %p124 = scmp.eq.s32.totalorder %s29, 0
      %p125 = por %p123, %p124
      %p126 = scmp.ne.s32.totalorder %s114, %s115
      %p127 = scmp.eq.s32.totalorder %s30, 1
      %p128 = por %p126, %p127
      %p130 = scmp.ne.s32.totalorder %s115, %s129
      %p131 = scmp.eq.s32.totalorder %s30, 0
      %p132 = por %p130, %p131
      %s134 = sadd.s32 %s133, 1
      %p137 = scmp.eq.s32.totalorder %s24, 1
      %p138 = scmp.ne.s32.totalorder %s133, %s135
      %p139 = scmp.eq.s32.totalorder %s24, 0
      %p140 = por %p138, %p139
      %p141 = scmp.ne.s32.totalorder %s133, %s135
      %p142 = scmp.eq.s32.totalorder %s29, 1
      %p143 = por %p141, %p142
      %p144 = scmp.ne.s32.totalorder %s135, %s136
      %p145 = scmp.eq.s32.totalorder %s29, 0
      %p146 = por %p144, %p145
      %p147 = scmp.ne.s32.totalorder %s135, %s136
      %p148 = scmp.eq.s32.totalorder %s30, 1
      %p149 = por %p147, %p148
      %p151 = scmp.ne.s32.totalorder %s136, %s150
      %p152 = scmp.eq.s32.totalorder %s30, 0
      %p153 = por %p151, %p152
      %s155 = sadd.s32 %s154, 1
      %p158 = scmp.eq.s32.totalorder %s24, 1
      %p159 = scmp.ne.s32.totalorder %s154, %s156
      %p160 = scmp.eq.s32.totalorder %s24, 0
      %p161 = por %p159, %p160
      %p162 = scmp.ne.s32.totalorder %s154, %s156
      %p163 = scmp.eq.s32.totalorder %s29, 1
      %p164 = por %p162, %p163
      %p165 = scmp.ne.s32.totalorder %s156, %s157
      %p166 = scmp.eq.s32.totalorder %s29, 0
      %p167 = por %p165, %p166
      %p168 = scmp.ne.s32.totalorder %s156, %s157
      %p169 = scmp.eq.s32.totalorder %s30, 1
      %p170 = por %p168, %p169
      %p172 = scmp.ne.s32.totalorder %s157, %s171
      %p173 = scmp.eq.s32.totalorder %s30, 0
      %p174 = por %p172, %p173
      %s176 = sadd.s32 %s175, 1
      %p179 = scmp.eq.s32.totalorder %s24, 1
      %p180 = scmp.ne.s32.totalorder %s175, %s177
      %p181 = scmp.eq.s32.totalorder %s24, 0
      %p182 = por %p180, %p181
      %p183 = scmp.ne.s32.totalorder %s175, %s177
      %p184 = scmp.eq.s32.totalorder %s29, 1
      %p185 = por %p183, %p184
      %p186 = scmp.ne.s32.totalorder %s177, %s178
      %p187 = scmp.eq.s32.totalorder %s29, 0
      %p188 = por %p186, %p187
      %p189 = scmp.ne.s32.totalorder %s177, %s178
      %p190 = scmp.eq.s32.totalorder %s30, 1
      %p191 = por %p189, %p190
      %p193 = scmp.ne.s32.totalorder %s178, %s192
      %p194 = scmp.eq.s32.totalorder %s30, 0
      %p195 = por %p193, %p194
      %s197 = sadd.s32 %s196, 1
      %p200 = scmp.eq.s32.totalorder %s24, 1
      %p201 = scmp.ne.s32.totalorder %s196, %s198
      %p202 = scmp.eq.s32.totalorder %s24, 0
      %p203 = por %p201, %p202
      %p204 = scmp.ne.s32.totalorder %s196, %s198
      %p205 = scmp.eq.s32.totalorder %s29, 1
      %p206 = por %p204, %p205
      %p207 = scmp.ne.s32.totalorder %s198, %s199
      %p208 = scmp.eq.s32.totalorder %s29, 0
      %p209 = por %p207, %p208
      %p210 = scmp.ne.s32.totalorder %s198, %s199
      %p211 = scmp.eq.s32.totalorder %s30, 1
      %p212 = por %p210, %p211
      %p214 = scmp.ne.s32.totalorder %s199, %s213
      %p215 = scmp.eq.s32.totalorder %s30, 0
      %p216 = por %p214, %p215
      %s217 = ssub.s32 %s31, %s43
      %s218 = ssub.s32 %s32, %s39
      %s219 = sor.u32 %s217, %s218
      %p220 = scmp.eq.s32.totalorder %s219, 0
      %s222 = sadd.s32 %s221, 1
      %s223 = scalar_select %p220, %s221, %s222
      %p226 = pneg %p220
      %p227 = scmp.eq.s32.totalorder %s24, 1
      %p228 = por %p226, %p227
      %p229 = scmp.ne.s32.totalorder %s221, %s224
      %p230 = scmp.eq.s32.totalorder %s24, 0
      %p231 = por %p229, %p230
      %p232 = scmp.ne.s32.totalorder %s221, %s224
      %p233 = scmp.eq.s32.totalorder %s29, 1
      %p234 = por %p232, %p233
      %p235 = scmp.ne.s32.totalorder %s224, %s225
      %p236 = scmp.eq.s32.totalorder %s29, 0
      %p237 = por %p235, %p236
      %p238 = scmp.ne.s32.totalorder %s224, %s225
      %p239 = scmp.eq.s32.totalorder %s30, 1
      %p240 = por %p238, %p239
      %p242 = scmp.ne.s32.totalorder %s225, %s241
      %p243 = scmp.eq.s32.totalorder %s30, 0
      %p244 = por %p242, %p243
      %p245 = scmp.le.s32.totalorder 1, %s24
      %p246 = scmp.lt.s32.totalorder %s24, 3
      %p247 = pnand %p245, %p246
      %p248 = pneg %p247
      // Predicated region
      $region9: #{srcnn_forward.1} parent=5 // pred_check
        _
      $region10: #{srcnn_forward.1} parent=5 // pred_check_branch
        %250 = sbr.rel (%p247) target = $region12
      $region11: #{srcnn_forward.1} parent=5 // pred_region
        %s251 = ssub.s32 %s24, 1
        // Predicated region
        $region13: #{srcnn_forward.1} parent=11 // pred_check
          %p252 = pneg %p83
        $region14: #{srcnn_forward.1} parent=11 // pred_check_branch
          %254 = sbr.rel (%p252) target = $region16
        $region15: #{srcnn_forward.1} parent=11 // pred_region
          %s256 = ssub.s32 96, 96
          %257 = vsyncadd [#allocation6], %s256
          %s259 = sshll.u32 [#allocation5], 4
          %s260 = int_to_ptr.vmem [resolvable:$true] %s259
          %262 = dma.hbm_to_vmem [thread:$0]  %s1, 96, %s260, [#allocation6]
        $region16: #{srcnn_forward.1} parent=11 // pred_fallthru
          _
        // Predicated region
        $region17: #{srcnn_forward.1} parent=11 // pred_check
          %p263 = pneg %p104
        $region18: #{srcnn_forward.1} parent=11 // pred_check_branch
          %265 = sbr.rel (%p263) target = $region20
        $region19: #{srcnn_forward.1} parent=11 // pred_region
          %s267 = ssub.s32 1024, 1024
          %268 = vsyncadd [#allocation6], %s267
          %s269 = sshll.u32 [#allocation7], 4
          %s270 = int_to_ptr.vmem [resolvable:$true] %s269
          %275 = dma.hbm_to_vmem [thread:$0]  %s2, 1024, %s270, [#allocation6], 128, 128, 8
        $region20: #{srcnn_forward.1} parent=11 // pred_fallthru
          _
        // Predicated region
        $region21: #{srcnn_forward.1} parent=11 // pred_check
          %p276 = pneg %p125
        $region22: #{srcnn_forward.1} parent=11 // pred_check_branch
          %278 = sbr.rel (%p276) target = $region24
        $region23: #{srcnn_forward.1} parent=11 // pred_region
          %s280 = ssub.s32 1024, 1024
          %281 = vsyncadd [#allocation9], %s280
          %s282 = sshll.u32 [#allocation8], 4
          %s283 = int_to_ptr.vmem [resolvable:$true] %s282
          %288 = dma.hbm_to_vmem [thread:$0]  %s3, 1024, %s283, [#allocation9], 128, 128, 8
        $region24: #{srcnn_forward.1} parent=11 // pred_fallthru
          _
        // Predicated region
        $region25: #{srcnn_forward.1} parent=11 // pred_check
          %p289 = pneg %p146
        $region26: #{srcnn_forward.1} parent=11 // pred_check_branch
          %291 = sbr.rel (%p289) target = $region28
        $region27: #{srcnn_forward.1} parent=11 // pred_region
          %s293 = ssub.s32 256, 256
          %294 = vsyncadd [#allocation9], %s293
          %s295 = sshll.u32 [#allocation10], 4
          %s296 = int_to_ptr.vmem [resolvable:$true] %s295
          %301 = dma.hbm_to_vmem [thread:$0]  %s4, 256, %s296, [#allocation9], 64, 64, 4
        $region28: #{srcnn_forward.1} parent=11 // pred_fallthru
          _
        // Predicated region
        $region29: #{srcnn_forward.1} parent=11 // pred_check
          %p302 = pneg %p167
        $region30: #{srcnn_forward.1} parent=11 // pred_check_branch
          %304 = sbr.rel (%p302) target = $region32
        $region31: #{srcnn_forward.1} parent=11 // pred_region
          %s306 = ssub.s32 512, 512
          %307 = vsyncadd [#allocation12], %s306
          %s308 = sshll.u32 [#allocation11], 4
          %s309 = int_to_ptr.vmem [resolvable:$true] %s308
          %314 = dma.hbm_to_vmem [thread:$0]  %s5, 512, %s309, [#allocation12], 128, 128, 8
        $region32: #{srcnn_forward.1} parent=11 // pred_fallthru
          _
        // Predicated region
        $region33: #{srcnn_forward.1} parent=11 // pred_check
          %p315 = pneg %p188
        $region34: #{srcnn_forward.1} parent=11 // pred_check_branch
          %317 = sbr.rel (%p315) target = $region36
        $region35: #{srcnn_forward.1} parent=11 // pred_region
          %s319 = ssub.s32 448, 448
          %320 = vsyncadd [#allocation12], %s319
          %s321 = sshll.u32 [#allocation13], 4
          %s322 = int_to_ptr.vmem [resolvable:$true] %s321
          %327 = dma.hbm_to_vmem [thread:$0]  %s6, 448, %s322, [#allocation12], 64, 64, 4
        $region36: #{srcnn_forward.1} parent=11 // pred_fallthru
          _
        // Predicated region
        $region37: #{srcnn_forward.1} parent=11 // pred_check
          %p328 = pneg %p209
        $region38: #{srcnn_forward.1} parent=11 // pred_check_branch
          %330 = sbr.rel (%p328) target = $region40
        $region39: #{srcnn_forward.1} parent=11 // pred_region
          %s332 = ssub.s32 32, 32
          %333 = vsyncadd [#allocation15], %s332
          %s335 = sshll.u32 [#allocation14], 4
          %s336 = int_to_ptr.vmem [resolvable:$true] %s335
          %338 = dma.hbm_to_vmem [thread:$0]  %s7, 32, %s336, [#allocation15]
        $region40: #{srcnn_forward.1} parent=11 // pred_fallthru
          _
      $region12: #{srcnn_forward.1} parent=5 // pred_fallthru
        _
      %p339 = scmp.lt.s32.totalorder %s24, 2
      // Predicated region
      $region41: #{srcnn_forward.1} parent=5 // pred_check
        %p340 = pneg %p339
      $region42: #{srcnn_forward.1} parent=5 // pred_check_branch
        %342 = sbr.rel (%p340) target = $region44
      $region43: #{srcnn_forward.1} parent=5 // pred_region
        // Predicated region
        $region45: #{srcnn_forward.1} parent=43 // pred_check
          %p343 = pneg %p56
        $region46: #{srcnn_forward.1} parent=43 // pred_check_branch
          %345 = sbr.rel (%p343) target = $region48
        $region47: #{srcnn_forward.1} parent=43 // pred_region
          %s346 = sand.u32 %s46, 1
          %s347 = scalar_lea.sflag [#allocation3], %s346
          %s348 = sand.u32 %s46, 1
          %s349 = smul.addr %s348, 8
          %s350 = scalar_lea.vmem [#allocation2], %s349
          %s352 = ssub.s32 128, 128
          %353 = vsyncadd %s347, %s352
          %s354 = smul.addr %s31, 8
          %s355 = smul.addr %s354, 16
          %s356 = scalar_lea.hbm %s0, %s355
          %s358 = sshll.u32 %s350, 4
          %s359 = int_to_ptr.vmem [resolvable:$true] %s358
          %361 = dma.hbm_to_vmem [thread:$0]  %s356, 128, %s359, %s347
        $region48: #{srcnn_forward.1} parent=43 // pred_fallthru
          _
      $region44: #{srcnn_forward.1} parent=5 // pred_fallthru
        _
      %p362 = scmp.le.s32.totalorder 1, %s24
      %p363 = scmp.lt.s32.totalorder %s24, 3
      %p364 = pnand %p362, %p363
      %p365 = pneg %p364
      // Predicated region
      $region49: #{srcnn_forward.1} parent=5 // pred_check
        _
      $region50: #{srcnn_forward.1} parent=5 // pred_check_branch
        %367 = sbr.rel (%p364) target = $region52
      $region51: #{srcnn_forward.1} parent=5 // pred_region
        %s368 = ssub.s32 %s24, 1
        %s369 = sand.u32 %s49, 1
        %s370 = scalar_lea.sflag [#allocation3], %s369
        %s371 = sand.u32 %s49, 1
        %s372 = smul.addr %s371, 8
        %s373 = scalar_lea.vmem [#allocation2], %s372
        // Predicated region
        $region53: #{srcnn_forward.1} parent=51 // pred_check
          %p374 = pneg %p62
        $region54: #{srcnn_forward.1} parent=51 // pred_check_branch
          %376 = sbr.rel (%p374) target = $region56
        $region55: #{srcnn_forward.1} parent=51 // pred_region
          %377 = dma.done %s370, 128
        $region56: #{srcnn_forward.1} parent=51 // pred_fallthru
          _
        // Predicated region
        $region57: #{srcnn_forward.1} parent=51 // pred_check
          %p378 = pneg %p83
        $region58: #{srcnn_forward.1} parent=51 // pred_check_branch
          %380 = sbr.rel (%p378) target = $region60
        $region59: #{srcnn_forward.1} parent=51 // pred_region
          %381 = dma.done [#allocation6], 96
        $region60: #{srcnn_forward.1} parent=51 // pred_fallthru
          _
        // Predicated region
        $region61: #{srcnn_forward.1} parent=51 // pred_check
          %p382 = pneg %p104
        $region62: #{srcnn_forward.1} parent=51 // pred_check_branch
          %384 = sbr.rel (%p382) target = $region64
        $region63: #{srcnn_forward.1} parent=51 // pred_region
          %385 = dma.done [#allocation6], 1024
        $region64: #{srcnn_forward.1} parent=51 // pred_fallthru
          _
        // Predicated region
        $region65: #{srcnn_forward.1} parent=51 // pred_check
          %p386 = pneg %p125
        $region66: #{srcnn_forward.1} parent=51 // pred_check_branch
          %388 = sbr.rel (%p386) target = $region68
        $region67: #{srcnn_forward.1} parent=51 // pred_region
          %389 = dma.done [#allocation9], 1024
        $region68: #{srcnn_forward.1} parent=51 // pred_fallthru
          _
        // Predicated region
        $region69: #{srcnn_forward.1} parent=51 // pred_check
          %p390 = pneg %p146
        $region70: #{srcnn_forward.1} parent=51 // pred_check_branch
          %392 = sbr.rel (%p390) target = $region72
        $region71: #{srcnn_forward.1} parent=51 // pred_region
          %393 = dma.done [#allocation9], 256
        $region72: #{srcnn_forward.1} parent=51 // pred_fallthru
          _
        // Predicated region
        $region73: #{srcnn_forward.1} parent=51 // pred_check
          %p394 = pneg %p167
        $region74: #{srcnn_forward.1} parent=51 // pred_check_branch
          %396 = sbr.rel (%p394) target = $region76
        $region75: #{srcnn_forward.1} parent=51 // pred_region
          %397 = dma.done [#allocation12], 512
        $region76: #{srcnn_forward.1} parent=51 // pred_fallthru
          _
        // Predicated region
        $region77: #{srcnn_forward.1} parent=51 // pred_check
          %p398 = pneg %p188
        $region78: #{srcnn_forward.1} parent=51 // pred_check_branch
          %400 = sbr.rel (%p398) target = $region80
        $region79: #{srcnn_forward.1} parent=51 // pred_region
          %401 = dma.done [#allocation12], 448
        $region80: #{srcnn_forward.1} parent=51 // pred_fallthru
          _
        // Predicated region
        $region81: #{srcnn_forward.1} parent=51 // pred_check
          %p402 = pneg %p209
        $region82: #{srcnn_forward.1} parent=51 // pred_check_branch
          %404 = sbr.rel (%p402) target = $region84
        $region83: #{srcnn_forward.1} parent=51 // pred_region
          %405 = dma.done [#allocation15], 32
        $region84: #{srcnn_forward.1} parent=51 // pred_fallthru
          _
        %s406 = sand.u32 %s49, 1
        %s407 = scalar_lea.sflag [#allocation3], %s406
        %s408 = sand.u32 %s49, 1
        %s409 = smul.addr %s408, 8
        %s410 = scalar_lea.vmem [#allocation2], %s409
        %p411 = pneg %p62
        %p412 = pneg %p59
        %p413 = pneg %p83
        %p414 = pneg %p80
        %p415 = pneg %p104
        %p416 = pneg %p101
        %p417 = pneg %p125
        %p418 = pneg %p122
        %p419 = pneg %p146
        %p420 = pneg %p143
        %p421 = pneg %p167
        %p422 = pneg %p164
        %p423 = pneg %p188
        %p424 = pneg %p185
        %p425 = pneg %p209
        %p426 = pneg %p206
        %p427 = pneg %p237
        %p428 = pneg %p234
        %s429 = sand.u32 %s224, 1
        %s430 = scalar_lea.sflag [#allocation4], %s429
        %s431 = sand.u32 %s224, 1
        %s432 = smul.addr %s431, 8
        %s433 = scalar_lea.vmem [#allocation16], %s432
        %s434 = smul.u32 4, %s34
        %s436 = smul.u32 %s34, 16
        %s437 = smul.u32 %s34, 512
        %s438 = sshra.s32 %s437, 7
        %s439 = sand.u32 %s437, 127
        %s440 = scalar_lea.vmem %s373, %s438 [#allocation2]
        %v441 = vld [vmem:[%s440] sm:$0xff]
        %v443 = vcombine.high %v441, %v441
        %v445 = vunpack.c.l.s4 1966171168
        %v446 = vunpack.c.0.s8 %v445
        %v447 = vlaneseq
        %v448 = vshrl.u32 %v447, 7
        %v449 = vsub.s32 %v446, %v448
        %v450 = vrot.slane %v441, %v449
        %v452 = vunpack.c.l.s4 1966171168
        %v453 = vunpack.c.0.s8 %v452
        %v454 = vlaneseq
        %v455 = vshrl.u32 %v454, 7
        %v456 = vsub.s32 %v453, %v455
        %v457 = vrot.slane %v443, %v456
        %v458 = vcombine.high %v450, %v450
        %v459 = vcombine.high %v457, %v457
        %v461 = vunpack.c.l.s4 1966171168
        %v462 = vunpack.c.0.s8 %v461
        %v463 = vlaneseq
        %v464 = vshrl.u32 %v463, 7
        %v465 = vsub.s32 %v462, %v464
        %v466 = vrot.slane %v450, %v465
        %v468 = vunpack.c.l.s4 1966171168
        %v469 = vunpack.c.0.s8 %v468
        %v470 = vlaneseq
        %v471 = vshrl.u32 %v470, 7
        %v472 = vsub.s32 %v469, %v471
        %v473 = vrot.slane %v457, %v472
        %v475 = vunpack.c.l.s4 1966171168
        %v476 = vunpack.c.0.s8 %v475
        %v477 = vlaneseq
        %v478 = vshrl.u32 %v477, 7
        %v479 = vsub.s32 %v476, %v478
        %v480 = vrot.slane %v458, %v479
        %v482 = vunpack.c.l.s4 1966171168
        %v483 = vunpack.c.0.s8 %v482
        %v484 = vlaneseq
        %v485 = vshrl.u32 %v484, 7
        %v486 = vsub.s32 %v483, %v485
        %v487 = vrot.slane %v459, %v486
        %v488 = vcombine.high %v466, %v466
        %v489 = vcombine.high %v480, %v480
        %v490 = vcombine.low %v441, %v441
        %v492 = vunpack.c.l.s4 1966171168
        %v493 = vunpack.c.0.s8 %v492
        %v494 = vlaneseq
        %v495 = vshrl.u32 %v494, 7
        %v496 = vsub.s32 %v493, %v495
        %v497 = vrot.slane %v490, %v496
        %v498 = vcombine.high %v497, %v497
        %v500 = vunpack.c.l.s4 1966171168
        %v501 = vunpack.c.0.s8 %v500
        %v502 = vlaneseq
        %v503 = vshrl.u32 %v502, 7
        %v504 = vsub.s32 %v501, %v503
        %v505 = vrot.slane %v497, %v504
        %v507 = vunpack.c.l.s4 1966171168
        %v508 = vunpack.c.0.s8 %v507
        %v509 = vlaneseq
        %v510 = vshrl.u32 %v509, 7
        %v511 = vsub.s32 %v508, %v510
        %v512 = vrot.slane %v498, %v511
        %v513 = vcombine.high %v505, %v505
        %v514 = vcombine.high %v512, %v512
        %515 = vrot.lane.b32.xlu0 %v505, 127
        %v516 = vpop.permute.xlu0 %515
        %517 = vrot.lane.b32.xlu0 %v512, 127
        %v518 = vpop.permute.xlu0 %517
        %519 = vrot.lane.b32.xlu0 %v513, 127
        %v520 = vpop.permute.xlu0 %519
        %521 = vrot.lane.b32.xlu0 %v514, 127
        %v522 = vpop.permute.xlu0 %521
        %523 = vrot.lane.b32.xlu0 %v466, 127
        %v524 = vpop.permute.xlu0 %523
        %525 = vrot.lane.b32.xlu0 %v480, 127
        %v526 = vpop.permute.xlu0 %525
        %vm527 = vcmask 1039360
        %v528 = vsel %vm527, %v516, %v518
        %v529 = vsel %vm527, %v518, %v520
        %v530 = vsel %vm527, %v520, %v522
        %v531 = vsel %vm527, %v522, %v524
        %v532 = vsel %vm527, %v524, %v526
        %v533 = vcombine.low %v450, %v450
        %v534 = vcombine.low %v457, %v457
        %v536 = vunpack.c.l.s4 1966171168
        %v537 = vunpack.c.0.s8 %v536
        %v538 = vlaneseq
        %v539 = vshrl.u32 %v538, 7
        %v540 = vsub.s32 %v537, %v539
        %v541 = vrot.slane %v533, %v540
        %v543 = vunpack.c.l.s4 1966171168
        %v544 = vunpack.c.0.s8 %v543
        %v545 = vlaneseq
        %v546 = vshrl.u32 %v545, 7
        %v547 = vsub.s32 %v544, %v546
        %v548 = vrot.slane %v534, %v547
        %v549 = vcombine.high %v541, %v541
        %550 = vrot.lane.b32.xlu0 %v541, 126
        %v551 = vpop.permute.xlu0 %550
        %552 = vrot.lane.b32.xlu0 %v466, 126
        %v553 = vpop.permute.xlu0 %552
        %554 = vrot.lane.b32.xlu0 %v549, 126
        %v555 = vpop.permute.xlu0 %554
        %556 = vrot.lane.b32.xlu0 %v488, 126
        %v557 = vpop.permute.xlu0 %556
        %558 = vrot.lane.b32.xlu0 %v548, 126
        %v559 = vpop.permute.xlu0 %558
        %560 = vrot.lane.b32.xlu0 %v473, 126
        %v561 = vpop.permute.xlu0 %560
        %vm562 = vcmask 1031168
        %v563 = vsel %vm562, %v551, %v553
        %v564 = vsel %vm562, %v553, %v555
        %v565 = vsel %vm562, %v555, %v557
        %v566 = vsel %vm562, %v557, %v559
        %v567 = vsel %vm562, %v559, %v561
        %v568 = vcombine.low %v497, %v497
        %v570 = vunpack.c.l.s4 1966171168
        %v571 = vunpack.c.0.s8 %v570
        %v572 = vlaneseq
        %v573 = vshrl.u32 %v572, 7
        %v574 = vsub.s32 %v571, %v573
        %v575 = vrot.slane %v568, %v574
        %v576 = vcombine.high %v575, %v575
        %577 = vrot.lane.b32.xlu0 %v575, 125
        %v578 = vpop.permute.xlu0 %577
        %579 = vrot.lane.b32.xlu0 %v505, 125
        %v580 = vpop.permute.xlu0 %579
        %581 = vrot.lane.b32.xlu0 %v576, 125
        %v582 = vpop.permute.xlu0 %581
        %583 = vrot.lane.b32.xlu0 %v513, 125
        %v584 = vpop.permute.xlu0 %583
        %585 = vrot.lane.b32.xlu0 %v541, 125
        %v586 = vpop.permute.xlu0 %585
        %587 = vrot.lane.b32.xlu0 %v466, 125
        %v588 = vpop.permute.xlu0 %587
        %vm589 = vcmask 1022976
        %v590 = vsel %vm589, %v578, %v580
        %v591 = vsel %vm589, %v580, %v582
        %v592 = vsel %vm589, %v582, %v584
        %v593 = vsel %vm589, %v584, %v586
        %v594 = vsel %vm589, %v586, %v588
        %v595 = vcombine.low %v466, %v466
        %v596 = vcombine.low %v473, %v473
        %v597 = vcombine.low %v480, %v480
        %v598 = vcombine.low %v487, %v487
        %599 = vrot.lane.b32.xlu0 %v595, 124
        %v600 = vpop.permute.xlu0 %599
        %601 = vrot.lane.b32.xlu0 %v597, 124
        %v602 = vpop.permute.xlu0 %601
        %603 = vrot.lane.b32.xlu0 %v466, 124
        %v604 = vpop.permute.xlu0 %603
        %605 = vrot.lane.b32.xlu0 %v480, 124
        %v606 = vpop.permute.xlu0 %605
        %607 = vrot.lane.b32.xlu0 %v596, 124
        %v608 = vpop.permute.xlu0 %607
        %609 = vrot.lane.b32.xlu0 %v598, 124
        %v610 = vpop.permute.xlu0 %609
        %vm611 = vcmask 1014784
        %v612 = vsel %vm611, %v600, %v602
        %v613 = vsel %vm611, %v602, %v604
        %v614 = vsel %vm611, %v604, %v606
        %v615 = vsel %vm611, %v606, %v608
        %v616 = vsel %vm611, %v608, %v610
        %v617 = vcombine.low %v505, %v505
        %v618 = vcombine.low %v512, %v512
        %619 = vrot.lane.b32.xlu0 %v617, 123
        %v620 = vpop.permute.xlu0 %619
        %621 = vrot.lane.b32.xlu0 %v618, 123
        %v622 = vpop.permute.xlu0 %621
        %623 = vrot.lane.b32.xlu0 %v505, 123
        %v624 = vpop.permute.xlu0 %623
        %625 = vrot.lane.b32.xlu0 %v512, 123
        %v626 = vpop.permute.xlu0 %625
        %627 = vrot.lane.b32.xlu0 %v595, 123
        %v628 = vpop.permute.xlu0 %627
        %629 = vrot.lane.b32.xlu0 %v597, 123
        %v630 = vpop.permute.xlu0 %629
        %vm631 = vcmask 1006592
        %v632 = vsel %vm631, %v620, %v622
        %v633 = vsel %vm631, %v622, %v624
        %v634 = vsel %vm631, %v624, %v626
        %v635 = vsel %vm631, %v626, %v628
        %v636 = vsel %vm631, %v628, %v630
        %v637 = vcombine.low %v541, %v541
        %v638 = vcombine.low %v548, %v548
        %639 = vrot.lane.b32.xlu0 %v637, 122
        %v640 = vpop.permute.xlu0 %639
        %641 = vrot.lane.b32.xlu0 %v595, 122
        %v642 = vpop.permute.xlu0 %641
        %643 = vrot.lane.b32.xlu0 %v541, 122
        %v644 = vpop.permute.xlu0 %643
        %645 = vrot.lane.b32.xlu0 %v466, 122
        %v646 = vpop.permute.xlu0 %645
        %647 = vrot.lane.b32.xlu0 %v638, 122
        %v648 = vpop.permute.xlu0 %647
        %649 = vrot.lane.b32.xlu0 %v596, 122
        %v650 = vpop.permute.xlu0 %649
        %vm651 = vcmask 998400
        %v652 = vsel %vm651, %v640, %v642
        %v653 = vsel %vm651, %v642, %v644
        %v654 = vsel %vm651, %v644, %v646
        %v655 = vsel %vm651, %v646, %v648
        %v656 = vsel %vm651, %v648, %v650
        %v657 = vcombine.low %v575, %v575
        %658 = vrot.lane.b32.xlu0 %v657, 121
        %v659 = vpop.permute.xlu0 %658
        %660 = vrot.lane.b32.xlu0 %v617, 121
        %v661 = vpop.permute.xlu0 %660
        %662 = vrot.lane.b32.xlu0 %v575, 121
        %v663 = vpop.permute.xlu0 %662
        %664 = vrot.lane.b32.xlu0 %v505, 121
        %v665 = vpop.permute.xlu0 %664
        %666 = vrot.lane.b32.xlu0 %v637, 121
        %v667 = vpop.permute.xlu0 %666
        %668 = vrot.lane.b32.xlu0 %v595, 121
        %v669 = vpop.permute.xlu0 %668
        %vm670 = vcmask 990208
        %v671 = vsel %vm670, %v659, %v661
        %v672 = vsel %vm670, %v661, %v663
        %v673 = vsel %vm670, %v663, %v665
        %v674 = vsel %vm670, %v665, %v667
        %v675 = vsel %vm670, %v667, %v669
        %676 = vrot.lane.b32.xlu0 %v466, 120
        %v677 = vpop.permute.xlu0 %676
        %678 = vrot.lane.b32.xlu0 %v480, 120
        %v679 = vpop.permute.xlu0 %678
        %680 = vrot.lane.b32.xlu0 %v488, 120
        %v681 = vpop.permute.xlu0 %680
        %682 = vrot.lane.b32.xlu0 %v489, 120
        %v683 = vpop.permute.xlu0 %682
        %684 = vrot.lane.b32.xlu0 %v473, 120
        %v685 = vpop.permute.xlu0 %684
        %686 = vrot.lane.b32.xlu0 %v487, 120
        %v687 = vpop.permute.xlu0 %686
        %vm688 = vcmask 982016
        %v689 = vsel %vm688, %v677, %v679
        %v690 = vsel %vm688, %v679, %v681
        %v691 = vsel %vm688, %v681, %v683
        %v692 = vsel %vm688, %v683, %v685
        %v693 = vsel %vm688, %v685, %v687
        %vm694 = vcmask 1040384
        %v697 = vsel %vm694, %v466, %v528
        %v700 = vsel %vm694, %v480, %v529
        %v703 = vsel %vm694, %v488, %v530
        %v706 = vsel %vm694, %v489, %v531
        %v709 = vsel %vm694, %v473, %v532
        %v712 = vsel %vm694, %v487, %v526
        %vm713 = vcmask 1041408
        %v715 = vsel %vm713, %v697, %v563
        %v717 = vsel %vm713, %v700, %v564
        %v719 = vsel %vm713, %v703, %v565
        %v721 = vsel %vm713, %v706, %v566
        %v723 = vsel %vm713, %v709, %v567
        %v725 = vsel %vm713, %v712, %v561
        %vm726 = vcmask 1042432
        %v728 = vsel %vm726, %v715, %v590
        %v730 = vsel %vm726, %v717, %v591
        %v732 = vsel %vm726, %v719, %v592
        %v734 = vsel %vm726, %v721, %v593
        %v736 = vsel %vm726, %v723, %v594
        %v738 = vsel %vm726, %v725, %v588
        %vm739 = vcmask 1043456
        %v741 = vsel %vm739, %v728, %v612
        %v743 = vsel %vm739, %v730, %v613
        %v745 = vsel %vm739, %v732, %v614
        %v747 = vsel %vm739, %v734, %v615
        %v749 = vsel %vm739, %v736, %v616
        %v751 = vsel %vm739, %v738, %v610
        %vm752 = vcmask 1044480
        %v754 = vsel %vm752, %v741, %v632
        %v756 = vsel %vm752, %v743, %v633
        %v758 = vsel %vm752, %v745, %v634
        %v760 = vsel %vm752, %v747, %v635
        %v762 = vsel %vm752, %v749, %v636
        %v764 = vsel %vm752, %v751, %v630
        %vm765 = vcmask 1045504
        %v767 = vsel %vm765, %v754, %v652
        %v769 = vsel %vm765, %v756, %v653
        %v771 = vsel %vm765, %v758, %v654
        %v773 = vsel %vm765, %v760, %v655
        %v775 = vsel %vm765, %v762, %v656
        %v777 = vsel %vm765, %v764, %v650
        %vm778 = vcmask 1046528
        %v780 = vsel %vm778, %v767, %v671
        %v783 = vsel %vm778, %v769, %v672
        %v786 = vsel %vm778, %v771, %v673
        %v789 = vsel %vm778, %v773, %v674
        %v792 = vsel %vm778, %v775, %v675
        %v795 = vsel %vm778, %v777, %v669
        %797 = vrot.lane.b32.xlu0 %v488, 127
        %v798 = vpop.permute.xlu0 %797
        %v799 = vsel %vm527, %v526, %v798
        %v800 = vcombine.high %v548, %v548
        %801 = vrot.lane.b32.xlu0 %v800, 126
        %v802 = vpop.permute.xlu0 %801
        %v803 = vsel %vm562, %v561, %v802
        %804 = vrot.lane.b32.xlu0 %v549, 125
        %v805 = vpop.permute.xlu0 %804
        %v806 = vsel %vm589, %v588, %v805
        %807 = vrot.lane.b32.xlu0 %v473, 124
        %v808 = vpop.permute.xlu0 %807
        %v809 = vsel %vm611, %v610, %v808
        %810 = vrot.lane.b32.xlu0 %v466, 123
        %v811 = vpop.permute.xlu0 %810
        %v812 = vsel %vm631, %v630, %v811
        %813 = vrot.lane.b32.xlu0 %v548, 122
        %v814 = vpop.permute.xlu0 %813
        %v815 = vsel %vm651, %v650, %v814
        %816 = vrot.lane.b32.xlu0 %v541, 121
        %v817 = vpop.permute.xlu0 %816
        %v818 = vsel %vm670, %v669, %v817
        %v819 = vcombine.high %v473, %v473
        %820 = vrot.lane.b32.xlu0 %v819, 120
        %v821 = vpop.permute.xlu0 %820
        %v822 = vsel %vm688, %v687, %v821
        %v824 = vsel %vm694, %v487, %v799
        %v826 = vsel %vm713, %v824, %v803
        %v828 = vsel %vm726, %v826, %v806
        %v830 = vsel %vm739, %v828, %v809
        %v832 = vsel %vm752, %v830, %v812
        %v834 = vsel %vm765, %v832, %v815
        %v836 = vsel %vm778, %v834, %v818
        %v839 = vsel %vm694, %v819, %v798
        %v841 = vsel %vm713, %v839, %v802
        %v843 = vsel %vm726, %v841, %v805
        %v845 = vsel %vm739, %v843, %v808
        %v847 = vsel %vm752, %v845, %v811
        %v849 = vsel %vm765, %v847, %v814
        %v851 = vsel %vm778, %v849, %v817
        %852 = vrot.lane.b32.xlu0 %v480, 96
        %v853 = vpop.permute.xlu0 %852
        %854 = vrot.lane.b32.xlu0 %v488, 96
        %v855 = vpop.permute.xlu0 %854
        %856 = vrot.lane.b32.xlu0 %v489, 96
        %v857 = vpop.permute.xlu0 %856
        %858 = vrot.lane.b32.xlu0 %v473, 96
        %v859 = vpop.permute.xlu0 %858
        %860 = vrot.lane.b32.xlu0 %v487, 96
        %v861 = vpop.permute.xlu0 %860
        %862 = vrot.lane.b32.xlu0 %v819, 96
        %v863 = vpop.permute.xlu0 %862
        %vm864 = vcmask 785408
        %v865 = vsel %vm864, %v853, %v855
        %v866 = vsel %vm864, %v855, %v857
        %v867 = vsel %vm864, %v857, %v859
        %v868 = vsel %vm864, %v859, %v861
        %v869 = vsel %vm864, %v861, %v863
        %870 = vrot.lane.b32.xlu0 %v512, 95
        %v871 = vpop.permute.xlu0 %870
        %872 = vrot.lane.b32.xlu0 %v513, 95
        %v873 = vpop.permute.xlu0 %872
        %874 = vrot.lane.b32.xlu0 %v514, 95
        %v875 = vpop.permute.xlu0 %874
        %876 = vrot.lane.b32.xlu0 %v466, 95
        %v877 = vpop.permute.xlu0 %876
        %878 = vrot.lane.b32.xlu0 %v480, 95
        %v879 = vpop.permute.xlu0 %878
        %880 = vrot.lane.b32.xlu0 %v488, 95
        %v881 = vpop.permute.xlu0 %880
        %vm882 = vcmask 777216
        %v883 = vsel %vm882, %v871, %v873
        %v884 = vsel %vm882, %v873, %v875
        %v885 = vsel %vm882, %v875, %v877
        %v886 = vsel %vm882, %v877, %v879
        %v887 = vsel %vm882, %v879, %v881
        %888 = vrot.lane.b32.xlu0 %v466, 94
        %v889 = vpop.permute.xlu0 %888
        %890 = vrot.lane.b32.xlu0 %v549, 94
        %v891 = vpop.permute.xlu0 %890
        %892 = vrot.lane.b32.xlu0 %v488, 94
        %v893 = vpop.permute.xlu0 %892
        %894 = vrot.lane.b32.xlu0 %v548, 94
        %v895 = vpop.permute.xlu0 %894
        %896 = vrot.lane.b32.xlu0 %v473, 94
        %v897 = vpop.permute.xlu0 %896
        %898 = vrot.lane.b32.xlu0 %v800, 94
        %v899 = vpop.permute.xlu0 %898
        %vm900 = vcmask 769024
        %v901 = vsel %vm900, %v889, %v891
        %v902 = vsel %vm900, %v891, %v893
        %v903 = vsel %vm900, %v893, %v895
        %v904 = vsel %vm900, %v895, %v897
        %v905 = vsel %vm900, %v897, %v899
        %906 = vrot.lane.b32.xlu0 %v505, 93
        %v907 = vpop.permute.xlu0 %906
        %908 = vrot.lane.b32.xlu0 %v576, 93
        %v909 = vpop.permute.xlu0 %908
        %910 = vrot.lane.b32.xlu0 %v513, 93
        %v911 = vpop.permute.xlu0 %910
        %912 = vrot.lane.b32.xlu0 %v541, 93
        %v913 = vpop.permute.xlu0 %912
        %914 = vrot.lane.b32.xlu0 %v466, 93
        %v915 = vpop.permute.xlu0 %914
        %916 = vrot.lane.b32.xlu0 %v549, 93
        %v917 = vpop.permute.xlu0 %916
        %vm918 = vcmask 760832
        %v919 = vsel %vm918, %v907, %v909
        %v920 = vsel %vm918, %v909, %v911
        %v921 = vsel %vm918, %v911, %v913
        %v922 = vsel %vm918, %v913, %v915
        %v923 = vsel %vm918, %v915, %v917
        %924 = vrot.lane.b32.xlu0 %v597, 92
        %v925 = vpop.permute.xlu0 %924
        %926 = vrot.lane.b32.xlu0 %v466, 92
        %v927 = vpop.permute.xlu0 %926
        %928 = vrot.lane.b32.xlu0 %v480, 92
        %v929 = vpop.permute.xlu0 %928
        %930 = vrot.lane.b32.xlu0 %v596, 92
        %v931 = vpop.permute.xlu0 %930
        %932 = vrot.lane.b32.xlu0 %v598, 92
        %v933 = vpop.permute.xlu0 %932
        %934 = vrot.lane.b32.xlu0 %v473, 92
        %v935 = vpop.permute.xlu0 %934
        %vm936 = vcmask 752640
        %v937 = vsel %vm936, %v925, %v927
        %v938 = vsel %vm936, %v927, %v929
        %v939 = vsel %vm936, %v929, %v931
        %v940 = vsel %vm936, %v931, %v933
        %v941 = vsel %vm936, %v933, %v935
        %942 = vrot.lane.b32.xlu0 %v618, 91
        %v943 = vpop.permute.xlu0 %942
        %944 = vrot.lane.b32.xlu0 %v505, 91
        %v945 = vpop.permute.xlu0 %944
        %946 = vrot.lane.b32.xlu0 %v512, 91
        %v947 = vpop.permute.xlu0 %946
        %948 = vrot.lane.b32.xlu0 %v595, 91
        %v949 = vpop.permute.xlu0 %948
        %950 = vrot.lane.b32.xlu0 %v597, 91
        %v951 = vpop.permute.xlu0 %950
        %952 = vrot.lane.b32.xlu0 %v466, 91
        %v953 = vpop.permute.xlu0 %952
        %vm954 = vcmask 744448
        %v955 = vsel %vm954, %v943, %v945
        %v956 = vsel %vm954, %v945, %v947
        %v957 = vsel %vm954, %v947, %v949
        %v958 = vsel %vm954, %v949, %v951
        %v959 = vsel %vm954, %v951, %v953
        %960 = vrot.lane.b32.xlu0 %v595, 90
        %v961 = vpop.permute.xlu0 %960
        %962 = vrot.lane.b32.xlu0 %v541, 90
        %v963 = vpop.permute.xlu0 %962
        %964 = vrot.lane.b32.xlu0 %v466, 90
        %v965 = vpop.permute.xlu0 %964
        %966 = vrot.lane.b32.xlu0 %v638, 90
        %v967 = vpop.permute.xlu0 %966
        %968 = vrot.lane.b32.xlu0 %v596, 90
        %v969 = vpop.permute.xlu0 %968
        %970 = vrot.lane.b32.xlu0 %v548, 90
        %v971 = vpop.permute.xlu0 %970
        %vm972 = vcmask 736256
        %v973 = vsel %vm972, %v961, %v963
        %v974 = vsel %vm972, %v963, %v965
        %v975 = vsel %vm972, %v965, %v967
        %v976 = vsel %vm972, %v967, %v969
        %v977 = vsel %vm972, %v969, %v971
        %978 = vrot.lane.b32.xlu0 %v617, 89
        %v979 = vpop.permute.xlu0 %978
        %980 = vrot.lane.b32.xlu0 %v575, 89
        %v981 = vpop.permute.xlu0 %980
        %982 = vrot.lane.b32.xlu0 %v505, 89
        %v983 = vpop.permute.xlu0 %982
        %984 = vrot.lane.b32.xlu0 %v637, 89
        %v985 = vpop.permute.xlu0 %984
        %986 = vrot.lane.b32.xlu0 %v595, 89
        %v987 = vpop.permute.xlu0 %986
        %988 = vrot.lane.b32.xlu0 %v541, 89
        %v989 = vpop.permute.xlu0 %988
        %vm990 = vcmask 728064
        %v991 = vsel %vm990, %v979, %v981
        %v992 = vsel %vm990, %v981, %v983
        %v993 = vsel %vm990, %v983, %v985
        %v994 = vsel %vm990, %v985, %v987
        %v995 = vsel %vm990, %v987, %v989
        %996 = vrot.lane.b32.xlu0 %v480, 88
        %v997 = vpop.permute.xlu0 %996
        %998 = vrot.lane.b32.xlu0 %v488, 88
        %v999 = vpop.permute.xlu0 %998
        %1000 = vrot.lane.b32.xlu0 %v489, 88
        %v1001 = vpop.permute.xlu0 %1000
        %1002 = vrot.lane.b32.xlu0 %v473, 88
        %v1003 = vpop.permute.xlu0 %1002
        %1004 = vrot.lane.b32.xlu0 %v487, 88
        %v1005 = vpop.permute.xlu0 %1004
        %1006 = vrot.lane.b32.xlu0 %v819, 88
        %v1007 = vpop.permute.xlu0 %1006
        %vm1008 = vcmask 719872
        %v1009 = vsel %vm1008, %v997, %v999
        %v1010 = vsel %vm1008, %v999, %v1001
        %v1011 = vsel %vm1008, %v1001, %v1003
        %v1012 = vsel %vm1008, %v1003, %v1005
        %v1013 = vsel %vm1008, %v1005, %v1007
        %v1016 = vsel %vm694, %v865, %v883
        %v1019 = vsel %vm694, %v866, %v884
        %v1022 = vsel %vm694, %v867, %v885
        %v1025 = vsel %vm694, %v868, %v886
        %v1028 = vsel %vm694, %v869, %v887
        %v1031 = vsel %vm694, %v863, %v881
        %v1033 = vsel %vm713, %v1016, %v901
        %v1035 = vsel %vm713, %v1019, %v902
        %v1037 = vsel %vm713, %v1022, %v903
        %v1039 = vsel %vm713, %v1025, %v904
        %v1041 = vsel %vm713, %v1028, %v905
        %v1043 = vsel %vm713, %v1031, %v899
        %v1045 = vsel %vm726, %v1033, %v919
        %v1047 = vsel %vm726, %v1035, %v920
        %v1049 = vsel %vm726, %v1037, %v921
        %v1051 = vsel %vm726, %v1039, %v922
        %v1053 = vsel %vm726, %v1041, %v923
        %v1055 = vsel %vm726, %v1043, %v917
        %v1057 = vsel %vm739, %v1045, %v937
        %v1059 = vsel %vm739, %v1047, %v938
        %v1061 = vsel %vm739, %v1049, %v939
        %v1063 = vsel %vm739, %v1051, %v940
        %v1065 = vsel %vm739, %v1053, %v941
        %v1067 = vsel %vm739, %v1055, %v935
        %v1069 = vsel %vm752, %v1057, %v955
        %v1071 = vsel %vm752, %v1059, %v956
        %v1073 = vsel %vm752, %v1061, %v957
        %v1075 = vsel %vm752, %v1063, %v958
        %v1077 = vsel %vm752, %v1065, %v959
        %v1079 = vsel %vm752, %v1067, %v953
        %v1081 = vsel %vm765, %v1069, %v973
        %v1083 = vsel %vm765, %v1071, %v974
        %v1085 = vsel %vm765, %v1073, %v975
        %v1087 = vsel %vm765, %v1075, %v976
        %v1089 = vsel %vm765, %v1077, %v977
        %v1091 = vsel %vm765, %v1079, %v971
        %v1093 = vsel %vm778, %v1081, %v991
        %v1095 = vsel %vm778, %v1083, %v992
        %v1097 = vsel %vm778, %v1085, %v993
        %v1099 = vsel %vm778, %v1087, %v994
        %v1101 = vsel %vm778, %v1089, %v995
        %v1103 = vsel %vm778, %v1091, %v989
        %1104 = vrot.lane.b32.xlu0 %v480, 64
        %v1105 = vpop.permute.xlu0 %1104
        %1106 = vrot.lane.b32.xlu0 %v488, 64
        %v1107 = vpop.permute.xlu0 %1106
        %1108 = vrot.lane.b32.xlu0 %v489, 64
        %v1109 = vpop.permute.xlu0 %1108
        %1110 = vrot.lane.b32.xlu0 %v473, 64
        %v1111 = vpop.permute.xlu0 %1110
        %1112 = vrot.lane.b32.xlu0 %v487, 64
        %v1113 = vpop.permute.xlu0 %1112
        %1114 = vrot.lane.b32.xlu0 %v819, 64
        %v1115 = vpop.permute.xlu0 %1114
        %vm1116 = vcmask 523264
        %v1117 = vsel %vm1116, %v1105, %v1107
        %v1118 = vsel %vm1116, %v1107, %v1109
        %v1119 = vsel %vm1116, %v1109, %v1111
        %v1120 = vsel %vm1116, %v1111, %v1113
        %v1121 = vsel %vm1116, %v1113, %v1115
        %1122 = vrot.lane.b32.xlu0 %v512, 63
        %v1123 = vpop.permute.xlu0 %1122
        %1124 = vrot.lane.b32.xlu0 %v513, 63
        %v1125 = vpop.permute.xlu0 %1124
        %1126 = vrot.lane.b32.xlu0 %v514, 63
        %v1127 = vpop.permute.xlu0 %1126
        %1128 = vrot.lane.b32.xlu0 %v466, 63
        %v1129 = vpop.permute.xlu0 %1128
        %1130 = vrot.lane.b32.xlu0 %v480, 63
        %v1131 = vpop.permute.xlu0 %1130
        %1132 = vrot.lane.b32.xlu0 %v488, 63
        %v1133 = vpop.permute.xlu0 %1132
        %vm1134 = vcmask 515072
        %v1135 = vsel %vm1134, %v1123, %v1125
        %v1136 = vsel %vm1134, %v1125, %v1127
        %v1137 = vsel %vm1134, %v1127, %v1129
        %v1138 = vsel %vm1134, %v1129, %v1131
        %v1139 = vsel %vm1134, %v1131, %v1133
        %1140 = vrot.lane.b32.xlu0 %v466, 62
        %v1141 = vpop.permute.xlu0 %1140
        %1142 = vrot.lane.b32.xlu0 %v549, 62
        %v1143 = vpop.permute.xlu0 %1142
        %1144 = vrot.lane.b32.xlu0 %v488, 62
        %v1145 = vpop.permute.xlu0 %1144
        %1146 = vrot.lane.b32.xlu0 %v548, 62
        %v1147 = vpop.permute.xlu0 %1146
        %1148 = vrot.lane.b32.xlu0 %v473, 62
        %v1149 = vpop.permute.xlu0 %1148
        %1150 = vrot.lane.b32.xlu0 %v800, 62
        %v1151 = vpop.permute.xlu0 %1150
        %vm1152 = vcmask 506880
        %v1153 = vsel %vm1152, %v1141, %v1143
        %v1154 = vsel %vm1152, %v1143, %v1145
        %v1155 = vsel %vm1152, %v1145, %v1147
        %v1156 = vsel %vm1152, %v1147, %v1149
        %v1157 = vsel %vm1152, %v1149, %v1151
        %1158 = vrot.lane.b32.xlu0 %v505, 61
        %v1159 = vpop.permute.xlu0 %1158
        %1160 = vrot.lane.b32.xlu0 %v576, 61
        %v1161 = vpop.permute.xlu0 %1160
        %1162 = vrot.lane.b32.xlu0 %v513, 61
        %v1163 = vpop.permute.xlu0 %1162
        %1164 = vrot.lane.b32.xlu0 %v541, 61
        %v1165 = vpop.permute.xlu0 %1164
        %1166 = vrot.lane.b32.xlu0 %v466, 61
        %v1167 = vpop.permute.xlu0 %1166
        %1168 = vrot.lane.b32.xlu0 %v549, 61
        %v1169 = vpop.permute.xlu0 %1168
        %vm1170 = vcmask 498688
        %v1171 = vsel %vm1170, %v1159, %v1161
        %v1172 = vsel %vm1170, %v1161, %v1163
        %v1173 = vsel %vm1170, %v1163, %v1165
        %v1174 = vsel %vm1170, %v1165, %v1167
        %v1175 = vsel %vm1170, %v1167, %v1169
        %1176 = vrot.lane.b32.xlu0 %v597, 60
        %v1177 = vpop.permute.xlu0 %1176
        %1178 = vrot.lane.b32.xlu0 %v466, 60
        %v1179 = vpop.permute.xlu0 %1178
        %1180 = vrot.lane.b32.xlu0 %v480, 60
        %v1181 = vpop.permute.xlu0 %1180
        %1182 = vrot.lane.b32.xlu0 %v596, 60
        %v1183 = vpop.permute.xlu0 %1182
        %1184 = vrot.lane.b32.xlu0 %v598, 60
        %v1185 = vpop.permute.xlu0 %1184
        %1186 = vrot.lane.b32.xlu0 %v473, 60
        %v1187 = vpop.permute.xlu0 %1186
        %vm1188 = vcmask 490496
        %v1189 = vsel %vm1188, %v1177, %v1179
        %v1190 = vsel %vm1188, %v1179, %v1181
        %v1191 = vsel %vm1188, %v1181, %v1183
        %v1192 = vsel %vm1188, %v1183, %v1185
        %v1193 = vsel %vm1188, %v1185, %v1187
        %1194 = vrot.lane.b32.xlu0 %v618, 59
        %v1195 = vpop.permute.xlu0 %1194
        %1196 = vrot.lane.b32.xlu0 %v505, 59
        %v1197 = vpop.permute.xlu0 %1196
        %1198 = vrot.lane.b32.xlu0 %v512, 59
        %v1199 = vpop.permute.xlu0 %1198
        %1200 = vrot.lane.b32.xlu0 %v595, 59
        %v1201 = vpop.permute.xlu0 %1200
        %1202 = vrot.lane.b32.xlu0 %v597, 59
        %v1203 = vpop.permute.xlu0 %1202
        %1204 = vrot.lane.b32.xlu0 %v466, 59
        %v1205 = vpop.permute.xlu0 %1204
        %vm1206 = vcmask 482304
        %v1207 = vsel %vm1206, %v1195, %v1197
        %v1208 = vsel %vm1206, %v1197, %v1199
        %v1209 = vsel %vm1206, %v1199, %v1201
        %v1210 = vsel %vm1206, %v1201, %v1203
        %v1211 = vsel %vm1206, %v1203, %v1205
        %1212 = vrot.lane.b32.xlu0 %v595, 58
        %v1213 = vpop.permute.xlu0 %1212
        %1214 = vrot.lane.b32.xlu0 %v541, 58
        %v1215 = vpop.permute.xlu0 %1214
        %1216 = vrot.lane.b32.xlu0 %v466, 58
        %v1217 = vpop.permute.xlu0 %1216
        %1218 = vrot.lane.b32.xlu0 %v638, 58
        %v1219 = vpop.permute.xlu0 %1218
        %1220 = vrot.lane.b32.xlu0 %v596, 58
        %v1221 = vpop.permute.xlu0 %1220
        %1222 = vrot.lane.b32.xlu0 %v548, 58
        %v1223 = vpop.permute.xlu0 %1222
        %vm1224 = vcmask 474112
        %v1225 = vsel %vm1224, %v1213, %v1215
        %v1226 = vsel %vm1224, %v1215, %v1217
        %v1227 = vsel %vm1224, %v1217, %v1219
        %v1228 = vsel %vm1224, %v1219, %v1221
        %v1229 = vsel %vm1224, %v1221, %v1223
        %1230 = vrot.lane.b32.xlu0 %v617, 57
        %v1231 = vpop.permute.xlu0 %1230
        %1232 = vrot.lane.b32.xlu0 %v575, 57
        %v1233 = vpop.permute.xlu0 %1232
        %1234 = vrot.lane.b32.xlu0 %v505, 57
        %v1235 = vpop.permute.xlu0 %1234
        %1236 = vrot.lane.b32.xlu0 %v637, 57
        %v1237 = vpop.permute.xlu0 %1236
        %1238 = vrot.lane.b32.xlu0 %v595, 57
        %v1239 = vpop.permute.xlu0 %1238
        %1240 = vrot.lane.b32.xlu0 %v541, 57
        %v1241 = vpop.permute.xlu0 %1240
        %vm1242 = vcmask 465920
        %v1243 = vsel %vm1242, %v1231, %v1233
        %v1244 = vsel %vm1242, %v1233, %v1235
        %v1245 = vsel %vm1242, %v1235, %v1237
        %v1246 = vsel %vm1242, %v1237, %v1239
        %v1247 = vsel %vm1242, %v1239, %v1241
        %1248 = vrot.lane.b32.xlu0 %v480, 56
        %v1249 = vpop.permute.xlu0 %1248
        %1250 = vrot.lane.b32.xlu0 %v488, 56
        %v1251 = vpop.permute.xlu0 %1250
        %1252 = vrot.lane.b32.xlu0 %v489, 56
        %v1253 = vpop.permute.xlu0 %1252
        %1254 = vrot.lane.b32.xlu0 %v473, 56
        %v1255 = vpop.permute.xlu0 %1254
        %1256 = vrot.lane.b32.xlu0 %v487, 56
        %v1257 = vpop.permute.xlu0 %1256
        %1258 = vrot.lane.b32.xlu0 %v819, 56
        %v1259 = vpop.permute.xlu0 %1258
        %vm1260 = vcmask 457728
        %v1261 = vsel %vm1260, %v1249, %v1251
        %v1262 = vsel %vm1260, %v1251, %v1253
        %v1263 = vsel %vm1260, %v1253, %v1255
        %v1264 = vsel %vm1260, %v1255, %v1257
        %v1265 = vsel %vm1260, %v1257, %v1259
        %v1268 = vsel %vm694, %v1117, %v1135
        %v1271 = vsel %vm694, %v1118, %v1136
        %v1274 = vsel %vm694, %v1119, %v1137
        %v1277 = vsel %vm694, %v1120, %v1138
        %v1280 = vsel %vm694, %v1121, %v1139
        %v1283 = vsel %vm694, %v1115, %v1133
        %v1285 = vsel %vm713, %v1268, %v1153
        %v1287 = vsel %vm713, %v1271, %v1154
        %v1289 = vsel %vm713, %v1274, %v1155
        %v1291 = vsel %vm713, %v1277, %v1156
        %v1293 = vsel %vm713, %v1280, %v1157
        %v1295 = vsel %vm713, %v1283, %v1151
        %v1297 = vsel %vm726, %v1285, %v1171
        %v1299 = vsel %vm726, %v1287, %v1172
        %v1301 = vsel %vm726, %v1289, %v1173
        %v1303 = vsel %vm726, %v1291, %v1174
        %v1305 = vsel %vm726, %v1293, %v1175
        %v1307 = vsel %vm726, %v1295, %v1169
        %v1309 = vsel %vm739, %v1297, %v1189
        %v1311 = vsel %vm739, %v1299, %v1190
        %v1313 = vsel %vm739, %v1301, %v1191
        %v1315 = vsel %vm739, %v1303, %v1192
        %v1317 = vsel %vm739, %v1305, %v1193
        %v1319 = vsel %vm739, %v1307, %v1187
        %v1321 = vsel %vm752, %v1309, %v1207
        %v1323 = vsel %vm752, %v1311, %v1208
        %v1325 = vsel %vm752, %v1313, %v1209
        %v1327 = vsel %vm752, %v1315, %v1210
        %v1329 = vsel %vm752, %v1317, %v1211
        %v1331 = vsel %vm752, %v1319, %v1205
        %v1333 = vsel %vm765, %v1321, %v1225
        %v1335 = vsel %vm765, %v1323, %v1226
        %v1337 = vsel %vm765, %v1325, %v1227
        %v1339 = vsel %vm765, %v1327, %v1228
        %v1341 = vsel %vm765, %v1329, %v1229
        %v1343 = vsel %vm765, %v1331, %v1223
        %v1345 = vsel %vm778, %v1333, %v1243
        %v1347 = vsel %vm778, %v1335, %v1244
        %v1349 = vsel %vm778, %v1337, %v1245
        %v1351 = vsel %vm778, %v1339, %v1246
        %v1353 = vsel %vm778, %v1341, %v1247
        %v1355 = vsel %vm778, %v1343, %v1241
        %1356 = vrot.lane.b32.xlu0 %v480, 32
        %v1357 = vpop.permute.xlu0 %1356
        %1358 = vrot.lane.b32.xlu0 %v488, 32
        %v1359 = vpop.permute.xlu0 %1358
        %1360 = vrot.lane.b32.xlu0 %v489, 32
        %v1361 = vpop.permute.xlu0 %1360
        %1362 = vrot.lane.b32.xlu0 %v473, 32
        %v1363 = vpop.permute.xlu0 %1362
        %1364 = vrot.lane.b32.xlu0 %v487, 32
        %v1365 = vpop.permute.xlu0 %1364
        %1366 = vrot.lane.b32.xlu0 %v819, 32
        %v1367 = vpop.permute.xlu0 %1366
        %vm1368 = vcmask 261120
        %v1369 = vsel %vm1368, %v1357, %v1359
        %v1370 = vsel %vm1368, %v1359, %v1361
        %v1371 = vsel %vm1368, %v1361, %v1363
        %v1372 = vsel %vm1368, %v1363, %v1365
        %v1373 = vsel %vm1368, %v1365, %v1367
        %1374 = vrot.lane.b32.xlu0 %v512, 31
        %v1375 = vpop.permute.xlu0 %1374
        %1376 = vrot.lane.b32.xlu0 %v513, 31
        %v1377 = vpop.permute.xlu0 %1376
        %1378 = vrot.lane.b32.xlu0 %v514, 31
        %v1379 = vpop.permute.xlu0 %1378
        %1380 = vrot.lane.b32.xlu0 %v466, 31
        %v1381 = vpop.permute.xlu0 %1380
        %1382 = vrot.lane.b32.xlu0 %v480, 31
        %v1383 = vpop.permute.xlu0 %1382
        %1384 = vrot.lane.b32.xlu0 %v488, 31
        %v1385 = vpop.permute.xlu0 %1384
        %1386 = vrot.lane.b32.xlu0 %v489, 31
        %v1387 = vpop.permute.xlu0 %1386
        %vm1388 = vcmask 252928
        %v1389 = vsel %vm1388, %v1375, %v1377
        %v1390 = vsel %vm1388, %v1377, %v1379
        %v1391 = vsel %vm1388, %v1379, %v1381
        %v1392 = vsel %vm1388, %v1381, %v1383
        %v1393 = vsel %vm1388, %v1383, %v1385
        %v1394 = vsel %vm1388, %v1385, %v1387
        %1395 = vrot.lane.b32.xlu0 %v466, 30
        %v1396 = vpop.permute.xlu0 %1395
        %1397 = vrot.lane.b32.xlu0 %v549, 30
        %v1398 = vpop.permute.xlu0 %1397
        %1399 = vrot.lane.b32.xlu0 %v488, 30
        %v1400 = vpop.permute.xlu0 %1399
        %1401 = vrot.lane.b32.xlu0 %v548, 30
        %v1402 = vpop.permute.xlu0 %1401
        %1403 = vrot.lane.b32.xlu0 %v473, 30
        %v1404 = vpop.permute.xlu0 %1403
        %1405 = vrot.lane.b32.xlu0 %v800, 30
        %v1406 = vpop.permute.xlu0 %1405
        %1407 = vrot.lane.b32.xlu0 %v819, 30
        %v1408 = vpop.permute.xlu0 %1407
        %vm1409 = vcmask 244736
        %v1410 = vsel %vm1409, %v1396, %v1398
        %v1411 = vsel %vm1409, %v1398, %v1400
        %v1412 = vsel %vm1409, %v1400, %v1402
        %v1413 = vsel %vm1409, %v1402, %v1404
        %v1414 = vsel %vm1409, %v1404, %v1406
        %v1415 = vsel %vm1409, %v1406, %v1408
        %1416 = vrot.lane.b32.xlu0 %v505, 29
        %v1417 = vpop.permute.xlu0 %1416
        %1418 = vrot.lane.b32.xlu0 %v576, 29
        %v1419 = vpop.permute.xlu0 %1418
        %1420 = vrot.lane.b32.xlu0 %v513, 29
        %v1421 = vpop.permute.xlu0 %1420
        %1422 = vrot.lane.b32.xlu0 %v541, 29
        %v1423 = vpop.permute.xlu0 %1422
        %1424 = vrot.lane.b32.xlu0 %v466, 29
        %v1425 = vpop.permute.xlu0 %1424
        %1426 = vrot.lane.b32.xlu0 %v549, 29
        %v1427 = vpop.permute.xlu0 %1426
        %1428 = vrot.lane.b32.xlu0 %v488, 29
        %v1429 = vpop.permute.xlu0 %1428
        %vm1430 = vcmask 236544
        %v1431 = vsel %vm1430, %v1417, %v1419
        %v1432 = vsel %vm1430, %v1419, %v1421
        %v1433 = vsel %vm1430, %v1421, %v1423
        %v1434 = vsel %vm1430, %v1423, %v1425
        %v1435 = vsel %vm1430, %v1425, %v1427
        %v1436 = vsel %vm1430, %v1427, %v1429
        %1437 = vrot.lane.b32.xlu0 %v597, 28
        %v1438 = vpop.permute.xlu0 %1437
        %1439 = vrot.lane.b32.xlu0 %v466, 28
        %v1440 = vpop.permute.xlu0 %1439
        %1441 = vrot.lane.b32.xlu0 %v480, 28
        %v1442 = vpop.permute.xlu0 %1441
        %1443 = vrot.lane.b32.xlu0 %v596, 28
        %v1444 = vpop.permute.xlu0 %1443
        %1445 = vrot.lane.b32.xlu0 %v598, 28
        %v1446 = vpop.permute.xlu0 %1445
        %1447 = vrot.lane.b32.xlu0 %v473, 28
        %v1448 = vpop.permute.xlu0 %1447
        %1449 = vrot.lane.b32.xlu0 %v487, 28
        %v1450 = vpop.permute.xlu0 %1449
        %vm1451 = vcmask 228352
        %v1452 = vsel %vm1451, %v1438, %v1440
        %v1453 = vsel %vm1451, %v1440, %v1442
        %v1454 = vsel %vm1451, %v1442, %v1444
        %v1455 = vsel %vm1451, %v1444, %v1446
        %v1456 = vsel %vm1451, %v1446, %v1448
        %v1457 = vsel %vm1451, %v1448, %v1450
        %1458 = vrot.lane.b32.xlu0 %v618, 27
        %v1459 = vpop.permute.xlu0 %1458
        %1460 = vrot.lane.b32.xlu0 %v505, 27
        %v1461 = vpop.permute.xlu0 %1460
        %1462 = vrot.lane.b32.xlu0 %v512, 27
        %v1463 = vpop.permute.xlu0 %1462
        %1464 = vrot.lane.b32.xlu0 %v595, 27
        %v1465 = vpop.permute.xlu0 %1464
        %1466 = vrot.lane.b32.xlu0 %v597, 27
        %v1467 = vpop.permute.xlu0 %1466
        %1468 = vrot.lane.b32.xlu0 %v466, 27
        %v1469 = vpop.permute.xlu0 %1468
        %1470 = vrot.lane.b32.xlu0 %v480, 27
        %v1471 = vpop.permute.xlu0 %1470
        %vm1472 = vcmask 220160
        %v1473 = vsel %vm1472, %v1459, %v1461
        %v1474 = vsel %vm1472, %v1461, %v1463
        %v1475 = vsel %vm1472, %v1463, %v1465
        %v1476 = vsel %vm1472, %v1465, %v1467
        %v1477 = vsel %vm1472, %v1467, %v1469
        %v1478 = vsel %vm1472, %v1469, %v1471
        %1479 = vrot.lane.b32.xlu0 %v595, 26
        %v1480 = vpop.permute.xlu0 %1479
        %1481 = vrot.lane.b32.xlu0 %v541, 26
        %v1482 = vpop.permute.xlu0 %1481
        %1483 = vrot.lane.b32.xlu0 %v466, 26
        %v1484 = vpop.permute.xlu0 %1483
        %1485 = vrot.lane.b32.xlu0 %v638, 26
        %v1486 = vpop.permute.xlu0 %1485
        %1487 = vrot.lane.b32.xlu0 %v596, 26
        %v1488 = vpop.permute.xlu0 %1487
        %1489 = vrot.lane.b32.xlu0 %v548, 26
        %v1490 = vpop.permute.xlu0 %1489
        %1491 = vrot.lane.b32.xlu0 %v473, 26
        %v1492 = vpop.permute.xlu0 %1491
        %vm1493 = vcmask 211968
        %v1494 = vsel %vm1493, %v1480, %v1482
        %v1495 = vsel %vm1493, %v1482, %v1484
        %v1496 = vsel %vm1493, %v1484, %v1486
        %v1497 = vsel %vm1493, %v1486, %v1488
        %v1498 = vsel %vm1493, %v1488, %v1490
        %v1499 = vsel %vm1493, %v1490, %v1492
        %1500 = vrot.lane.b32.xlu0 %v617, 25
        %v1501 = vpop.permute.xlu0 %1500
        %1502 = vrot.lane.b32.xlu0 %v575, 25
        %v1503 = vpop.permute.xlu0 %1502
        %1504 = vrot.lane.b32.xlu0 %v505, 25
        %v1505 = vpop.permute.xlu0 %1504
        %1506 = vrot.lane.b32.xlu0 %v637, 25
        %v1507 = vpop.permute.xlu0 %1506
        %1508 = vrot.lane.b32.xlu0 %v595, 25
        %v1509 = vpop.permute.xlu0 %1508
        %1510 = vrot.lane.b32.xlu0 %v541, 25
        %v1511 = vpop.permute.xlu0 %1510
        %1512 = vrot.lane.b32.xlu0 %v466, 25
        %v1513 = vpop.permute.xlu0 %1512
        %vm1514 = vcmask 203776
        %v1515 = vsel %vm1514, %v1501, %v1503
        %v1516 = vsel %vm1514, %v1503, %v1505
        %v1517 = vsel %vm1514, %v1505, %v1507
        %v1518 = vsel %vm1514, %v1507, %v1509
        %v1519 = vsel %vm1514, %v1509, %v1511
        %v1520 = vsel %vm1514, %v1511, %v1513
        %v1521 = vcombine.high %v487, %v487
        %1522 = vrot.lane.b32.xlu0 %v480, 24
        %v1523 = vpop.permute.xlu0 %1522
        %1524 = vrot.lane.b32.xlu0 %v488, 24
        %v1525 = vpop.permute.xlu0 %1524
        %1526 = vrot.lane.b32.xlu0 %v489, 24
        %v1527 = vpop.permute.xlu0 %1526
        %1528 = vrot.lane.b32.xlu0 %v473, 24
        %v1529 = vpop.permute.xlu0 %1528
        %1530 = vrot.lane.b32.xlu0 %v487, 24
        %v1531 = vpop.permute.xlu0 %1530
        %1532 = vrot.lane.b32.xlu0 %v819, 24
        %v1533 = vpop.permute.xlu0 %1532
        %1534 = vrot.lane.b32.xlu0 %v1521, 24
        %v1535 = vpop.permute.xlu0 %1534
        %vm1536 = vcmask 195584
        %v1537 = vsel %vm1536, %v1523, %v1525
        %v1538 = vsel %vm1536, %v1525, %v1527
        %v1539 = vsel %vm1536, %v1527, %v1529
        %v1540 = vsel %vm1536, %v1529, %v1531
        %v1541 = vsel %vm1536, %v1531, %v1533
        %v1542 = vsel %vm1536, %v1533, %v1535
        %v1545 = vsel %vm694, %v1369, %v1389
        %v1548 = vsel %vm694, %v1370, %v1390
        %v1551 = vsel %vm694, %v1371, %v1391
        %v1554 = vsel %vm694, %v1372, %v1392
        %v1557 = vsel %vm694, %v1373, %v1393
        %v1560 = vsel %vm694, %v1367, %v1394
        %v1562 = vsel %vm713, %v1545, %v1410
        %v1564 = vsel %vm713, %v1548, %v1411
        %v1566 = vsel %vm713, %v1551, %v1412
        %v1568 = vsel %vm713, %v1554, %v1413
        %v1570 = vsel %vm713, %v1557, %v1414
        %v1572 = vsel %vm713, %v1560, %v1415
        %v1574 = vsel %vm726, %v1562, %v1431
        %v1576 = vsel %vm726, %v1564, %v1432
        %v1578 = vsel %vm726, %v1566, %v1433
        %v1580 = vsel %vm726, %v1568, %v1434
        %v1582 = vsel %vm726, %v1570, %v1435
        %v1584 = vsel %vm726, %v1572, %v1436
        %v1586 = vsel %vm739, %v1574, %v1452
        %v1588 = vsel %vm739, %v1576, %v1453
        %v1590 = vsel %vm739, %v1578, %v1454
        %v1592 = vsel %vm739, %v1580, %v1455
        %v1594 = vsel %vm739, %v1582, %v1456
        %v1596 = vsel %vm739, %v1584, %v1457
        %v1598 = vsel %vm752, %v1586, %v1473
        %v1600 = vsel %vm752, %v1588, %v1474
        %v1602 = vsel %vm752, %v1590, %v1475
        %v1604 = vsel %vm752, %v1592, %v1476
        %v1606 = vsel %vm752, %v1594, %v1477
        %v1608 = vsel %vm752, %v1596, %v1478
        %v1610 = vsel %vm765, %v1598, %v1494
        %v1612 = vsel %vm765, %v1600, %v1495
        %v1614 = vsel %vm765, %v1602, %v1496
        %v1616 = vsel %vm765, %v1604, %v1497
        %v1618 = vsel %vm765, %v1606, %v1498
        %v1620 = vsel %vm765, %v1608, %v1499
        %v1622 = vsel %vm778, %v1610, %v1515
        %v1624 = vsel %vm778, %v1612, %v1516
        %v1626 = vsel %vm778, %v1614, %v1517
        %v1628 = vsel %vm778, %v1616, %v1518
        %v1630 = vsel %vm778, %v1618, %v1519
        %v1632 = vsel %vm778, %v1620, %v1520
        %1633 = vrot.lane.b32.xlu0 %v489, 127
        %v1634 = vpop.permute.xlu0 %1633
        %v1635 = vsel %vm527, %v798, %v1634
        %1636 = vrot.lane.b32.xlu0 %v819, 126
        %v1637 = vpop.permute.xlu0 %1636
        %v1638 = vsel %vm562, %v802, %v1637
        %1639 = vrot.lane.b32.xlu0 %v488, 125
        %v1640 = vpop.permute.xlu0 %1639
        %v1641 = vsel %vm589, %v805, %v1640
        %1642 = vrot.lane.b32.xlu0 %v487, 124
        %v1643 = vpop.permute.xlu0 %1642
        %v1644 = vsel %vm611, %v808, %v1643
        %1645 = vrot.lane.b32.xlu0 %v480, 123
        %v1646 = vpop.permute.xlu0 %1645
        %v1647 = vsel %vm631, %v811, %v1646
        %1648 = vrot.lane.b32.xlu0 %v473, 122
        %v1649 = vpop.permute.xlu0 %1648
        %v1650 = vsel %vm651, %v814, %v1649
        %1651 = vrot.lane.b32.xlu0 %v466, 121
        %v1652 = vpop.permute.xlu0 %1651
        %v1653 = vsel %vm670, %v817, %v1652
        %1654 = vrot.lane.b32.xlu0 %v1521, 120
        %v1655 = vpop.permute.xlu0 %1654
        %v1656 = vsel %vm688, %v821, %v1655
        %v1658 = vsel %vm694, %v819, %v1635
        %v1661 = vsel %vm694, %v1521, %v1634
        %v1663 = vsel %vm713, %v1658, %v1638
        %v1665 = vsel %vm713, %v1661, %v1637
        %v1667 = vsel %vm726, %v1663, %v1641
        %v1669 = vsel %vm726, %v1665, %v1640
        %v1671 = vsel %vm739, %v1667, %v1644
        %v1673 = vsel %vm739, %v1669, %v1643
        %v1675 = vsel %vm752, %v1671, %v1647
        %v1677 = vsel %vm752, %v1673, %v1646
        %v1679 = vsel %vm765, %v1675, %v1650
        %v1681 = vsel %vm765, %v1677, %v1649
        %v1684 = vsel %vm778, %v1679, %v1653
        %v1687 = vsel %vm778, %v1681, %v1652
        %vm1695 = vcmask 1040384
        %v1696 = vrot.slane %v780, 7
        %v1697 = vrot.slane %v783, 7
        %v1698 = vrot.slane %v786, 7
        %v1699 = vrot.slane %v789, 7
        %v1700 = vrot.slane %v792, 7
        %v1701 = vrot.slane %v795, 7
        %v1702 = vrot.slane %v689, 7
        %v1703 = vsel %vm1695, %v1696, %v1702
        %v1704 = vrot.slane %v690, 7
        %v1705 = vsel %vm1695, %v1697, %v1704
        %v1706 = vrot.slane %v691, 7
        %v1707 = vsel %vm1695, %v1698, %v1706
        %v1708 = vrot.slane %v692, 7
        %v1709 = vsel %vm1695, %v1699, %v1708
        %v1710 = vrot.slane %v693, 7
        %v1711 = vsel %vm1695, %v1700, %v1710
        %v1712 = vrot.slane %v687, 7
        %v1713 = vsel %vm1695, %v1701, %v1712
        %1714 = vrot.lane.b32.xlu0 %v1696, 96
        %v1715 = vpop.permute.xlu0 %1714
        %1716 = vrot.lane.b32.xlu0 %v1697, 96
        %v1717 = vpop.permute.xlu0 %1716
        %1718 = vrot.lane.b32.xlu0 %v1698, 96
        %v1719 = vpop.permute.xlu0 %1718
        %1720 = vrot.lane.b32.xlu0 %v1699, 96
        %v1721 = vpop.permute.xlu0 %1720
        %1722 = vrot.lane.b32.xlu0 %v1700, 96
        %v1723 = vpop.permute.xlu0 %1722
        %1724 = vrot.lane.b32.xlu0 %v1701, 96
        %v1725 = vpop.permute.xlu0 %1724
        %1726 = vrot.lane.b32.xlu0 %v1703, 96
        %v1727 = vpop.permute.xlu0 %1726
        %1728 = vrot.lane.b32.xlu0 %v1705, 96
        %v1729 = vpop.permute.xlu0 %1728
        %1730 = vrot.lane.b32.xlu0 %v1707, 96
        %v1731 = vpop.permute.xlu0 %1730
        %1732 = vrot.lane.b32.xlu0 %v1709, 96
        %v1733 = vpop.permute.xlu0 %1732
        %1734 = vrot.lane.b32.xlu0 %v1711, 96
        %v1735 = vpop.permute.xlu0 %1734
        %1736 = vrot.lane.b32.xlu0 %v1713, 96
        %v1737 = vpop.permute.xlu0 %1736
        %v1738 = vsel %vm864, %v1715, %v1717
        %v1739 = vsel %vm864, %v1717, %v1719
        %v1740 = vsel %vm864, %v1719, %v1721
        %v1741 = vsel %vm864, %v1721, %v1723
        %v1742 = vsel %vm864, %v1723, %v1725
        %v1743 = vsel %vm864, %v1727, %v1729
        %v1744 = vsel %vm864, %v1729, %v1731
        %v1745 = vsel %vm864, %v1731, %v1733
        %v1746 = vsel %vm864, %v1733, %v1735
        %v1747 = vsel %vm864, %v1735, %v1737
        %vm1748 = vcmask 1041408
        %v1749 = vrot.slane %v780, 6
        %v1750 = vrot.slane %v783, 6
        %v1751 = vrot.slane %v786, 6
        %v1752 = vrot.slane %v789, 6
        %v1753 = vrot.slane %v792, 6
        %v1754 = vrot.slane %v795, 6
        %v1755 = vrot.slane %v689, 6
        %v1756 = vsel %vm1748, %v1749, %v1755
        %v1757 = vrot.slane %v690, 6
        %v1758 = vsel %vm1748, %v1750, %v1757
        %v1759 = vrot.slane %v691, 6
        %v1760 = vsel %vm1748, %v1751, %v1759
        %v1761 = vrot.slane %v692, 6
        %v1762 = vsel %vm1748, %v1752, %v1761
        %v1763 = vrot.slane %v693, 6
        %v1764 = vsel %vm1748, %v1753, %v1763
        %v1765 = vrot.slane %v687, 6
        %v1766 = vsel %vm1748, %v1754, %v1765
        %1767 = vrot.lane.b32.xlu0 %v1749, 64
        %v1768 = vpop.permute.xlu0 %1767
        %1769 = vrot.lane.b32.xlu0 %v1750, 64
        %v1770 = vpop.permute.xlu0 %1769
        %1771 = vrot.lane.b32.xlu0 %v1751, 64
        %v1772 = vpop.permute.xlu0 %1771
        %1773 = vrot.lane.b32.xlu0 %v1752, 64
        %v1774 = vpop.permute.xlu0 %1773
        %1775 = vrot.lane.b32.xlu0 %v1753, 64
        %v1776 = vpop.permute.xlu0 %1775
        %1777 = vrot.lane.b32.xlu0 %v1754, 64
        %v1778 = vpop.permute.xlu0 %1777
        %1779 = vrot.lane.b32.xlu0 %v1756, 64
        %v1780 = vpop.permute.xlu0 %1779
        %1781 = vrot.lane.b32.xlu0 %v1758, 64
        %v1782 = vpop.permute.xlu0 %1781
        %1783 = vrot.lane.b32.xlu0 %v1760, 64
        %v1784 = vpop.permute.xlu0 %1783
        %1785 = vrot.lane.b32.xlu0 %v1762, 64
        %v1786 = vpop.permute.xlu0 %1785
        %1787 = vrot.lane.b32.xlu0 %v1764, 64
        %v1788 = vpop.permute.xlu0 %1787
        %1789 = vrot.lane.b32.xlu0 %v1766, 64
        %v1790 = vpop.permute.xlu0 %1789
        %v1791 = vsel %vm1116, %v1768, %v1770
        %v1792 = vsel %vm1116, %v1770, %v1772
        %v1793 = vsel %vm1116, %v1772, %v1774
        %v1794 = vsel %vm1116, %v1774, %v1776
        %v1795 = vsel %vm1116, %v1776, %v1778
        %v1796 = vsel %vm1116, %v1780, %v1782
        %v1797 = vsel %vm1116, %v1782, %v1784
        %v1798 = vsel %vm1116, %v1784, %v1786
        %v1799 = vsel %vm1116, %v1786, %v1788
        %v1800 = vsel %vm1116, %v1788, %v1790
        %vm1802 = vcmask 1042432
        %v1803 = vrot.slane %v780, 5
        %v1804 = vrot.slane %v783, 5
        %v1805 = vrot.slane %v786, 5
        %v1806 = vrot.slane %v789, 5
        %v1807 = vrot.slane %v792, 5
        %v1808 = vrot.slane %v836, 5
        %v1809 = vrot.slane %v689, 5
        %v1810 = vsel %vm1802, %v1803, %v1809
        %v1811 = vrot.slane %v690, 5
        %v1812 = vsel %vm1802, %v1804, %v1811
        %v1813 = vrot.slane %v691, 5
        %v1814 = vsel %vm1802, %v1805, %v1813
        %v1815 = vrot.slane %v692, 5
        %v1816 = vsel %vm1802, %v1806, %v1815
        %v1817 = vrot.slane %v693, 5
        %v1818 = vsel %vm1802, %v1807, %v1817
        %v1819 = vrot.slane %v822, 5
        %v1820 = vsel %vm1802, %v1808, %v1819
        %1821 = vrot.lane.b32.xlu0 %v1803, 32
        %v1822 = vpop.permute.xlu0 %1821
        %1823 = vrot.lane.b32.xlu0 %v1804, 32
        %v1824 = vpop.permute.xlu0 %1823
        %1825 = vrot.lane.b32.xlu0 %v1805, 32
        %v1826 = vpop.permute.xlu0 %1825
        %1827 = vrot.lane.b32.xlu0 %v1806, 32
        %v1828 = vpop.permute.xlu0 %1827
        %1829 = vrot.lane.b32.xlu0 %v1807, 32
        %v1830 = vpop.permute.xlu0 %1829
        %1831 = vrot.lane.b32.xlu0 %v1808, 32
        %v1832 = vpop.permute.xlu0 %1831
        %1833 = vrot.lane.b32.xlu0 %v1810, 32
        %v1834 = vpop.permute.xlu0 %1833
        %1835 = vrot.lane.b32.xlu0 %v1812, 32
        %v1836 = vpop.permute.xlu0 %1835
        %1837 = vrot.lane.b32.xlu0 %v1814, 32
        %v1838 = vpop.permute.xlu0 %1837
        %1839 = vrot.lane.b32.xlu0 %v1816, 32
        %v1840 = vpop.permute.xlu0 %1839
        %1841 = vrot.lane.b32.xlu0 %v1818, 32
        %v1842 = vpop.permute.xlu0 %1841
        %1843 = vrot.lane.b32.xlu0 %v1820, 32
        %v1844 = vpop.permute.xlu0 %1843
        %v1845 = vsel %vm1368, %v1822, %v1824
        %v1846 = vsel %vm1368, %v1824, %v1826
        %v1847 = vsel %vm1368, %v1826, %v1828
        %v1848 = vsel %vm1368, %v1828, %v1830
        %v1849 = vsel %vm1368, %v1830, %v1832
        %v1850 = vsel %vm1368, %v1834, %v1836
        %v1851 = vsel %vm1368, %v1836, %v1838
        %v1852 = vsel %vm1368, %v1838, %v1840
        %v1853 = vsel %vm1368, %v1840, %v1842
        %v1854 = vsel %vm1368, %v1842, %v1844
        %vm1856 = vcmask 1043456
        %v1857 = vrot.slane %v783, 4
        %v1858 = vrot.slane %v786, 4
        %v1859 = vrot.slane %v789, 4
        %v1860 = vrot.slane %v792, 4
        %v1861 = vrot.slane %v836, 4
        %v1862 = vrot.slane %v851, 4
        %v1863 = vrot.slane %v690, 4
        %v1864 = vsel %vm1856, %v1857, %v1863
        %v1865 = vrot.slane %v691, 4
        %v1866 = vsel %vm1856, %v1858, %v1865
        %v1867 = vrot.slane %v692, 4
        %v1868 = vsel %vm1856, %v1859, %v1867
        %v1869 = vrot.slane %v693, 4
        %v1870 = vsel %vm1856, %v1860, %v1869
        %v1871 = vrot.slane %v822, 4
        %v1872 = vsel %vm1856, %v1861, %v1871
        %v1873 = vrot.slane %v821, 4
        %v1874 = vsel %vm1856, %v1862, %v1873
        %vm1881 = vcmask 1044480
        %v1882 = vrot.slane %v1093, 3
        %v1883 = vrot.slane %v1095, 3
        %v1884 = vrot.slane %v1097, 3
        %v1885 = vrot.slane %v1099, 3
        %v1886 = vrot.slane %v1101, 3
        %v1887 = vrot.slane %v1103, 3
        %v1888 = vrot.slane %v1009, 3
        %v1889 = vsel %vm1881, %v1882, %v1888
        %v1890 = vrot.slane %v1010, 3
        %v1891 = vsel %vm1881, %v1883, %v1890
        %v1892 = vrot.slane %v1011, 3
        %v1893 = vsel %vm1881, %v1884, %v1892
        %v1894 = vrot.slane %v1012, 3
        %v1895 = vsel %vm1881, %v1885, %v1894
        %v1896 = vrot.slane %v1013, 3
        %v1897 = vsel %vm1881, %v1886, %v1896
        %v1898 = vrot.slane %v1007, 3
        %v1899 = vsel %vm1881, %v1887, %v1898
        %vm1906 = vcmask 1045504
        %v1907 = vrot.slane %v1345, 2
        %v1908 = vrot.slane %v1347, 2
        %v1909 = vrot.slane %v1349, 2
        %v1910 = vrot.slane %v1351, 2
        %v1911 = vrot.slane %v1353, 2
        %v1912 = vrot.slane %v1355, 2
        %v1913 = vrot.slane %v1261, 2
        %v1914 = vsel %vm1906, %v1907, %v1913
        %v1915 = vrot.slane %v1262, 2
        %v1916 = vsel %vm1906, %v1908, %v1915
        %v1917 = vrot.slane %v1263, 2
        %v1918 = vsel %vm1906, %v1909, %v1917
        %v1919 = vrot.slane %v1264, 2
        %v1920 = vsel %vm1906, %v1910, %v1919
        %v1921 = vrot.slane %v1265, 2
        %v1922 = vsel %vm1906, %v1911, %v1921
        %v1923 = vrot.slane %v1259, 2
        %v1924 = vsel %vm1906, %v1912, %v1923
        %vm1931 = vcmask 1046528
        %v1932 = vrot.slane %v1622, 1
        %v1933 = vrot.slane %v1624, 1
        %v1934 = vrot.slane %v1626, 1
        %v1935 = vrot.slane %v1628, 1
        %v1936 = vrot.slane %v1630, 1
        %v1937 = vrot.slane %v1632, 1
        %v1938 = vrot.slane %v1537, 1
        %v1939 = vsel %vm1931, %v1932, %v1938
        %v1940 = vrot.slane %v1538, 1
        %v1941 = vsel %vm1931, %v1933, %v1940
        %v1942 = vrot.slane %v1539, 1
        %v1943 = vsel %vm1931, %v1934, %v1942
        %v1944 = vrot.slane %v1540, 1
        %v1945 = vsel %vm1931, %v1935, %v1944
        %v1946 = vrot.slane %v1541, 1
        %v1947 = vsel %vm1931, %v1936, %v1946
        %v1948 = vrot.slane %v1542, 1
        %v1949 = vsel %vm1931, %v1937, %v1948
        %v1958 = vsel %vm694, %v689, %v1738
        %v1962 = vsel %vm694, %v690, %v1739
        %v1966 = vsel %vm694, %v691, %v1740
        %v1970 = vsel %vm694, %v692, %v1741
        %v1974 = vsel %vm694, %v693, %v1742
        %v1978 = vsel %vm694, %v687, %v1725
        %v1982 = vsel %vm713, %v1743, %v1791
        %v1986 = vsel %vm713, %v1744, %v1792
        %v1990 = vsel %vm713, %v1745, %v1793
        %v1994 = vsel %vm713, %v1746, %v1794
        %v1998 = vsel %vm713, %v1747, %v1795
        %v2002 = vsel %vm713, %v1737, %v1778
        %v2006 = vsel %vm726, %v1796, %v1845
        %v2010 = vsel %vm726, %v1797, %v1846
        %v2014 = vsel %vm726, %v1798, %v1847
        %v2018 = vsel %vm726, %v1799, %v1848
        %v2022 = vsel %vm726, %v1800, %v1849
        %v2026 = vsel %vm726, %v1790, %v1832
        %v2030 = vsel %vm739, %v1850, %v1857
        %v2034 = vsel %vm739, %v1851, %v1858
        %v2038 = vsel %vm739, %v1852, %v1859
        %v2042 = vsel %vm739, %v1853, %v1860
        %v2046 = vsel %vm739, %v1854, %v1861
        %v2050 = vsel %vm739, %v1844, %v1862
        %v2054 = vsel %vm752, %v1864, %v1882
        %v2058 = vsel %vm752, %v1866, %v1883
        %v2062 = vsel %vm752, %v1868, %v1884
        %v2066 = vsel %vm752, %v1870, %v1885
        %v2070 = vsel %vm752, %v1872, %v1886
        %v2074 = vsel %vm752, %v1874, %v1887
        %v2078 = vsel %vm765, %v1889, %v1907
        %v2082 = vsel %vm765, %v1891, %v1908
        %v2086 = vsel %vm765, %v1893, %v1909
        %v2090 = vsel %vm765, %v1895, %v1910
        %v2094 = vsel %vm765, %v1897, %v1911
        %v2098 = vsel %vm765, %v1899, %v1912
        %v2102 = vsel %vm778, %v1914, %v1932
        %v2106 = vsel %vm778, %v1916, %v1933
        %v2110 = vsel %vm778, %v1918, %v1934
        %v2114 = vsel %vm778, %v1920, %v1935
        %v2118 = vsel %vm778, %v1922, %v1936
        %v2122 = vsel %vm778, %v1924, %v1937
        %v2124 = vld [vmem:[#allocation7] sm:$0xff]
        %v2125 = vld [vmem:[#allocation7 + $0x8] sm:$0xff]
        %v2126 = vld [vmem:[#allocation7 + $0x10] sm:$0xff]
        %v2127 = vld [vmem:[#allocation7 + $0x18] sm:$0xff]
        %v2128 = vld [vmem:[#allocation7 + $0x20] sm:$0xff]
        %v2129 = vld [vmem:[#allocation7 + $0x28] sm:$0xff]
        %v2130 = vld [vmem:[#allocation7 + $0x30] sm:$0xff]
        %v2131 = vld [vmem:[#allocation7 + $0x38] sm:$0xff]
        %v2132 = vld [vmem:[#allocation8] sm:$0xff]
        %v2133 = vld [vmem:[#allocation8 + $0x8] sm:$0xff]
        %v2134 = vld [vmem:[#allocation8 + $0x10] sm:$0xff]
        %v2135 = vld [vmem:[#allocation8 + $0x18] sm:$0xff]
        %v2136 = vld [vmem:[#allocation8 + $0x20] sm:$0xff]
        %v2137 = vld [vmem:[#allocation8 + $0x28] sm:$0xff]
        %v2138 = vld [vmem:[#allocation8 + $0x30] sm:$0xff]
        %v2139 = vld [vmem:[#allocation8 + $0x38] sm:$0xff]
        %2141 = vset.pattern.permute.xlu0 0
        %2142 = vperm.xlu0 %2141, %v2132
        %v2143 = vpop.permute.xlu0 %2142
        %2146 = vset.pattern.permute.xlu0 0
        %2147 = vperm.xlu0 %2146, %v2133
        %v2148 = vpop.permute.xlu0 %2147
        %2151 = vset.pattern.permute.xlu0 0
        %2152 = vperm.xlu0 %2151, %v2134
        %v2153 = vpop.permute.xlu0 %2152
        %2156 = vset.pattern.permute.xlu0 0
        %2157 = vperm.xlu0 %2156, %v2135
        %v2158 = vpop.permute.xlu0 %2157
        %2161 = vset.pattern.permute.xlu0 0
        %2162 = vperm.xlu0 %2161, %v2136
        %v2163 = vpop.permute.xlu0 %2162
        %2166 = vset.pattern.permute.xlu0 0
        %2167 = vperm.xlu0 %2166, %v2137
        %v2168 = vpop.permute.xlu0 %2167
        %2171 = vset.pattern.permute.xlu0 0
        %2172 = vperm.xlu0 %2171, %v2138
        %v2173 = vpop.permute.xlu0 %2172
        %2176 = vset.pattern.permute.xlu0 0
        %2177 = vperm.xlu0 %2176, %v2139
        %v2178 = vpop.permute.xlu0 %2177
        %v2188 = vunpack.c.l.b16 %v2124
        %v2189 = vunpack.c.h.b16 %v2124
        %v2190 = vunpack.c.l.b16 %v2125
        %v2191 = vunpack.c.h.b16 %v2125
        %v2192 = vunpack.c.l.b16 %v2126
        %v2193 = vunpack.c.h.b16 %v2126
        %v2194 = vunpack.c.l.b16 %v2127
        %v2195 = vunpack.c.h.b16 %v2127
        %v2196 = vunpack.c.l.b16 %v2128
        %v2197 = vunpack.c.h.b16 %v2128
        %v2198 = vunpack.c.l.b16 %v2129
        %v2199 = vunpack.c.h.b16 %v2129
        %v2200 = vunpack.c.l.b16 %v2130
        %v2201 = vunpack.c.h.b16 %v2130
        %v2202 = vunpack.c.l.b16 %v2131
        %v2203 = vunpack.c.h.b16 %v2131
        %v2204 = vpack.c.b16 %v2190, %v2188
        %v2205 = vpack.c.b16 %v2191, %v2189
        %v2206 = vpack.c.b16 %v2194, %v2192
        %v2207 = vpack.c.b16 %v2195, %v2193
        %v2208 = vpack.c.b16 %v2198, %v2196
        %v2209 = vpack.c.b16 %v2199, %v2197
        %v2210 = vpack.c.b16 %v2202, %v2200
        %v2211 = vpack.c.b16 %v2203, %v2201
        %vm2216 = vcmask 277504
        %v2218 = vsel %vm2216, %v2205, 0
        %v2221 = vsel %vm2216, %v2207, 0
        %v2224 = vsel %vm2216, %v2209, 0
        %v2227 = vsel %vm2216, %v2211, 0
        %v2229 = vsel %vm694, %v691, 0
        %v2231 = vsel %vm694, %v692, 0
        %v2233 = vsel %vm694, %v693, 0
        %v2236 = vsel %vm694, %v822, 0
        %v2239 = vsel %vm694, %v1656, 0
        %v2242 = vsel %vm694, %v1655, 0
        %2244 = vmatprep.subr.bf16.mxu0 %v783
        %2245 = vmatpush1.bf16.msra.mxu0 %v780
        %2246 = vmatprep.subr.bf16.mxu0 %v1962
        %2247 = vmatpush1.bf16.msra.mxu0 %v1958
        %2248 = vmatprep.subr.bf16.mxu0 %v1986
        %2249 = vmatpush1.bf16.msra.mxu0 %v1982
        %2250 = vmatprep.subr.bf16.mxu0 %v2010
        %2251 = vmatpush1.bf16.msra.mxu0 %v2006
        %2252 = vmatprep.subr.bf16.mxu0 %v2034
        %2253 = vmatpush1.bf16.msra.mxu0 %v2030
        %2254 = vmatprep.subr.bf16.mxu0 %v2058
        %2255 = vmatpush1.bf16.msra.mxu0 %v2054
        %2256 = vmatprep.subr.bf16.mxu0 %v2082
        %2257 = vmatpush1.bf16.msra.mxu0 %v2078
        %2258 = vmatprep.subr.bf16.mxu0 %v2106
        %2259 = vmatpush1.bf16.msra.mxu0 %v2102
        %2260 = vmatprep.subr.bf16.mxu0 %v1941
        %2261 = vmatpush1.bf16.msra.mxu0 %v1939
        %2262 = vmatprep.subr.bf16.mxu0 %v789
        %2263 = vmatpush1.bf16.msra.mxu0 %v786
        %2264 = vmatprep.subr.bf16.mxu0 %v2231
        %2265 = vmatpush1.bf16.msra.mxu0 %v2229
        %2266 = vmatprep.subr.bf16.mxu0 0
        %2267 = vmatpush1.bf16.msra.mxu0 0
        %2268 = vmatprep.subr.bf16.mxu0 0
        %2269 = vmatpush1.bf16.msra.mxu0 0
        %2270 = vmatprep.subr.bf16.mxu0 0
        %2271 = vmatpush1.bf16.msra.mxu0 0
        %2272 = vmatprep.subr.bf16.mxu0 0
        %2273 = vmatpush1.bf16.msra.mxu0 0
        %2274 = vmatprep.subr.bf16.mxu0 0
        %2275 = vmatpush1.bf16.msra.mxu0 0
        %2276 = vmatprep.mubr.bf16.mxu0 %v2218
        %2277 = vmatmul.mubr.bf16.gmra.mrb[0].mxu0 %v2204
        %v2278 = vpop.f32.mrb[0].mxu0
        %v2279 = vadd.f32 %v2143, %v2278
        %v2280 = vpop.f32.mrb[0].mxu0
        %v2281 = vadd.f32 %v2143, %v2280
        %v2282 = vpop.f32.mrb[0].mxu0
        %v2283 = vadd.f32 %v2148, %v2282
        %v2284 = vpop.f32.mrb[0].mxu0
        %v2285 = vadd.f32 %v2148, %v2284
        %2286 = vmatprep.mubr.bf16.mxu0 %v2221
        %2287 = vmatmul.mubr.bf16.gmra.mrb[0].mxu0 %v2206
        %v2288 = vpop.f32.mrb[0].mxu0
        %v2289 = vadd.f32 %v2153, %v2288
        %v2290 = vpop.f32.mrb[0].mxu0
        %v2291 = vadd.f32 %v2153, %v2290
        %v2292 = vpop.f32.mrb[0].mxu0
        %v2293 = vadd.f32 %v2158, %v2292
        %v2294 = vpop.f32.mrb[0].mxu0
        %v2295 = vadd.f32 %v2158, %v2294
        %2296 = vmatprep.mubr.bf16.mxu0 %v2224
        %2297 = vmatmul.mubr.bf16.gmra.mrb[0].mxu0 %v2208
        %v2298 = vpop.f32.mrb[0].mxu0
        %v2299 = vadd.f32 %v2163, %v2298
        %v2300 = vpop.f32.mrb[0].mxu0
        %v2301 = vadd.f32 %v2163, %v2300
        %v2302 = vpop.f32.mrb[0].mxu0
        %v2303 = vadd.f32 %v2168, %v2302
        %v2304 = vpop.f32.mrb[0].mxu0
        %v2305 = vadd.f32 %v2168, %v2304
        %2306 = vmatprep.mubr.bf16.mxu0 %v2227
        %2307 = vmatmul.mubr.bf16.gmra.mrb[0].mxu0 %v2210
        %v2308 = vpop.f32.mrb[0].mxu0
        %v2309 = vadd.f32 %v2173, %v2308
        %v2310 = vpop.f32.mrb[0].mxu0
        %v2311 = vadd.f32 %v2173, %v2310
        %v2312 = vpop.f32.mrb[0].mxu0
        %v2313 = vadd.f32 %v2178, %v2312
        %v2314 = vpop.f32.mrb[0].mxu0
        %v2315 = vadd.f32 %v2178, %v2314
        %2316 = vdwg.mxu0
        %2317 = vmatprep.subr.bf16.mxu0 %v789
        %2318 = vmatpush1.bf16.msra.mxu0 %v786
        %2319 = vmatprep.subr.bf16.mxu0 %v1970
        %2320 = vmatpush1.bf16.msra.mxu0 %v1966
        %2321 = vmatprep.subr.bf16.mxu0 %v1994
        %2322 = vmatpush1.bf16.msra.mxu0 %v1990
        %2323 = vmatprep.subr.bf16.mxu0 %v2018
        %2324 = vmatpush1.bf16.msra.mxu0 %v2014
        %2325 = vmatprep.subr.bf16.mxu0 %v2042
        %2326 = vmatpush1.bf16.msra.mxu0 %v2038
        %2327 = vmatprep.subr.bf16.mxu0 %v2066
        %2328 = vmatpush1.bf16.msra.mxu0 %v2062
        %2329 = vmatprep.subr.bf16.mxu0 %v2090
        %2330 = vmatpush1.bf16.msra.mxu0 %v2086
        %2331 = vmatprep.subr.bf16.mxu0 %v2114
        %2332 = vmatpush1.bf16.msra.mxu0 %v2110
        %2333 = vmatprep.subr.bf16.mxu0 %v1945
        %2334 = vmatpush1.bf16.msra.mxu0 %v1943
        %2335 = vmatprep.subr.bf16.mxu0 %v836
        %2336 = vmatpush1.bf16.msra.mxu0 %v792
        %2337 = vmatprep.subr.bf16.mxu0 %v2236
        %2338 = vmatpush1.bf16.msra.mxu0 %v2233
        %2339 = vmatprep.subr.bf16.mxu0 0
        %2340 = vmatpush1.bf16.msra.mxu0 0
        %2341 = vmatprep.subr.bf16.mxu0 0
        %2342 = vmatpush1.bf16.msra.mxu0 0
        %2343 = vmatprep.subr.bf16.mxu0 0
        %2344 = vmatpush1.bf16.msra.mxu0 0
        %2345 = vmatprep.subr.bf16.mxu0 0
        %2346 = vmatpush1.bf16.msra.mxu0 0
        %2347 = vmatprep.subr.bf16.mxu0 0
        %2348 = vmatpush1.bf16.msra.mxu0 0
        %2349 = vmatprep.mubr.bf16.mxu0 %v2218
        %2350 = vmatmul.mubr.bf16.gmra.mrb[0].mxu0 %v2204
        %v2351 = vpop.f32.mrb[0].mxu0
        %v2352 = vadd.f32 %v2143, %v2351
        %v2353 = vpop.f32.mrb[0].mxu0
        %v2354 = vadd.f32 %v2143, %v2353
        %v2355 = vpop.f32.mrb[0].mxu0
        %v2356 = vadd.f32 %v2148, %v2355
        %v2357 = vpop.f32.mrb[0].mxu0
        %v2358 = vadd.f32 %v2148, %v2357
        %2359 = vmatprep.mubr.bf16.mxu0 %v2221
        %2360 = vmatmul.mubr.bf16.gmra.mrb[0].mxu0 %v2206
        %v2361 = vpop.f32.mrb[0].mxu0
        %v2362 = vadd.f32 %v2153, %v2361
        %v2363 = vpop.f32.mrb[0].mxu0
        %v2364 = vadd.f32 %v2153, %v2363
        %v2365 = vpop.f32.mrb[0].mxu0
        %v2366 = vadd.f32 %v2158, %v2365
        %v2367 = vpop.f32.mrb[0].mxu0
        %v2368 = vadd.f32 %v2158, %v2367
        %2369 = vmatprep.mubr.bf16.mxu0 %v2224
        %2370 = vmatmul.mubr.bf16.gmra.mrb[0].mxu0 %v2208
        %v2371 = vpop.f32.mrb[0].mxu0
        %v2372 = vadd.f32 %v2163, %v2371
        %v2373 = vpop.f32.mrb[0].mxu0
        %v2374 = vadd.f32 %v2163, %v2373
        %v2375 = vpop.f32.mrb[0].mxu0
        %v2376 = vadd.f32 %v2168, %v2375
        %v2377 = vpop.f32.mrb[0].mxu0
        %v2378 = vadd.f32 %v2168, %v2377
        %2379 = vmatprep.mubr.bf16.mxu0 %v2227
        %2380 = vmatmul.mubr.bf16.gmra.mrb[0].mxu0 %v2210
        %v2381 = vpop.f32.mrb[0].mxu0
        %v2382 = vadd.f32 %v2173, %v2381
        %v2383 = vpop.f32.mrb[0].mxu0
        %v2384 = vadd.f32 %v2173, %v2383
        %v2385 = vpop.f32.mrb[0].mxu0
        %v2386 = vadd.f32 %v2178, %v2385
        %v2387 = vpop.f32.mrb[0].mxu0
        %v2388 = vadd.f32 %v2178, %v2387
        %2389 = vdwg.mxu0
        %2390 = vmatprep.subr.bf16.mxu0 %v795
        %2391 = vmatpush1.bf16.msra.mxu0 %v792
        %2392 = vmatprep.subr.bf16.mxu0 %v1978
        %2393 = vmatpush1.bf16.msra.mxu0 %v1974
        %2394 = vmatprep.subr.bf16.mxu0 %v2002
        %2395 = vmatpush1.bf16.msra.mxu0 %v1998
        %2396 = vmatprep.subr.bf16.mxu0 %v2026
        %2397 = vmatpush1.bf16.msra.mxu0 %v2022
        %2398 = vmatprep.subr.bf16.mxu0 %v2050
        %2399 = vmatpush1.bf16.msra.mxu0 %v2046
        %2400 = vmatprep.subr.bf16.mxu0 %v2074
        %2401 = vmatpush1.bf16.msra.mxu0 %v2070
        %2402 = vmatprep.subr.bf16.mxu0 %v2098
        %2403 = vmatpush1.bf16.msra.mxu0 %v2094
        %2404 = vmatprep.subr.bf16.mxu0 %v2122
        %2405 = vmatpush1.bf16.msra.mxu0 %v2118
        %2406 = vmatprep.subr.bf16.mxu0 %v1949
        %2407 = vmatpush1.bf16.msra.mxu0 %v1947
        %2408 = vmatprep.subr.bf16.mxu0 %v1687
        %2409 = vmatpush1.bf16.msra.mxu0 %v1684
        %2410 = vmatprep.subr.bf16.mxu0 %v2242
        %2411 = vmatpush1.bf16.msra.mxu0 %v2239
        %2412 = vmatprep.subr.bf16.mxu0 0
        %2413 = vmatpush1.bf16.msra.mxu0 0
        %2414 = vmatprep.subr.bf16.mxu0 0
        %2415 = vmatpush1.bf16.msra.mxu0 0
        %2416 = vmatprep.subr.bf16.mxu0 0
        %2417 = vmatpush1.bf16.msra.mxu0 0
        %2418 = vmatprep.subr.bf16.mxu0 0
        %2419 = vmatpush1.bf16.msra.mxu0 0
        %2420 = vmatprep.subr.bf16.mxu0 0
        %2421 = vmatpush1.bf16.msra.mxu0 0
        %2422 = vmatprep.mubr.bf16.mxu0 %v2218
        %2423 = vmatmul.mubr.bf16.gmra.mrb[0].mxu0 %v2204
        %v2424 = vpop.f32.mrb[0].mxu0
        %v2425 = vadd.f32 %v2143, %v2424
        %v2426 = vpop.f32.mrb[0].mxu0
        %v2427 = vadd.f32 %v2143, %v2426
        %v2428 = vpop.f32.mrb[0].mxu0
        %v2429 = vadd.f32 %v2148, %v2428
        %v2430 = vpop.f32.mrb[0].mxu0
        %v2431 = vadd.f32 %v2148, %v2430
        %2432 = vmatprep.mubr.bf16.mxu0 %v2221
        %2433 = vmatmul.mubr.bf16.gmra.mrb[0].mxu0 %v2206
        %v2434 = vpop.f32.mrb[0].mxu0
        %v2435 = vadd.f32 %v2153, %v2434
        %v2436 = vpop.f32.mrb[0].mxu0
        %v2437 = vadd.f32 %v2153, %v2436
        %v2438 = vpop.f32.mrb[0].mxu0
        %v2439 = vadd.f32 %v2158, %v2438
        %v2440 = vpop.f32.mrb[0].mxu0
        %v2441 = vadd.f32 %v2158, %v2440
        %2442 = vmatprep.mubr.bf16.mxu0 %v2224
        %2443 = vmatmul.mubr.bf16.gmra.mrb[0].mxu0 %v2208
        %v2444 = vpop.f32.mrb[0].mxu0
        %v2445 = vadd.f32 %v2163, %v2444
        %v2446 = vpop.f32.mrb[0].mxu0
        %v2447 = vadd.f32 %v2163, %v2446
        %v2448 = vpop.f32.mrb[0].mxu0
        %v2449 = vadd.f32 %v2168, %v2448
        %v2450 = vpop.f32.mrb[0].mxu0
        %v2451 = vadd.f32 %v2168, %v2450
        %2452 = vmatprep.mubr.bf16.mxu0 %v2227
        %2453 = vmatmul.mubr.bf16.gmra.mrb[0].mxu0 %v2210
        %v2454 = vpop.f32.mrb[0].mxu0
        %v2455 = vadd.f32 %v2173, %v2454
        %v2456 = vpop.f32.mrb[0].mxu0
        %v2457 = vadd.f32 %v2173, %v2456
        %v2458 = vpop.f32.mrb[0].mxu0
        %v2459 = vadd.f32 %v2178, %v2458
        %v2460 = vpop.f32.mrb[0].mxu0
        %v2461 = vadd.f32 %v2178, %v2460
        %2462 = vdwg.mxu0
        %v2463 = vmax.f32 %v2279, 0.0
        %v2464 = vmax.f32 %v2281, 0.0
        %v2465 = vmax.f32 %v2352, 0.0
        %v2466 = vmax.f32 %v2354, 0.0
        %v2467 = vmax.f32 %v2425, 0.0
        %v2468 = vmax.f32 %v2427, 0.0
        %v2469 = vmax.f32 %v2283, 0.0
        %v2470 = vmax.f32 %v2285, 0.0
        %v2471 = vmax.f32 %v2356, 0.0
        %v2472 = vmax.f32 %v2358, 0.0
        %v2473 = vmax.f32 %v2429, 0.0
        %v2474 = vmax.f32 %v2431, 0.0
        %v2475 = vmax.f32 %v2289, 0.0
        %v2476 = vmax.f32 %v2291, 0.0
        %v2477 = vmax.f32 %v2362, 0.0
        %v2478 = vmax.f32 %v2364, 0.0
        %v2479 = vmax.f32 %v2435, 0.0
        %v2480 = vmax.f32 %v2437, 0.0
        %v2481 = vmax.f32 %v2293, 0.0
        %v2482 = vmax.f32 %v2295, 0.0
        %v2483 = vmax.f32 %v2366, 0.0
        %v2484 = vmax.f32 %v2368, 0.0
        %v2485 = vmax.f32 %v2439, 0.0
        %v2486 = vmax.f32 %v2441, 0.0
        %v2487 = vmax.f32 %v2299, 0.0
        %v2488 = vmax.f32 %v2301, 0.0
        %v2489 = vmax.f32 %v2372, 0.0
        %v2490 = vmax.f32 %v2374, 0.0
        %v2491 = vmax.f32 %v2445, 0.0
        %v2492 = vmax.f32 %v2447, 0.0
        %v2493 = vmax.f32 %v2303, 0.0
        %v2494 = vmax.f32 %v2305, 0.0
        %v2495 = vmax.f32 %v2376, 0.0
        %v2496 = vmax.f32 %v2378, 0.0
        %v2497 = vmax.f32 %v2449, 0.0
        %v2498 = vmax.f32 %v2451, 0.0
        %v2499 = vmax.f32 %v2309, 0.0
        %v2500 = vmax.f32 %v2311, 0.0
        %v2501 = vmax.f32 %v2382, 0.0
        %v2502 = vmax.f32 %v2384, 0.0
        %v2503 = vmax.f32 %v2455, 0.0
        %v2504 = vmax.f32 %v2457, 0.0
        %v2505 = vmax.f32 %v2313, 0.0
        %v2506 = vmax.f32 %v2315, 0.0
        %v2507 = vmax.f32 %v2386, 0.0
        %v2508 = vmax.f32 %v2388, 0.0
        %v2509 = vmax.f32 %v2459, 0.0
        %v2510 = vmax.f32 %v2461, 0.0
        %v2511 = vpack.c.bf16 %v2469, %v2463
        %v2512 = vpack.c.bf16 %v2470, %v2464
        %v2513 = vpack.c.bf16 %v2471, %v2465
        %v2514 = vpack.c.bf16 %v2472, %v2466
        %v2515 = vpack.c.bf16 %v2473, %v2467
        %v2516 = vpack.c.bf16 %v2474, %v2468
        %v2517 = vpack.c.bf16 %v2481, %v2475
        %v2518 = vpack.c.bf16 %v2482, %v2476
        %v2519 = vpack.c.bf16 %v2483, %v2477
        %v2520 = vpack.c.bf16 %v2484, %v2478
        %v2521 = vpack.c.bf16 %v2485, %v2479
        %v2522 = vpack.c.bf16 %v2486, %v2480
        %v2523 = vpack.c.bf16 %v2493, %v2487
        %v2524 = vpack.c.bf16 %v2494, %v2488
        %v2525 = vpack.c.bf16 %v2495, %v2489
        %v2526 = vpack.c.bf16 %v2496, %v2490
        %v2527 = vpack.c.bf16 %v2497, %v2491
        %v2528 = vpack.c.bf16 %v2498, %v2492
        %v2529 = vpack.c.bf16 %v2505, %v2499
        %v2530 = vpack.c.bf16 %v2506, %v2500
        %v2531 = vpack.c.bf16 %v2507, %v2501
        %v2532 = vpack.c.bf16 %v2508, %v2502
        %v2533 = vpack.c.bf16 %v2509, %v2503
        %v2534 = vpack.c.bf16 %v2510, %v2504
        %v2535 = vld [vmem:[#allocation10] sm:$0xf]
        %v2536 = vld [vmem:[#allocation10 + $0x4] sm:$0xf]
        %v2537 = vld [vmem:[#allocation10 + $0x8] sm:$0xf]
        %v2538 = vld [vmem:[#allocation10 + $0xc] sm:$0xf]
        %v2539 = vld [vmem:[#allocation11] sm:$0xff]
        %v2540 = vld [vmem:[#allocation11 + $0x8] sm:$0xff]
        %v2541 = vld [vmem:[#allocation11 + $0x10] sm:$0xff]
        %v2542 = vld [vmem:[#allocation11 + $0x18] sm:$0xff]
        %2544 = vset.pattern.permute.xlu0 0
        %2545 = vperm.xlu0 %2544, %v2539
        %v2546 = vpop.permute.xlu0 %2545
        %2549 = vset.pattern.permute.xlu0 0
        %2550 = vperm.xlu0 %2549, %v2540
        %v2551 = vpop.permute.xlu0 %2550
        %2554 = vset.pattern.permute.xlu0 0
        %2555 = vperm.xlu0 %2554, %v2541
        %v2556 = vpop.permute.xlu0 %2555
        %2559 = vset.pattern.permute.xlu0 0
        %2560 = vperm.xlu0 %2559, %v2542
        %v2561 = vpop.permute.xlu0 %2560
        %v2567 = vunpack.c.l.b16 %v2535
        %v2568 = vunpack.c.l.b16 %v2536
        %v2569 = vunpack.c.l.b16 %v2537
        %v2570 = vunpack.c.l.b16 %v2538
        %v2571 = vpack.c.b16 %v2568, %v2567
        %v2572 = vpack.c.b16 %v2570, %v2569
        %vm2573 = vcmask 523264
        %v2575 = vsel %vm2573, %v2571, 0
        %v2578 = vsel %vm2573, %v2572, 0
        %2580 = vmatprep.subr.bf16.mxu0 %v2512
        %2581 = vmatpush1.bf16.msra.mxu0 %v2511
        %2582 = vmatprep.subr.bf16.mxu0 %v2518
        %2583 = vmatpush1.bf16.msra.mxu0 %v2517
        %2584 = vmatprep.subr.bf16.mxu0 %v2524
        %2585 = vmatpush1.bf16.msra.mxu0 %v2523
        %2586 = vmatprep.subr.bf16.mxu0 %v2530
        %2587 = vmatpush1.bf16.msra.mxu0 %v2529
        %2588 = vmatprep.subr.bf16.mxu0 0
        %2589 = vmatpush1.bf16.msra.mxu0 0
        %2590 = vmatprep.subr.bf16.mxu0 0
        %2591 = vmatpush1.bf16.msra.mxu0 0
        %2592 = vmatprep.subr.bf16.mxu0 0
        %2593 = vmatpush1.bf16.msra.mxu0 0
        %2594 = vmatprep.subr.bf16.mxu0 0
        %2595 = vmatpush1.bf16.msra.mxu0 0
        %2596 = vmatprep.subr.bf16.mxu0 0
        %2597 = vmatpush1.bf16.msra.mxu0 0
        %2598 = vmatprep.subr.bf16.mxu0 0
        %2599 = vmatpush1.bf16.msra.mxu0 0
        %2600 = vmatprep.subr.bf16.mxu0 0
        %2601 = vmatpush1.bf16.msra.mxu0 0
        %2602 = vmatprep.subr.bf16.mxu0 0
        %2603 = vmatpush1.bf16.msra.mxu0 0
        %2604 = vmatprep.subr.bf16.mxu0 0
        %2605 = vmatpush1.bf16.msra.mxu0 0
        %2606 = vmatprep.subr.bf16.mxu0 0
        %2607 = vmatpush1.bf16.msra.mxu0 0
        %2608 = vmatprep.subr.bf16.mxu0 0
        %2609 = vmatpush1.bf16.msra.mxu0 0
        %2610 = vmatprep.subr.bf16.mxu0 0
        %2611 = vmatpush1.bf16.msra.mxu0 0
        %2612 = vmatprep.mubr.bf16.mxu0 0
        %2613 = vmatmul.mubr.bf16.gmra.mrb[0].mxu0 %v2575
        %v2614 = vpop.f32.mrb[0].mxu0
        %v2615 = vadd.f32 %v2546, %v2614
        %v2616 = vpop.f32.mrb[0].mxu0
        %v2617 = vadd.f32 %v2546, %v2616
        %v2618 = vpop.f32.mrb[0].mxu0
        %v2619 = vadd.f32 %v2551, %v2618
        %v2620 = vpop.f32.mrb[0].mxu0
        %v2621 = vadd.f32 %v2551, %v2620
        %2622 = vmatprep.mubr.bf16.mxu0 0
        %2623 = vmatmul.mubr.bf16.gmra.mrb[0].mxu0 %v2578
        %v2624 = vpop.f32.mrb[0].mxu0
        %v2625 = vadd.f32 %v2556, %v2624
        %v2626 = vpop.f32.mrb[0].mxu0
        %v2627 = vadd.f32 %v2556, %v2626
        %v2628 = vpop.f32.mrb[0].mxu0
        %v2629 = vadd.f32 %v2561, %v2628
        %v2630 = vpop.f32.mrb[0].mxu0
        %v2631 = vadd.f32 %v2561, %v2630
        %2632 = vdwg.mxu0
        %2633 = vmatprep.subr.bf16.mxu0 %v2514
        %2634 = vmatpush1.bf16.msra.mxu0 %v2513
        %2635 = vmatprep.subr.bf16.mxu0 %v2520
        %2636 = vmatpush1.bf16.msra.mxu0 %v2519
        %2637 = vmatprep.subr.bf16.mxu0 %v2526
        %2638 = vmatpush1.bf16.msra.mxu0 %v2525
        %2639 = vmatprep.subr.bf16.mxu0 %v2532
        %2640 = vmatpush1.bf16.msra.mxu0 %v2531
        %2641 = vmatprep.subr.bf16.mxu0 0
        %2642 = vmatpush1.bf16.msra.mxu0 0
        %2643 = vmatprep.subr.bf16.mxu0 0
        %2644 = vmatpush1.bf16.msra.mxu0 0
        %2645 = vmatprep.subr.bf16.mxu0 0
        %2646 = vmatpush1.bf16.msra.mxu0 0
        %2647 = vmatprep.subr.bf16.mxu0 0
        %2648 = vmatpush1.bf16.msra.mxu0 0
        %2649 = vmatprep.subr.bf16.mxu0 0
        %2650 = vmatpush1.bf16.msra.mxu0 0
        %2651 = vmatprep.subr.bf16.mxu0 0
        %2652 = vmatpush1.bf16.msra.mxu0 0
        %2653 = vmatprep.subr.bf16.mxu0 0
        %2654 = vmatpush1.bf16.msra.mxu0 0
        %2655 = vmatprep.subr.bf16.mxu0 0
        %2656 = vmatpush1.bf16.msra.mxu0 0
        %2657 = vmatprep.subr.bf16.mxu0 0
        %2658 = vmatpush1.bf16.msra.mxu0 0
        %2659 = vmatprep.subr.bf16.mxu0 0
        %2660 = vmatpush1.bf16.msra.mxu0 0
        %2661 = vmatprep.subr.bf16.mxu0 0
        %2662 = vmatpush1.bf16.msra.mxu0 0
        %2663 = vmatprep.subr.bf16.mxu0 0
        %2664 = vmatpush1.bf16.msra.mxu0 0
        %2665 = vmatprep.mubr.bf16.mxu0 0
        %2666 = vmatmul.mubr.bf16.gmra.mrb[0].mxu0 %v2575
        %v2667 = vpop.f32.mrb[0].mxu0
        %v2668 = vadd.f32 %v2546, %v2667
        %v2669 = vpop.f32.mrb[0].mxu0
        %v2670 = vadd.f32 %v2546, %v2669
        %v2671 = vpop.f32.mrb[0].mxu0
        %v2672 = vadd.f32 %v2551, %v2671
        %v2673 = vpop.f32.mrb[0].mxu0
        %v2674 = vadd.f32 %v2551, %v2673
        %2675 = vmatprep.mubr.bf16.mxu0 0
        %2676 = vmatmul.mubr.bf16.gmra.mrb[0].mxu0 %v2578
        %v2677 = vpop.f32.mrb[0].mxu0
        %v2678 = vadd.f32 %v2556, %v2677
        %v2679 = vpop.f32.mrb[0].mxu0
        %v2680 = vadd.f32 %v2556, %v2679
        %v2681 = vpop.f32.mrb[0].mxu0
        %v2682 = vadd.f32 %v2561, %v2681
        %v2683 = vpop.f32.mrb[0].mxu0
        %v2684 = vadd.f32 %v2561, %v2683
        %2685 = vdwg.mxu0
        %2686 = vmatprep.subr.bf16.mxu0 %v2516
        %2687 = vmatpush1.bf16.msra.mxu0 %v2515
        %2688 = vmatprep.subr.bf16.mxu0 %v2522
        %2689 = vmatpush1.bf16.msra.mxu0 %v2521
        %2690 = vmatprep.subr.bf16.mxu0 %v2528
        %2691 = vmatpush1.bf16.msra.mxu0 %v2527
        %2692 = vmatprep.subr.bf16.mxu0 %v2534
        %2693 = vmatpush1.bf16.msra.mxu0 %v2533
        %2694 = vmatprep.subr.bf16.mxu0 0
        %2695 = vmatpush1.bf16.msra.mxu0 0
        %2696 = vmatprep.subr.bf16.mxu0 0
        %2697 = vmatpush1.bf16.msra.mxu0 0
        %2698 = vmatprep.subr.bf16.mxu0 0
        %2699 = vmatpush1.bf16.msra.mxu0 0
        %2700 = vmatprep.subr.bf16.mxu0 0
        %2701 = vmatpush1.bf16.msra.mxu0 0
        %2702 = vmatprep.subr.bf16.mxu0 0
        %2703 = vmatpush1.bf16.msra.mxu0 0
        %2704 = vmatprep.subr.bf16.mxu0 0
        %2705 = vmatpush1.bf16.msra.mxu0 0
        %2706 = vmatprep.subr.bf16.mxu0 0
        %2707 = vmatpush1.bf16.msra.mxu0 0
        %2708 = vmatprep.subr.bf16.mxu0 0
        %2709 = vmatpush1.bf16.msra.mxu0 0
        %2710 = vmatprep.subr.bf16.mxu0 0
        %2711 = vmatpush1.bf16.msra.mxu0 0
        %2712 = vmatprep.subr.bf16.mxu0 0
        %2713 = vmatpush1.bf16.msra.mxu0 0
        %2714 = vmatprep.subr.bf16.mxu0 0
        %2715 = vmatpush1.bf16.msra.mxu0 0
        %2716 = vmatprep.subr.bf16.mxu0 0
        %2717 = vmatpush1.bf16.msra.mxu0 0
        %2718 = vmatprep.mubr.bf16.mxu0 0
        %2719 = vmatmul.mubr.bf16.gmra.mrb[0].mxu0 %v2575
        %v2720 = vpop.f32.mrb[0].mxu0
        %v2721 = vadd.f32 %v2546, %v2720
        %v2722 = vpop.f32.mrb[0].mxu0
        %v2723 = vadd.f32 %v2546, %v2722
        %v2724 = vpop.f32.mrb[0].mxu0
        %v2725 = vadd.f32 %v2551, %v2724
        %v2726 = vpop.f32.mrb[0].mxu0
        %v2727 = vadd.f32 %v2551, %v2726
        %2728 = vmatprep.mubr.bf16.mxu0 0
        %2729 = vmatmul.mubr.bf16.gmra.mrb[0].mxu0 %v2578
        %v2730 = vpop.f32.mrb[0].mxu0
        %v2731 = vadd.f32 %v2556, %v2730
        %v2732 = vpop.f32.mrb[0].mxu0
        %v2733 = vadd.f32 %v2556, %v2732
        %v2734 = vpop.f32.mrb[0].mxu0
        %v2735 = vadd.f32 %v2561, %v2734
        %v2736 = vpop.f32.mrb[0].mxu0
        %v2737 = vadd.f32 %v2561, %v2736
        %2738 = vdwg.mxu0
        %v2739 = vmax.f32 %v2615, 0.0
        %v2740 = vmax.f32 %v2617, 0.0
        %v2741 = vmax.f32 %v2668, 0.0
        %v2742 = vmax.f32 %v2670, 0.0
        %v2743 = vmax.f32 %v2721, 0.0
        %v2744 = vmax.f32 %v2723, 0.0
        %v2745 = vmax.f32 %v2619, 0.0
        %v2746 = vmax.f32 %v2621, 0.0
        %v2747 = vmax.f32 %v2672, 0.0
        %v2748 = vmax.f32 %v2674, 0.0
        %v2749 = vmax.f32 %v2725, 0.0
        %v2750 = vmax.f32 %v2727, 0.0
        %v2751 = vmax.f32 %v2625, 0.0
        %v2752 = vmax.f32 %v2627, 0.0
        %v2753 = vmax.f32 %v2678, 0.0
        %v2754 = vmax.f32 %v2680, 0.0
        %v2755 = vmax.f32 %v2731, 0.0
        %v2756 = vmax.f32 %v2733, 0.0
        %v2757 = vmax.f32 %v2629, 0.0
        %v2758 = vmax.f32 %v2631, 0.0
        %v2759 = vmax.f32 %v2682, 0.0
        %v2760 = vmax.f32 %v2684, 0.0
        %v2761 = vmax.f32 %v2735, 0.0
        %v2762 = vmax.f32 %v2737, 0.0
        %v2763 = vlaneseq
        %v2764 = vand.u32 %v2763, 127
        %v2765 = vadd.s32 %v2764, 128
        %v2766 = vadd.s32 %v2764, 256
        %v2767 = vadd.s32 %v2764, 384
        %v2768 = vadd.s32 %v2764, 512
        %v2769 = vadd.s32 %v2764, 640
        %s2770 = ssub.s32 2, %s436
        %p2771 = scmp.gt.s32.totalorder %s2770, 0
        %s2772 = scalar_select %p2771, %s2770, 0
        %s2773 = smul.u32 %s2772, 32
        %s2774 = ssub.s32 18, %s436
        %p2775 = scmp.lt.s32.totalorder %s2774, 21
        %s2776 = scalar_select %p2775, %s2774, 21
        %s2777 = smul.u32 %s2776, 32
        %v2778 = vstv %s2773
        %vm2779 = vcmp.ge.s32.totalorder %v2764, %v2778
        %vm2780 = vcmp.ge.s32.totalorder %v2765, %v2778
        %vm2781 = vcmp.ge.s32.totalorder %v2766, %v2778
        %vm2782 = vcmp.ge.s32.totalorder %v2767, %v2778
        %vm2783 = vcmp.ge.s32.totalorder %v2768, %v2778
        %vm2784 = vcmp.ge.s32.totalorder %v2769, %v2778
        %v2785 = vstv %s2777
        %vm2786 = vcmp.lt.s32.totalorder %v2764, %v2785
        %vm2787 = vcmp.lt.s32.totalorder %v2765, %v2785
        %vm2788 = vcmp.lt.s32.totalorder %v2766, %v2785
        %vm2789 = vcmp.lt.s32.totalorder %v2767, %v2785
        %vm2790 = vcmp.lt.s32.totalorder %v2768, %v2785
        %vm2791 = vcmp.lt.s32.totalorder %v2769, %v2785
        %vm2792 = vmand %vm2779, %vm2786
        %vm2793 = vmand %vm2780, %vm2787
        %vm2794 = vmand %vm2781, %vm2788
        %vm2795 = vmand %vm2782, %vm2789
        %vm2796 = vmand %vm2783, %vm2790
        %vm2797 = vmand %vm2784, %vm2791
        %v2798 = vsel %vm2792, 1, 0
        %v2799 = vsel %vm2793, 1, 0
        %v2800 = vsel %vm2794, 1, 0
        %v2801 = vsel %vm2795, 1, 0
        %v2802 = vsel %vm2796, 1, 0
        %v2803 = vsel %vm2797, 1, 0
        %v2804 = vcvt.s32.f32 %v2798
        %v2805 = vcvt.s32.f32 %v2799
        %v2806 = vcvt.s32.f32 %v2800
        %v2807 = vcvt.s32.f32 %v2801
        %v2808 = vcvt.s32.f32 %v2802
        %v2809 = vcvt.s32.f32 %v2803
        %v2810 = vld [vmem:[#allocation5] sm:$0x3f]
        %v2812 = vlaneseq
        %v2813 = vshrl.u32 %v2812, 7
        %v2814 = vsub.s32 0, %v2813
        %v2815 = vrot.slane %v2810, %v2814
        %v2816 = vlaneseq
        %v2817 = vshrl.u32 %v2816, 7
        %v2818 = vsub.s32 1, %v2817
        %v2819 = vrot.slane %v2810, %v2818
        %v2820 = vlaneseq
        %v2821 = vshrl.u32 %v2820, 7
        %v2822 = vsub.s32 2, %v2821
        %v2823 = vrot.slane %v2810, %v2822
        %v2824 = vlaneseq
        %v2825 = vshrl.u32 %v2824, 7
        %v2826 = vsub.s32 3, %v2825
        %v2827 = vrot.slane %v2810, %v2826
        %v2828 = vlaneseq
        %v2829 = vshrl.u32 %v2828, 7
        %v2830 = vsub.s32 4, %v2829
        %v2831 = vrot.slane %v2810, %v2830
        %v2832 = vlaneseq
        %v2833 = vshrl.u32 %v2832, 7
        %v2834 = vsub.s32 5, %v2833
        %v2835 = vrot.slane %v2810, %v2834
        %v2842 = vmul.f32 %v2804, %v2815
        %v2843 = vmul.f32 %v2805, %v2819
        %v2844 = vmul.f32 %v2806, %v2823
        %v2845 = vmul.f32 %v2807, %v2827
        %v2846 = vmul.f32 %v2808, %v2831
        %v2847 = vmul.f32 %v2809, %v2835
        %v2848 = vlaneseq
        %v2849 = vshrl.u32 %v2848, 7
        %v2850 = vsub.s32 0, %v2849
        %v2851 = vrot.slane %v2842, %v2850
        %v2852 = vlaneseq
        %v2853 = vshrl.u32 %v2852, 7
        %v2854 = vsub.s32 0, %v2853
        %v2855 = vrot.slane %v2843, %v2854
        %v2856 = vlaneseq
        %v2857 = vshrl.u32 %v2856, 7
        %v2858 = vsub.s32 0, %v2857
        %v2859 = vrot.slane %v2844, %v2858
        %v2860 = vlaneseq
        %v2861 = vshrl.u32 %v2860, 7
        %v2862 = vsub.s32 0, %v2861
        %v2863 = vrot.slane %v2845, %v2862
        %v2864 = vlaneseq
        %v2865 = vshrl.u32 %v2864, 7
        %v2866 = vsub.s32 0, %v2865
        %v2867 = vrot.slane %v2846, %v2866
        %v2868 = vlaneseq
        %v2869 = vshrl.u32 %v2868, 7
        %v2870 = vsub.s32 0, %v2869
        %v2871 = vrot.slane %v2847, %v2870
        %v2872 = vmul.f32 %v2739, %v2851
        %v2873 = vmul.f32 %v2740, %v2855
        %v2874 = vmul.f32 %v2741, %v2859
        %v2875 = vmul.f32 %v2742, %v2863
        %v2876 = vmul.f32 %v2743, %v2867
        %v2877 = vmul.f32 %v2744, %v2871
        %v2878 = vmul.f32 %v2745, %v2851
        %v2879 = vmul.f32 %v2746, %v2855
        %v2880 = vmul.f32 %v2747, %v2859
        %v2881 = vmul.f32 %v2748, %v2863
        %v2882 = vmul.f32 %v2749, %v2867
        %v2883 = vmul.f32 %v2750, %v2871
        %v2884 = vmul.f32 %v2751, %v2851
        %v2885 = vmul.f32 %v2752, %v2855
        %v2886 = vmul.f32 %v2753, %v2859
        %v2887 = vmul.f32 %v2754, %v2863
        %v2888 = vmul.f32 %v2755, %v2867
        %v2889 = vmul.f32 %v2756, %v2871
        %v2890 = vmul.f32 %v2757, %v2851
        %v2891 = vmul.f32 %v2758, %v2855
        %v2892 = vmul.f32 %v2759, %v2859
        %v2893 = vmul.f32 %v2760, %v2863
        %v2894 = vmul.f32 %v2761, %v2867
        %v2895 = vmul.f32 %v2762, %v2871
        %v2896 = vpack.c.bf16 %v2878, %v2872
        %v2897 = vpack.c.bf16 %v2879, %v2873
        %v2898 = vpack.c.bf16 %v2880, %v2874
        %v2899 = vpack.c.bf16 %v2881, %v2875
        %v2900 = vpack.c.bf16 %v2882, %v2876
        %v2901 = vpack.c.bf16 %v2883, %v2877
        %v2902 = vpack.c.bf16 %v2890, %v2884
        %v2903 = vpack.c.bf16 %v2891, %v2885
        %v2904 = vpack.c.bf16 %v2892, %v2886
        %v2905 = vpack.c.bf16 %v2893, %v2887
        %v2906 = vpack.c.bf16 %v2894, %v2888
        %v2907 = vpack.c.bf16 %v2895, %v2889
        %v2908 = vld [vmem:[#allocation13] sm:$0xf]
        %v2909 = vld [vmem:[#allocation13 + $0x4] sm:$0xf]
        %v2910 = vld [vmem:[#allocation13 + $0x8] sm:$0xf]
        %v2911 = vld [vmem:[#allocation13 + $0xc] sm:$0xf]
        %v2912 = vld [vmem:[#allocation13 + $0x10] sm:$0xf]
        %v2913 = vld [vmem:[#allocation13 + $0x14] sm:$0xf]
        %v2914 = vld [vmem:[#allocation13 + $0x18] sm:$0x1]
        %v2922 = vunpack.c.l.b16 %v2908
        %v2923 = vunpack.c.l.b16 %v2909
        %v2924 = vunpack.c.l.b16 %v2910
        %v2925 = vunpack.c.l.b16 %v2911
        %v2926 = vunpack.c.l.b16 %v2912
        %v2927 = vunpack.c.l.b16 %v2913
        %v2928 = vunpack.c.l.b16 %v2914
        %v2929 = vpack.c.b16 %v2923, %v2922
        %v2930 = vpack.c.b16 %v2925, %v2924
        %v2931 = vpack.c.b16 %v2927, %v2926
        %v2932 = vpack.c.b16 %v2928, %v2928
        %vm2933 = vcmask 261120
        %v2935 = vsel %vm2933, %v2929, 0
        %v2938 = vsel %vm2933, %v2930, 0
        %v2941 = vsel %vm2933, %v2931, 0
        %v2944 = vsel %vm2933, %v2932, 0
        %2946 = vmatprep.subr.bf16.mxu0 %v2897
        %2947 = vmatpush1.bf16.msra.mxu0 %v2896
        %2948 = vmatprep.subr.bf16.mxu0 %v2903
        %2949 = vmatpush1.bf16.msra.mxu0 %v2902
        %2950 = vmatprep.subr.bf16.mxu0 0
        %2951 = vmatpush1.bf16.msra.mxu0 0
        %2952 = vmatprep.subr.bf16.mxu0 0
        %2953 = vmatpush1.bf16.msra.mxu0 0
        %2954 = vmatprep.subr.bf16.mxu0 0
        %2955 = vmatpush1.bf16.msra.mxu0 0
        %2956 = vmatprep.subr.bf16.mxu0 0
        %2957 = vmatpush1.bf16.msra.mxu0 0
        %2958 = vmatprep.subr.bf16.mxu0 0
        %2959 = vmatpush1.bf16.msra.mxu0 0
        %2960 = vmatprep.subr.bf16.mxu0 0
        %2961 = vmatpush1.bf16.msra.mxu0 0
        %2962 = vmatprep.subr.bf16.mxu0 0
        %2963 = vmatpush1.bf16.msra.mxu0 0
        %2964 = vmatprep.subr.bf16.mxu0 0
        %2965 = vmatpush1.bf16.msra.mxu0 0
        %2966 = vmatprep.subr.bf16.mxu0 0
        %2967 = vmatpush1.bf16.msra.mxu0 0
        %2968 = vmatprep.subr.bf16.mxu0 0
        %2969 = vmatpush1.bf16.msra.mxu0 0
        %2970 = vmatprep.subr.bf16.mxu0 0
        %2971 = vmatpush1.bf16.msra.mxu0 0
        %2972 = vmatprep.subr.bf16.mxu0 0
        %2973 = vmatpush1.bf16.msra.mxu0 0
        %2974 = vmatprep.subr.bf16.mxu0 0
        %2975 = vmatpush1.bf16.msra.mxu0 0
        %2976 = vmatprep.subr.bf16.mxu0 0
        %2977 = vmatpush1.bf16.msra.mxu0 0
        %2978 = vmatprep.mubr.bf16.mxu0 0
        %2979 = vmatmul.mubr.bf16.gmra.mrb[0].mxu0 %v2935
        %v2980 = vpop.f32.mrb[0].mxu0
        %v2981 = vadd.f32 0.0, %v2980
        %v2982 = vpop.f32.mrb[0].mxu0
        %v2983 = vadd.f32 0.0, %v2982
        %v2984 = vpop.f32.mrb[0].mxu0
        %v2985 = vadd.f32 0.0, %v2984
        %v2986 = vpop.f32.mrb[0].mxu0
        %v2987 = vadd.f32 0.0, %v2986
        %2988 = vmatprep.mubr.bf16.mxu0 0
        %2989 = vmatmul.mubr.bf16.gmra.mrb[0].mxu0 %v2938
        %v2990 = vpop.f32.mrb[0].mxu0
        %v2991 = vadd.f32 0.0, %v2990
        %v2992 = vpop.f32.mrb[0].mxu0
        %v2993 = vadd.f32 0.0, %v2992
        %v2994 = vpop.f32.mrb[0].mxu0
        %v2995 = vadd.f32 0.0, %v2994
        %v2996 = vpop.f32.mrb[0].mxu0
        %v2997 = vadd.f32 0.0, %v2996
        %2998 = vmatprep.mubr.bf16.mxu0 0
        %2999 = vmatmul.mubr.bf16.gmra.mrb[0].mxu0 %v2941
        %v3000 = vpop.f32.mrb[0].mxu0
        %v3001 = vadd.f32 0.0, %v3000
        %v3002 = vpop.f32.mrb[0].mxu0
        %v3003 = vadd.f32 0.0, %v3002
        %v3004 = vpop.f32.mrb[0].mxu0
        %v3005 = vpop.f32.mrb[0].mxu0
        %v3006 = vadd.f32 0.0, %v3005
        %3007 = vmatprep.mubr.bf16.mxu0 0
        %3008 = vmatmul.mubr.bf16.gmra.mrb[0].mxu0 %v2944
        %v3009 = vpop.f32.mrb[0].mxu0
        %v3010 = vpop.f32.mrb[0].mxu0
        %v3011 = vadd.f32 0.0, %v3010
        %v3012 = vpop.f32.mrb[0].mxu0
        %v3013 = vpop.f32.mrb[0].mxu0
        %3014 = vdwg.mxu0
        %3015 = vmatprep.subr.bf16.mxu0 %v2899
        %3016 = vmatpush1.bf16.msra.mxu0 %v2898
        %3017 = vmatprep.subr.bf16.mxu0 %v2905
        %3018 = vmatpush1.bf16.msra.mxu0 %v2904
        %3019 = vmatprep.subr.bf16.mxu0 0
        %3020 = vmatpush1.bf16.msra.mxu0 0
        %3021 = vmatprep.subr.bf16.mxu0 0
        %3022 = vmatpush1.bf16.msra.mxu0 0
        %3023 = vmatprep.subr.bf16.mxu0 0
        %3024 = vmatpush1.bf16.msra.mxu0 0
        %3025 = vmatprep.subr.bf16.mxu0 0
        %3026 = vmatpush1.bf16.msra.mxu0 0
        %3027 = vmatprep.subr.bf16.mxu0 0
        %3028 = vmatpush1.bf16.msra.mxu0 0
        %3029 = vmatprep.subr.bf16.mxu0 0
        %3030 = vmatpush1.bf16.msra.mxu0 0
        %3031 = vmatprep.subr.bf16.mxu0 0
        %3032 = vmatpush1.bf16.msra.mxu0 0
        %3033 = vmatprep.subr.bf16.mxu0 0
        %3034 = vmatpush1.bf16.msra.mxu0 0
        %3035 = vmatprep.subr.bf16.mxu0 0
        %3036 = vmatpush1.bf16.msra.mxu0 0
        %3037 = vmatprep.subr.bf16.mxu0 0
        %3038 = vmatpush1.bf16.msra.mxu0 0
        %3039 = vmatprep.subr.bf16.mxu0 0
        %3040 = vmatpush1.bf16.msra.mxu0 0
        %3041 = vmatprep.subr.bf16.mxu0 0
        %3042 = vmatpush1.bf16.msra.mxu0 0
        %3043 = vmatprep.subr.bf16.mxu0 0
        %3044 = vmatpush1.bf16.msra.mxu0 0
        %3045 = vmatprep.subr.bf16.mxu0 0
        %3046 = vmatpush1.bf16.msra.mxu0 0
        %3047 = vmatprep.mubr.bf16.mxu0 0
        %3048 = vmatmul.mubr.bf16.gmra.mrb[0].mxu0 %v2935
        %v3049 = vpop.f32.mrb[0].mxu0
        %v3050 = vadd.f32 0.0, %v3049
        %v3051 = vpop.f32.mrb[0].mxu0
        %v3052 = vadd.f32 0.0, %v3051
        %v3053 = vpop.f32.mrb[0].mxu0
        %v3054 = vadd.f32 0.0, %v3053
        %v3055 = vpop.f32.mrb[0].mxu0
        %v3056 = vadd.f32 0.0, %v3055
        %3057 = vmatprep.mubr.bf16.mxu0 0
        %3058 = vmatmul.mubr.bf16.gmra.mrb[0].mxu0 %v2938
        %v3059 = vpop.f32.mrb[0].mxu0
        %v3060 = vadd.f32 0.0, %v3059
        %v3061 = vpop.f32.mrb[0].mxu0
        %v3062 = vadd.f32 0.0, %v3061
        %v3063 = vpop.f32.mrb[0].mxu0
        %v3064 = vadd.f32 0.0, %v3063
        %v3065 = vpop.f32.mrb[0].mxu0
        %v3066 = vadd.f32 0.0, %v3065
        %3067 = vmatprep.mubr.bf16.mxu0 0
        %3068 = vmatmul.mubr.bf16.gmra.mrb[0].mxu0 %v2941
        %v3069 = vpop.f32.mrb[0].mxu0
        %v3070 = vadd.f32 0.0, %v3069
        %v3071 = vpop.f32.mrb[0].mxu0
        %v3072 = vadd.f32 0.0, %v3071
        %v3073 = vpop.f32.mrb[0].mxu0
        %v3074 = vadd.f32 0.0, %v3073
        %v3075 = vpop.f32.mrb[0].mxu0
        %v3076 = vadd.f32 0.0, %v3075
        %3077 = vmatprep.mubr.bf16.mxu0 0
        %3078 = vmatmul.mubr.bf16.gmra.mrb[0].mxu0 %v2944
        %v3079 = vpop.f32.mrb[0].mxu0
        %v3080 = vadd.f32 0.0, %v3079
        %v3081 = vpop.f32.mrb[0].mxu0
        %v3082 = vadd.f32 0.0, %v3081
        %v3083 = vpop.f32.mrb[0].mxu0
        %v3084 = vpop.f32.mrb[0].mxu0
        %3085 = vdwg.mxu0
        %3086 = vmatprep.subr.bf16.mxu0 %v2901
        %3087 = vmatpush1.bf16.msra.mxu0 %v2900
        %3088 = vmatprep.subr.bf16.mxu0 %v2907
        %3089 = vmatpush1.bf16.msra.mxu0 %v2906
        %3090 = vmatprep.subr.bf16.mxu0 0
        %3091 = vmatpush1.bf16.msra.mxu0 0
        %3092 = vmatprep.subr.bf16.mxu0 0
        %3093 = vmatpush1.bf16.msra.mxu0 0
        %3094 = vmatprep.subr.bf16.mxu0 0
        %3095 = vmatpush1.bf16.msra.mxu0 0
        %3096 = vmatprep.subr.bf16.mxu0 0
        %3097 = vmatpush1.bf16.msra.mxu0 0
        %3098 = vmatprep.subr.bf16.mxu0 0
        %3099 = vmatpush1.bf16.msra.mxu0 0
        %3100 = vmatprep.subr.bf16.mxu0 0
        %3101 = vmatpush1.bf16.msra.mxu0 0
        %3102 = vmatprep.subr.bf16.mxu0 0
        %3103 = vmatpush1.bf16.msra.mxu0 0
        %3104 = vmatprep.subr.bf16.mxu0 0
        %3105 = vmatpush1.bf16.msra.mxu0 0
        %3106 = vmatprep.subr.bf16.mxu0 0
        %3107 = vmatpush1.bf16.msra.mxu0 0
        %3108 = vmatprep.subr.bf16.mxu0 0
        %3109 = vmatpush1.bf16.msra.mxu0 0
        %3110 = vmatprep.subr.bf16.mxu0 0
        %3111 = vmatpush1.bf16.msra.mxu0 0
        %3112 = vmatprep.subr.bf16.mxu0 0
        %3113 = vmatpush1.bf16.msra.mxu0 0
        %3114 = vmatprep.subr.bf16.mxu0 0
        %3115 = vmatpush1.bf16.msra.mxu0 0
        %3116 = vmatprep.subr.bf16.mxu0 0
        %3117 = vmatpush1.bf16.msra.mxu0 0
        %3118 = vmatprep.mubr.bf16.mxu0 0
        %3119 = vmatmul.mubr.bf16.gmra.mrb[0].mxu0 %v2935
        %v3120 = vpop.f32.mrb[0].mxu0
        %v3121 = vadd.f32 0.0, %v3120
        %v3122 = vpop.f32.mrb[0].mxu0
        %v3123 = vpop.f32.mrb[0].mxu0
        %v3124 = vadd.f32 0.0, %v3123
        %v3125 = vpop.f32.mrb[0].mxu0
        %3126 = vmatprep.mubr.bf16.mxu0 0
        %3127 = vmatmul.mubr.bf16.gmra.mrb[0].mxu0 %v2938
        %v3128 = vpop.f32.mrb[0].mxu0
        %v3129 = vadd.f32 0.0, %v3128
        %v3130 = vpop.f32.mrb[0].mxu0
        %v3131 = vpop.f32.mrb[0].mxu0
        %v3132 = vadd.f32 0.0, %v3131
        %v3133 = vpop.f32.mrb[0].mxu0
        %3134 = vmatprep.mubr.bf16.mxu0 0
        %3135 = vmatmul.mubr.bf16.gmra.mrb[0].mxu0 %v2941
        %v3136 = vpop.f32.mrb[0].mxu0
        %v3137 = vadd.f32 0.0, %v3136
        %v3138 = vpop.f32.mrb[0].mxu0
        %v3139 = vpop.f32.mrb[0].mxu0
        %v3140 = vadd.f32 0.0, %v3139
        %v3141 = vpop.f32.mrb[0].mxu0
        %v3142 = vadd.f32 0.0, %v3141
        %3143 = vmatprep.mubr.bf16.mxu0 0
        %3144 = vmatmul.mubr.bf16.gmra.mrb[0].mxu0 %v2944
        %v3145 = vpop.f32.mrb[0].mxu0
        %v3146 = vadd.f32 0.0, %v3145
        %v3147 = vpop.f32.mrb[0].mxu0
        %v3148 = vadd.f32 0.0, %v3147
        %v3149 = vpop.f32.mrb[0].mxu0
        %v3150 = vpop.f32.mrb[0].mxu0
        %3151 = vdwg.mxu0
        %v3152 = vadd.f32 %v2981, 0.0
        %v3153 = vadd.f32 %v2983, 0.0
        %v3154 = vadd.f32 %v3050, 0.0
        %v3155 = vadd.f32 %v3052, 0.0
        %v3161 = vrot.slane %v2981, 2
        %v3162 = vrot.slane %v2983, 2
        %v3163 = vrot.slane %v3050, 2
        %v3164 = vrot.slane %v3052, 2
        %v3165 = vrot.slane %v3121, 2
        %3166 = vrot.lane.b32.xlu0 %v3161, 127
        %v3167 = vpop.permute.xlu0 %3166
        %3168 = vrot.lane.b32.xlu0 %v3162, 127
        %v3169 = vpop.permute.xlu0 %3168
        %3170 = vrot.lane.b32.xlu0 %v3163, 127
        %v3171 = vpop.permute.xlu0 %3170
        %3172 = vrot.lane.b32.xlu0 %v3164, 127
        %v3173 = vpop.permute.xlu0 %3172
        %3174 = vrot.lane.b32.xlu0 %v3165, 127
        %v3175 = vpop.permute.xlu0 %3174
        %vm3176 = vcmask 1039360
        %v3177 = vsel %vm3176, %v3167, %v3169
        %v3178 = vsel %vm3176, %v3169, %v3171
        %v3179 = vsel %vm3176, %v3171, %v3173
        %v3180 = vsel %vm3176, %v3173, %v3175
        %v3185 = vadd.f32 %v3152, %v3177
        %v3186 = vadd.f32 %v3153, %v3178
        %v3187 = vadd.f32 %v3154, %v3179
        %v3188 = vadd.f32 %v3155, %v3180
        %v3189 = vrot.slane %v2981, 4
        %v3190 = vrot.slane %v2983, 4
        %v3191 = vrot.slane %v3050, 4
        %v3192 = vrot.slane %v3052, 4
        %v3193 = vrot.slane %v3121, 4
        %3194 = vrot.lane.b32.xlu0 %v3189, 126
        %v3195 = vpop.permute.xlu0 %3194
        %3196 = vrot.lane.b32.xlu0 %v3190, 126
        %v3197 = vpop.permute.xlu0 %3196
        %3198 = vrot.lane.b32.xlu0 %v3191, 126
        %v3199 = vpop.permute.xlu0 %3198
        %3200 = vrot.lane.b32.xlu0 %v3192, 126
        %v3201 = vpop.permute.xlu0 %3200
        %3202 = vrot.lane.b32.xlu0 %v3193, 126
        %v3203 = vpop.permute.xlu0 %3202
        %vm3204 = vcmask 1031168
        %v3205 = vsel %vm3204, %v3195, %v3197
        %v3206 = vsel %vm3204, %v3197, %v3199
        %v3207 = vsel %vm3204, %v3199, %v3201
        %v3208 = vsel %vm3204, %v3201, %v3203
        %v3213 = vadd.f32 %v3185, %v3205
        %v3214 = vadd.f32 %v3186, %v3206
        %v3215 = vadd.f32 %v3187, %v3207
        %v3216 = vadd.f32 %v3188, %v3208
        %v3217 = vrot.slane %v2981, 6
        %v3218 = vrot.slane %v2983, 6
        %v3219 = vrot.slane %v3050, 6
        %v3220 = vrot.slane %v3052, 6
        %v3221 = vrot.slane %v3121, 6
        %3222 = vrot.lane.b32.xlu0 %v3217, 125
        %v3223 = vpop.permute.xlu0 %3222
        %3224 = vrot.lane.b32.xlu0 %v3218, 125
        %v3225 = vpop.permute.xlu0 %3224
        %3226 = vrot.lane.b32.xlu0 %v3219, 125
        %v3227 = vpop.permute.xlu0 %3226
        %3228 = vrot.lane.b32.xlu0 %v3220, 125
        %v3229 = vpop.permute.xlu0 %3228
        %3230 = vrot.lane.b32.xlu0 %v3221, 125
        %v3231 = vpop.permute.xlu0 %3230
        %vm3232 = vcmask 1022976
        %v3233 = vsel %vm3232, %v3223, %v3225
        %v3234 = vsel %vm3232, %v3225, %v3227
        %v3235 = vsel %vm3232, %v3227, %v3229
        %v3236 = vsel %vm3232, %v3229, %v3231
        %v3241 = vadd.f32 %v3213, %v3233
        %v3242 = vadd.f32 %v3214, %v3234
        %v3243 = vadd.f32 %v3215, %v3235
        %v3244 = vadd.f32 %v3216, %v3236
        %3250 = vrot.lane.b32.xlu0 %v2985, 124
        %v3251 = vpop.permute.xlu0 %3250
        %3252 = vrot.lane.b32.xlu0 %v2987, 124
        %v3253 = vpop.permute.xlu0 %3252
        %3254 = vrot.lane.b32.xlu0 %v3054, 124
        %v3255 = vpop.permute.xlu0 %3254
        %3256 = vrot.lane.b32.xlu0 %v3056, 124
        %v3257 = vpop.permute.xlu0 %3256
        %3258 = vrot.lane.b32.xlu0 %v3124, 124
        %v3259 = vpop.permute.xlu0 %3258
        %vm3260 = vcmask 1014784
        %v3261 = vsel %vm3260, %v3251, %v3253
        %v3262 = vsel %vm3260, %v3253, %v3255
        %v3263 = vsel %vm3260, %v3255, %v3257
        %v3264 = vsel %vm3260, %v3257, %v3259
        %v3269 = vadd.f32 %v3241, %v3261
        %v3270 = vadd.f32 %v3242, %v3262
        %v3271 = vadd.f32 %v3243, %v3263
        %v3272 = vadd.f32 %v3244, %v3264
        %v3273 = vrot.slane %v2985, 2
        %v3274 = vrot.slane %v2987, 2
        %v3275 = vrot.slane %v3054, 2
        %v3276 = vrot.slane %v3056, 2
        %v3277 = vrot.slane %v3124, 2
        %3278 = vrot.lane.b32.xlu0 %v3273, 96
        %v3279 = vpop.permute.xlu0 %3278
        %3280 = vrot.lane.b32.xlu0 %v3274, 96
        %v3281 = vpop.permute.xlu0 %3280
        %3282 = vrot.lane.b32.xlu0 %v3275, 96
        %v3283 = vpop.permute.xlu0 %3282
        %3284 = vrot.lane.b32.xlu0 %v3276, 96
        %v3285 = vpop.permute.xlu0 %3284
        %3286 = vrot.lane.b32.xlu0 %v3277, 96
        %v3287 = vpop.permute.xlu0 %3286
        %vm3288 = vcmask 785408
        %v3289 = vsel %vm3288, %v3279, %v3281
        %v3290 = vsel %vm3288, %v3281, %v3283
        %v3291 = vsel %vm3288, %v3283, %v3285
        %v3292 = vsel %vm3288, %v3285, %v3287
        %v3297 = vadd.f32 %v3269, %v3289
        %v3298 = vadd.f32 %v3270, %v3290
        %v3299 = vadd.f32 %v3271, %v3291
        %v3300 = vadd.f32 %v3272, %v3292
        %v3301 = vrot.slane %v2985, 4
        %v3302 = vrot.slane %v2987, 4
        %v3303 = vrot.slane %v3054, 4
        %v3304 = vrot.slane %v3056, 4
        %v3305 = vrot.slane %v3124, 4
        %3306 = vrot.lane.b32.xlu0 %v3301, 95
        %v3307 = vpop.permute.xlu0 %3306
        %3308 = vrot.lane.b32.xlu0 %v3302, 95
        %v3309 = vpop.permute.xlu0 %3308
        %3310 = vrot.lane.b32.xlu0 %v3303, 95
        %v3311 = vpop.permute.xlu0 %3310
        %3312 = vrot.lane.b32.xlu0 %v3304, 95
        %v3313 = vpop.permute.xlu0 %3312
        %3314 = vrot.lane.b32.xlu0 %v3305, 95
        %v3315 = vpop.permute.xlu0 %3314
        %vm3316 = vcmask 777216
        %v3317 = vsel %vm3316, %v3307, %v3309
        %v3318 = vsel %vm3316, %v3309, %v3311
        %v3319 = vsel %vm3316, %v3311, %v3313
        %v3320 = vsel %vm3316, %v3313, %v3315
        %v3325 = vadd.f32 %v3297, %v3317
        %v3326 = vadd.f32 %v3298, %v3318
        %v3327 = vadd.f32 %v3299, %v3319
        %v3328 = vadd.f32 %v3300, %v3320
        %v3329 = vrot.slane %v2985, 6
        %v3330 = vrot.slane %v2987, 6
        %v3331 = vrot.slane %v3054, 6
        %v3332 = vrot.slane %v3056, 6
        %v3333 = vrot.slane %v3124, 6
        %3334 = vrot.lane.b32.xlu0 %v3329, 94
        %v3335 = vpop.permute.xlu0 %3334
        %3336 = vrot.lane.b32.xlu0 %v3330, 94
        %v3337 = vpop.permute.xlu0 %3336
        %3338 = vrot.lane.b32.xlu0 %v3331, 94
        %v3339 = vpop.permute.xlu0 %3338
        %3340 = vrot.lane.b32.xlu0 %v3332, 94
        %v3341 = vpop.permute.xlu0 %3340
        %3342 = vrot.lane.b32.xlu0 %v3333, 94
        %v3343 = vpop.permute.xlu0 %3342
        %vm3344 = vcmask 769024
        %v3345 = vsel %vm3344, %v3335, %v3337
        %v3346 = vsel %vm3344, %v3337, %v3339
        %v3347 = vsel %vm3344, %v3339, %v3341
        %v3348 = vsel %vm3344, %v3341, %v3343
        %v3353 = vadd.f32 %v3325, %v3345
        %v3354 = vadd.f32 %v3326, %v3346
        %v3355 = vadd.f32 %v3327, %v3347
        %v3356 = vadd.f32 %v3328, %v3348
        %3362 = vrot.lane.b32.xlu0 %v2991, 93
        %v3363 = vpop.permute.xlu0 %3362
        %3364 = vrot.lane.b32.xlu0 %v2993, 93
        %v3365 = vpop.permute.xlu0 %3364
        %3366 = vrot.lane.b32.xlu0 %v3060, 93
        %v3367 = vpop.permute.xlu0 %3366
        %3368 = vrot.lane.b32.xlu0 %v3062, 93
        %v3369 = vpop.permute.xlu0 %3368
        %3370 = vrot.lane.b32.xlu0 %v3129, 93
        %v3371 = vpop.permute.xlu0 %3370
        %vm3372 = vcmask 760832
        %v3373 = vsel %vm3372, %v3363, %v3365
        %v3374 = vsel %vm3372, %v3365, %v3367
        %v3375 = vsel %vm3372, %v3367, %v3369
        %v3376 = vsel %vm3372, %v3369, %v3371
        %v3381 = vadd.f32 %v3353, %v3373
        %v3382 = vadd.f32 %v3354, %v3374
        %v3383 = vadd.f32 %v3355, %v3375
        %v3384 = vadd.f32 %v3356, %v3376
        %v3385 = vrot.slane %v2991, 2
        %v3386 = vrot.slane %v2993, 2
        %v3387 = vrot.slane %v3060, 2
        %v3388 = vrot.slane %v3062, 2
        %v3389 = vrot.slane %v3129, 2
        %3390 = vrot.lane.b32.xlu0 %v3385, 92
        %v3391 = vpop.permute.xlu0 %3390
        %3392 = vrot.lane.b32.xlu0 %v3386, 92
        %v3393 = vpop.permute.xlu0 %3392
        %3394 = vrot.lane.b32.xlu0 %v3387, 92
        %v3395 = vpop.permute.xlu0 %3394
        %3396 = vrot.lane.b32.xlu0 %v3388, 92
        %v3397 = vpop.permute.xlu0 %3396
        %3398 = vrot.lane.b32.xlu0 %v3389, 92
        %v3399 = vpop.permute.xlu0 %3398
        %vm3400 = vcmask 752640
        %v3401 = vsel %vm3400, %v3391, %v3393
        %v3402 = vsel %vm3400, %v3393, %v3395
        %v3403 = vsel %vm3400, %v3395, %v3397
        %v3404 = vsel %vm3400, %v3397, %v3399
        %v3409 = vadd.f32 %v3381, %v3401
        %v3410 = vadd.f32 %v3382, %v3402
        %v3411 = vadd.f32 %v3383, %v3403
        %v3412 = vadd.f32 %v3384, %v3404
        %v3413 = vrot.slane %v2991, 4
        %v3414 = vrot.slane %v2993, 4
        %v3415 = vrot.slane %v3060, 4
        %v3416 = vrot.slane %v3062, 4
        %v3417 = vrot.slane %v3129, 4
        %3418 = vrot.lane.b32.xlu0 %v3413, 64
        %v3419 = vpop.permute.xlu0 %3418
        %3420 = vrot.lane.b32.xlu0 %v3414, 64
        %v3421 = vpop.permute.xlu0 %3420
        %3422 = vrot.lane.b32.xlu0 %v3415, 64
        %v3423 = vpop.permute.xlu0 %3422
        %3424 = vrot.lane.b32.xlu0 %v3416, 64
        %v3425 = vpop.permute.xlu0 %3424
        %3426 = vrot.lane.b32.xlu0 %v3417, 64
        %v3427 = vpop.permute.xlu0 %3426
        %v3428 = vsel %vm2573, %v3419, %v3421
        %v3429 = vsel %vm2573, %v3421, %v3423
        %v3430 = vsel %vm2573, %v3423, %v3425
        %v3431 = vsel %vm2573, %v3425, %v3427
        %v3436 = vadd.f32 %v3409, %v3428
        %v3437 = vadd.f32 %v3410, %v3429
        %v3438 = vadd.f32 %v3411, %v3430
        %v3439 = vadd.f32 %v3412, %v3431
        %v3440 = vrot.slane %v2991, 6
        %v3441 = vrot.slane %v2993, 6
        %v3442 = vrot.slane %v3060, 6
        %v3443 = vrot.slane %v3062, 6
        %v3444 = vrot.slane %v3129, 6
        %3445 = vrot.lane.b32.xlu0 %v3440, 63
        %v3446 = vpop.permute.xlu0 %3445
        %3447 = vrot.lane.b32.xlu0 %v3441, 63
        %v3448 = vpop.permute.xlu0 %3447
        %3449 = vrot.lane.b32.xlu0 %v3442, 63
        %v3450 = vpop.permute.xlu0 %3449
        %3451 = vrot.lane.b32.xlu0 %v3443, 63
        %v3452 = vpop.permute.xlu0 %3451
        %3453 = vrot.lane.b32.xlu0 %v3444, 63
        %v3454 = vpop.permute.xlu0 %3453
        %vm3455 = vcmask 515072
        %v3456 = vsel %vm3455, %v3446, %v3448
        %v3457 = vsel %vm3455, %v3448, %v3450
        %v3458 = vsel %vm3455, %v3450, %v3452
        %v3459 = vsel %vm3455, %v3452, %v3454
        %v3464 = vadd.f32 %v3436, %v3456
        %v3465 = vadd.f32 %v3437, %v3457
        %v3466 = vadd.f32 %v3438, %v3458
        %v3467 = vadd.f32 %v3439, %v3459
        %3473 = vrot.lane.b32.xlu0 %v2995, 62
        %v3474 = vpop.permute.xlu0 %3473
        %3475 = vrot.lane.b32.xlu0 %v2997, 62
        %v3476 = vpop.permute.xlu0 %3475
        %3477 = vrot.lane.b32.xlu0 %v3064, 62
        %v3478 = vpop.permute.xlu0 %3477
        %3479 = vrot.lane.b32.xlu0 %v3066, 62
        %v3480 = vpop.permute.xlu0 %3479
        %3481 = vrot.lane.b32.xlu0 %v3132, 62
        %v3482 = vpop.permute.xlu0 %3481
        %vm3483 = vcmask 506880
        %v3484 = vsel %vm3483, %v3474, %v3476
        %v3485 = vsel %vm3483, %v3476, %v3478
        %v3486 = vsel %vm3483, %v3478, %v3480
        %v3487 = vsel %vm3483, %v3480, %v3482
        %v3492 = vadd.f32 %v3464, %v3484
        %v3493 = vadd.f32 %v3465, %v3485
        %v3494 = vadd.f32 %v3466, %v3486
        %v3495 = vadd.f32 %v3467, %v3487
        %v3496 = vrot.slane %v2995, 2
        %v3497 = vrot.slane %v2997, 2
        %v3498 = vrot.slane %v3064, 2
        %v3499 = vrot.slane %v3066, 2
        %v3500 = vrot.slane %v3132, 2
        %3501 = vrot.lane.b32.xlu0 %v3496, 61
        %v3502 = vpop.permute.xlu0 %3501
        %3503 = vrot.lane.b32.xlu0 %v3497, 61
        %v3504 = vpop.permute.xlu0 %3503
        %3505 = vrot.lane.b32.xlu0 %v3498, 61
        %v3506 = vpop.permute.xlu0 %3505
        %3507 = vrot.lane.b32.xlu0 %v3499, 61
        %v3508 = vpop.permute.xlu0 %3507
        %3509 = vrot.lane.b32.xlu0 %v3500, 61
        %v3510 = vpop.permute.xlu0 %3509
        %vm3511 = vcmask 498688
        %v3512 = vsel %vm3511, %v3502, %v3504
        %v3513 = vsel %vm3511, %v3504, %v3506
        %v3514 = vsel %vm3511, %v3506, %v3508
        %v3515 = vsel %vm3511, %v3508, %v3510
        %v3520 = vadd.f32 %v3492, %v3512
        %v3521 = vadd.f32 %v3493, %v3513
        %v3522 = vadd.f32 %v3494, %v3514
        %v3523 = vadd.f32 %v3495, %v3515
        %v3524 = vrot.slane %v2995, 4
        %v3525 = vrot.slane %v2997, 4
        %v3526 = vrot.slane %v3064, 4
        %v3527 = vrot.slane %v3066, 4
        %v3528 = vrot.slane %v3132, 4
        %3529 = vrot.lane.b32.xlu0 %v3524, 60
        %v3530 = vpop.permute.xlu0 %3529
        %3531 = vrot.lane.b32.xlu0 %v3525, 60
        %v3532 = vpop.permute.xlu0 %3531
        %3533 = vrot.lane.b32.xlu0 %v3526, 60
        %v3534 = vpop.permute.xlu0 %3533
        %3535 = vrot.lane.b32.xlu0 %v3527, 60
        %v3536 = vpop.permute.xlu0 %3535
        %3537 = vrot.lane.b32.xlu0 %v3528, 60
        %v3538 = vpop.permute.xlu0 %3537
        %vm3539 = vcmask 490496
        %v3540 = vsel %vm3539, %v3530, %v3532
        %v3541 = vsel %vm3539, %v3532, %v3534
        %v3542 = vsel %vm3539, %v3534, %v3536
        %v3543 = vsel %vm3539, %v3536, %v3538
        %v3548 = vadd.f32 %v3520, %v3540
        %v3549 = vadd.f32 %v3521, %v3541
        %v3550 = vadd.f32 %v3522, %v3542
        %v3551 = vadd.f32 %v3523, %v3543
        %v3552 = vrot.slane %v2995, 6
        %v3553 = vrot.slane %v2997, 6
        %v3554 = vrot.slane %v3064, 6
        %v3555 = vrot.slane %v3066, 6
        %v3556 = vrot.slane %v3132, 6
        %3557 = vrot.lane.b32.xlu0 %v3552, 32
        %v3558 = vpop.permute.xlu0 %3557
        %3559 = vrot.lane.b32.xlu0 %v3553, 32
        %v3560 = vpop.permute.xlu0 %3559
        %3561 = vrot.lane.b32.xlu0 %v3554, 32
        %v3562 = vpop.permute.xlu0 %3561
        %3563 = vrot.lane.b32.xlu0 %v3555, 32
        %v3564 = vpop.permute.xlu0 %3563
        %3565 = vrot.lane.b32.xlu0 %v3556, 32
        %v3566 = vpop.permute.xlu0 %3565
        %v3567 = vsel %vm2933, %v3558, %v3560
        %v3568 = vsel %vm2933, %v3560, %v3562
        %v3569 = vsel %vm2933, %v3562, %v3564
        %v3570 = vsel %vm2933, %v3564, %v3566
        %v3575 = vadd.f32 %v3548, %v3567
        %v3576 = vadd.f32 %v3549, %v3568
        %v3577 = vadd.f32 %v3550, %v3569
        %v3578 = vadd.f32 %v3551, %v3570
        %3584 = vrot.lane.b32.xlu0 %v3001, 31
        %v3585 = vpop.permute.xlu0 %3584
        %3586 = vrot.lane.b32.xlu0 %v3003, 31
        %v3587 = vpop.permute.xlu0 %3586
        %3588 = vrot.lane.b32.xlu0 %v3070, 31
        %v3589 = vpop.permute.xlu0 %3588
        %3590 = vrot.lane.b32.xlu0 %v3072, 31
        %v3591 = vpop.permute.xlu0 %3590
        %3592 = vrot.lane.b32.xlu0 %v3137, 31
        %v3593 = vpop.permute.xlu0 %3592
        %vm3594 = vcmask 252928
        %v3595 = vsel %vm3594, %v3585, %v3587
        %v3596 = vsel %vm3594, %v3587, %v3589
        %v3597 = vsel %vm3594, %v3589, %v3591
        %v3598 = vsel %vm3594, %v3591, %v3593
        %v3603 = vadd.f32 %v3575, %v3595
        %v3604 = vadd.f32 %v3576, %v3596
        %v3605 = vadd.f32 %v3577, %v3597
        %v3606 = vadd.f32 %v3578, %v3598
        %v3607 = vrot.slane %v3001, 2
        %v3608 = vrot.slane %v3003, 2
        %v3609 = vrot.slane %v3070, 2
        %v3610 = vrot.slane %v3072, 2
        %v3611 = vrot.slane %v3137, 2
        %3612 = vrot.lane.b32.xlu0 %v3607, 30
        %v3613 = vpop.permute.xlu0 %3612
        %3614 = vrot.lane.b32.xlu0 %v3608, 30
        %v3615 = vpop.permute.xlu0 %3614
        %3616 = vrot.lane.b32.xlu0 %v3609, 30
        %v3617 = vpop.permute.xlu0 %3616
        %3618 = vrot.lane.b32.xlu0 %v3610, 30
        %v3619 = vpop.permute.xlu0 %3618
        %3620 = vrot.lane.b32.xlu0 %v3611, 30
        %v3621 = vpop.permute.xlu0 %3620
        %vm3622 = vcmask 244736
        %v3623 = vsel %vm3622, %v3613, %v3615
        %v3624 = vsel %vm3622, %v3615, %v3617
        %v3625 = vsel %vm3622, %v3617, %v3619
        %v3626 = vsel %vm3622, %v3619, %v3621
        %v3631 = vadd.f32 %v3603, %v3623
        %v3632 = vadd.f32 %v3604, %v3624
        %v3633 = vadd.f32 %v3605, %v3625
        %v3634 = vadd.f32 %v3606, %v3626
        %v3635 = vrot.slane %v3001, 4
        %v3636 = vrot.slane %v3003, 4
        %v3637 = vrot.slane %v3070, 4
        %v3638 = vrot.slane %v3072, 4
        %v3639 = vrot.slane %v3137, 4
        %3640 = vrot.lane.b32.xlu0 %v3635, 29
        %v3641 = vpop.permute.xlu0 %3640
        %3642 = vrot.lane.b32.xlu0 %v3636, 29
        %v3643 = vpop.permute.xlu0 %3642
        %3644 = vrot.lane.b32.xlu0 %v3637, 29
        %v3645 = vpop.permute.xlu0 %3644
        %3646 = vrot.lane.b32.xlu0 %v3638, 29
        %v3647 = vpop.permute.xlu0 %3646
        %3648 = vrot.lane.b32.xlu0 %v3639, 29
        %v3649 = vpop.permute.xlu0 %3648
        %vm3650 = vcmask 236544
        %v3651 = vsel %vm3650, %v3641, %v3643
        %v3652 = vsel %vm3650, %v3643, %v3645
        %v3653 = vsel %vm3650, %v3645, %v3647
        %v3654 = vsel %vm3650, %v3647, %v3649
        %v3659 = vadd.f32 %v3631, %v3651
        %v3660 = vadd.f32 %v3632, %v3652
        %v3661 = vadd.f32 %v3633, %v3653
        %v3662 = vadd.f32 %v3634, %v3654
        %v3663 = vrot.slane %v3001, 6
        %v3664 = vrot.slane %v3003, 6
        %v3665 = vrot.slane %v3070, 6
        %v3666 = vrot.slane %v3072, 6
        %v3667 = vrot.slane %v3137, 6
        %3668 = vrot.lane.b32.xlu0 %v3663, 28
        %v3669 = vpop.permute.xlu0 %3668
        %3670 = vrot.lane.b32.xlu0 %v3664, 28
        %v3671 = vpop.permute.xlu0 %3670
        %3672 = vrot.lane.b32.xlu0 %v3665, 28
        %v3673 = vpop.permute.xlu0 %3672
        %3674 = vrot.lane.b32.xlu0 %v3666, 28
        %v3675 = vpop.permute.xlu0 %3674
        %3676 = vrot.lane.b32.xlu0 %v3667, 28
        %v3677 = vpop.permute.xlu0 %3676
        %vm3678 = vcmask 228352
        %v3679 = vsel %vm3678, %v3669, %v3671
        %v3680 = vsel %vm3678, %v3671, %v3673
        %v3681 = vsel %vm3678, %v3673, %v3675
        %v3682 = vsel %vm3678, %v3675, %v3677
        %v3687 = vadd.f32 %v3659, %v3679
        %v3688 = vadd.f32 %v3660, %v3680
        %v3689 = vadd.f32 %v3661, %v3681
        %v3690 = vadd.f32 %v3662, %v3682
        %v3691 = vadd.f32 %v3687, %v3006
        %v3692 = vadd.f32 %v3688, %v3074
        %v3693 = vadd.f32 %v3689, %v3076
        %v3694 = vadd.f32 %v3690, %v3140
        %v3700 = vrot.slane %v3006, 2
        %v3701 = vrot.slane %v3074, 2
        %v3702 = vrot.slane %v3076, 2
        %v3703 = vrot.slane %v3140, 2
        %v3704 = vrot.slane %v3142, 2
        %3705 = vrot.lane.b32.xlu0 %v3700, 127
        %v3706 = vpop.permute.xlu0 %3705
        %3707 = vrot.lane.b32.xlu0 %v3701, 127
        %v3708 = vpop.permute.xlu0 %3707
        %3709 = vrot.lane.b32.xlu0 %v3702, 127
        %v3710 = vpop.permute.xlu0 %3709
        %3711 = vrot.lane.b32.xlu0 %v3703, 127
        %v3712 = vpop.permute.xlu0 %3711
        %3713 = vrot.lane.b32.xlu0 %v3704, 127
        %v3714 = vpop.permute.xlu0 %3713
        %v3715 = vsel %vm3176, %v3706, %v3708
        %v3716 = vsel %vm3176, %v3708, %v3710
        %v3717 = vsel %vm3176, %v3710, %v3712
        %v3718 = vsel %vm3176, %v3712, %v3714
        %v3723 = vadd.f32 %v3691, %v3715
        %v3724 = vadd.f32 %v3692, %v3716
        %v3725 = vadd.f32 %v3693, %v3717
        %v3726 = vadd.f32 %v3694, %v3718
        %v3727 = vrot.slane %v3006, 4
        %v3728 = vrot.slane %v3074, 4
        %v3729 = vrot.slane %v3076, 4
        %v3730 = vrot.slane %v3140, 4
        %v3731 = vrot.slane %v3142, 4
        %3732 = vrot.lane.b32.xlu0 %v3727, 126
        %v3733 = vpop.permute.xlu0 %3732
        %3734 = vrot.lane.b32.xlu0 %v3728, 126
        %v3735 = vpop.permute.xlu0 %3734
        %3736 = vrot.lane.b32.xlu0 %v3729, 126
        %v3737 = vpop.permute.xlu0 %3736
        %3738 = vrot.lane.b32.xlu0 %v3730, 126
        %v3739 = vpop.permute.xlu0 %3738
        %3740 = vrot.lane.b32.xlu0 %v3731, 126
        %v3741 = vpop.permute.xlu0 %3740
        %v3742 = vsel %vm3204, %v3733, %v3735
        %v3743 = vsel %vm3204, %v3735, %v3737
        %v3744 = vsel %vm3204, %v3737, %v3739
        %v3745 = vsel %vm3204, %v3739, %v3741
        %v3750 = vadd.f32 %v3723, %v3742
        %v3751 = vadd.f32 %v3724, %v3743
        %v3752 = vadd.f32 %v3725, %v3744
        %v3753 = vadd.f32 %v3726, %v3745
        %v3754 = vrot.slane %v3006, 6
        %v3755 = vrot.slane %v3074, 6
        %v3756 = vrot.slane %v3076, 6
        %v3757 = vrot.slane %v3140, 6
        %v3758 = vrot.slane %v3142, 6
        %3759 = vrot.lane.b32.xlu0 %v3754, 125
        %v3760 = vpop.permute.xlu0 %3759
        %3761 = vrot.lane.b32.xlu0 %v3755, 125
        %v3762 = vpop.permute.xlu0 %3761
        %3763 = vrot.lane.b32.xlu0 %v3756, 125
        %v3764 = vpop.permute.xlu0 %3763
        %3765 = vrot.lane.b32.xlu0 %v3757, 125
        %v3766 = vpop.permute.xlu0 %3765
        %3767 = vrot.lane.b32.xlu0 %v3758, 125
        %v3768 = vpop.permute.xlu0 %3767
        %v3769 = vsel %vm3232, %v3760, %v3762
        %v3770 = vsel %vm3232, %v3762, %v3764
        %v3771 = vsel %vm3232, %v3764, %v3766
        %v3772 = vsel %vm3232, %v3766, %v3768
        %v3777 = vadd.f32 %v3750, %v3769
        %v3778 = vadd.f32 %v3751, %v3770
        %v3779 = vadd.f32 %v3752, %v3771
        %v3780 = vadd.f32 %v3753, %v3772
        %3786 = vrot.lane.b32.xlu0 %v3011, 124
        %v3787 = vpop.permute.xlu0 %3786
        %3788 = vrot.lane.b32.xlu0 %v3080, 124
        %v3789 = vpop.permute.xlu0 %3788
        %3790 = vrot.lane.b32.xlu0 %v3082, 124
        %v3791 = vpop.permute.xlu0 %3790
        %3792 = vrot.lane.b32.xlu0 %v3146, 124
        %v3793 = vpop.permute.xlu0 %3792
        %3794 = vrot.lane.b32.xlu0 %v3148, 124
        %v3795 = vpop.permute.xlu0 %3794
        %v3796 = vsel %vm3260, %v3787, %v3789
        %v3797 = vsel %vm3260, %v3789, %v3791
        %v3798 = vsel %vm3260, %v3791, %v3793
        %v3799 = vsel %vm3260, %v3793, %v3795
        %v3804 = vadd.f32 %v3777, %v3796
        %v3805 = vadd.f32 %v3778, %v3797
        %v3806 = vadd.f32 %v3779, %v3798
        %v3807 = vadd.f32 %v3780, %v3799
        %v3808 = vld [vmem:[#allocation14] sm:$0x3]
        %3810 = vset.pattern.permute.xlu0 0
        %3811 = vperm.xlu0 %3810, %v3808
        %v3812 = vpop.permute.xlu0 %3811
        %v3814 = vadd.f32 %v3804, %v3812
        %v3815 = vadd.f32 %v3805, %v3812
        %v3816 = vadd.f32 %v3806, %v3812
        %v3817 = vadd.f32 %v3807, %v3812
        %v3822 = vcombine.low %v3814, %v3815
        %v3823 = vcombine.low %v3816, %v3817
        %v3825 = vunpack.c.l.s4 1983009808
        %v3826 = vunpack.c.0.s8 %v3825
        %v3827 = vlaneseq
        %v3828 = vshrl.u32 %v3827, 7
        %v3829 = vsub.s32 %v3826, %v3828
        %v3830 = vrot.slane %v3822, %v3829
        %v3832 = vunpack.c.l.s4 1983009808
        %v3833 = vunpack.c.0.s8 %v3832
        %v3834 = vlaneseq
        %v3835 = vshrl.u32 %v3834, 7
        %v3836 = vsub.s32 %v3833, %v3835
        %v3837 = vrot.slane %v3823, %v3836
        %v3838 = vcombine.low %v3830, %v3837
        %3840 = vst [vmem:[%s433] sm:$0xff] %v3838
        %s3841 = sand.u32 %s224, 1
        %s3842 = scalar_lea.sflag [#allocation4], %s3841
        %s3843 = sand.u32 %s224, 1
        %s3844 = smul.addr %s3843, 8
        %s3845 = scalar_lea.vmem [#allocation16], %s3844
        // Predicated region
        $region85: #{srcnn_forward.1} parent=51 // pred_check
          %p3846 = pneg %p234
        $region86: #{srcnn_forward.1} parent=51 // pred_check_branch
          %3848 = sbr.rel (%p3846) target = $region88
        $region87: #{srcnn_forward.1} parent=51 // pred_region
          %s3849 = smul.u32 4, %s34
          %s3851 = ssub.s32 128, 128
          %3852 = vsyncadd %s3842, %s3851
          %s3853 = smul.addr %s33, 4
          %s3854 = sadd.s32 %s3849, %s3853
          %s3855 = smul.addr %s3854, 32
          %s3856 = scalar_lea.hbm %s8, %s3855
          %s3858 = sshll.u32 %s3845, 4
          %s3859 = int_to_ptr.vmem [resolvable:$true] %s3858
          %3861 = dma.vmem_to_hbm [thread:$0]  %s3859, 128, %s3856, %s3842
        $region88: #{srcnn_forward.1} parent=51 // pred_fallthru
          _
      $region52: #{srcnn_forward.1} parent=5 // pred_fallthru
        _
      %p3862 = scmp.le.s32.totalorder 2, %s24
      // Predicated region
      $region89: #{srcnn_forward.1} parent=5 // pred_check
        %p3863 = pneg %p3862
      $region90: #{srcnn_forward.1} parent=5 // pred_check_branch
        %3865 = sbr.rel (%p3863) target = $region92
      $region91: #{srcnn_forward.1} parent=5 // pred_region
        %s3866 = ssub.s32 %s24, 2
        // Predicated region
        $region93: #{srcnn_forward.1} parent=91 // pred_check
          %p3867 = pneg %p240
        $region94: #{srcnn_forward.1} parent=91 // pred_check_branch
          %3869 = sbr.rel (%p3867) target = $region96
        $region95: #{srcnn_forward.1} parent=91 // pred_region
          %s3870 = sand.u32 %s225, 1
          %s3871 = scalar_lea.sflag [#allocation4], %s3870
          %s3872 = sand.u32 %s225, 1
          %s3873 = smul.addr %s3872, 8
          %s3874 = scalar_lea.vmem [#allocation16], %s3873
          %3875 = dma.done %s3871, 128
        $region96: #{srcnn_forward.1} parent=91 // pred_fallthru
          _
      $region92: #{srcnn_forward.1} parent=5 // pred_fallthru
        _
    $region6: #{srcnn_forward.1} parent=1 // loop_footer
      %s28 = sadd.s32 1, %s24
    $region7: #{srcnn_forward.1} parent=1 // loop_footer_branch
      %23 = sbr.rel target = $region3
    $region8: #{srcnn_forward.1} parent=1 // loop_exit
      _
    %3876 = vsyncpa [#allocation3], 1
    %s3877 = scalar_lea.sflag [#allocation3], 1
    %3878 = vsyncpa %s3877, 1
    %3879 = vsyncpa [#allocation6], 1
    %3880 = vsyncpa [#allocation9], 1
    %3881 = vsyncpa [#allocation12], 1
    %3882 = vsyncpa [#allocation15], 1
    %3883 = vsyncpa [#allocation4], 1
    %s3884 = scalar_lea.sflag [#allocation4], 1
    %3885 = vsyncpa %s3884, 1

</llo_original>
